<compile_context>
chip_gen: v7x
topology: tpu7x:2x2x1
jax: 0.10.0
libtpu: 0.0.40
codegen_flags: <defaults>
</compile_context>

<pallas_src>
import numpy as np
import jax
import jax.numpy as jnp
from jax import lax
from jax.experimental import pallas as pl
from jax.experimental.pallas import tpu as pltpu

# ----------------------------------------------------------------------------
# Small but representative FNO1d configuration
# ----------------------------------------------------------------------------
BATCH = 2
SEQ = 32            # spatial points s
IN_CH = 2           # input channels: (a(x), x)
WIDTH = 32          # fno_architecture["width"]
MODES = 12          # fno_architecture["modes"]
N_LAYERS = 3        # fno_architecture["n_layers"]
PROJ = 32           # fno_architecture["proj_scale"]
PADDING_FRAC = 0.25

PAD = int(round(SEQ * PADDING_FRAC))   # F.pad(x, [0, PAD])
L_PAD = SEQ + PAD                      # padded spatial length seen by Fourier layers
assert MODES <= L_PAD // 2, "keep modes clear of the Nyquist bin"

MODES_P = 16          # MODES padded up to the 8-sublane tile (extra modes are exact zeros)
W2 = 2 * WIDTH        # fused real+imag contraction width


# ----------------------------------------------------------------------------
# Exact (erf-based) GELU with ops that always lower in Mosaic.
# erf via Abramowitz & Stegun 7.1.26, |error| < 1.5e-7.
# ----------------------------------------------------------------------------
def _erf(x):
    a = jnp.abs(x)
    t = 1.0 / (1.0 + 0.3275911 * a)
    poly = t * (0.254829592
                + t * (-0.284496736
                       + t * (1.421413741
                              + t * (-1.453152027 + t * 1.061405429))))
    y = 1.0 - poly * jnp.exp(-a * a)
    return jnp.where(x >= 0, y, -y)


def _gelu(x):
    return 0.5 * x * (1.0 + _erf(x * np.float32(0.7071067811865476)))


# ----------------------------------------------------------------------------
# Fused, mode-padded truncated real-DFT matrices.
#   forward: rows [0:MODES_P) = Re(rfft), rows [MODES_P:2*MODES_P) = Im(rfft)
#   inverse: cols [0:MODES_P) hit out_r, cols [MODES_P:2*MODES_P) hit out_i
# c2r semantics: the imaginary part of the DC bin is dropped (sin(0)=0 column),
# matching torch.fft.irfft.
# ----------------------------------------------------------------------------
def make_dft_matrices():
    n = np.arange(L_PAD, dtype=np.float64)
    m = np.arange(MODES, dtype=np.float64)

    ang_f = 2.0 * np.pi * np.outer(m, n) / L_PAD                   # (MODES, L_PAD)
    fwd = np.zeros((2 * MODES_P, L_PAD), dtype=np.float64)
    fwd[:MODES, :] = np.cos(ang_f)                                 # -> xr
    fwd[MODES_P:MODES_P + MODES, :] = -np.sin(ang_f)               # -> xi

    # y[n] = (1/L)*[Re(X0) + 2*sum_{m>=1}(Re(Xm) cos(2pi m n/L) - Im(Xm) sin(2pi m n/L))]
    ang_i = 2.0 * np.pi * np.outer(n, m) / L_PAD                   # (L_PAD, MODES)
    c = np.where(m == 0, 1.0, 2.0)[None, :]
    inv = np.zeros((L_PAD, 2 * MODES_P), dtype=np.float64)
    inv[:, :MODES] = c * np.cos(ang_i) / L_PAD                     # applied to out_r
    inv[:, MODES_P:MODES_P + MODES] = -c * np.sin(ang_i) / L_PAD   # applied to out_i

    return fwd.astype(np.float32), inv.astype(np.float32)


# ----------------------------------------------------------------------------
# The fused Pallas kernel: one batch element per grid step ("parallel" grid).
# ----------------------------------------------------------------------------
def fno1d_kernel(x_ref, fc0_w_ref, fc0_b_ref, fdft_ref, idft_ref,
                 wbig_ref, cw_ref, cb_ref, fc1_w_ref, fc1_b_ref,
                 fc2_wt_ref, fc2_b_ref, out_ref, h_ref):
    # fc0 lift written straight into the padded VMEM scratch (no concatenate copy);
    # the PAD rows are zeroed once, exactly like F.pad(x, [0, PAD]).
    x = x_ref[0]                                                         # (SEQ, IN_CH)
    h_ref[:SEQ, :] = (jnp.dot(x, fc0_w_ref[...],
                              preferred_element_type=jnp.float32) + fc0_b_ref[...])
    h_ref[SEQ:, :] = jnp.zeros((PAD, WIDTH), jnp.float32)

    fdft = fdft_ref[...]                                                 # (2*MODES_P, L_PAD)
    idft = idft_ref[...]                                                 # (L_PAD, 2*MODES_P)

    for k in range(N_LAYERS):
        h = h_ref[...]                                                   # (L_PAD, WIDTH)

        # ---- SpectralConv1d ----
        # fused truncated rfft: rows [0:MP) = Re, rows [MP:2MP) = Im
        xcat = jnp.dot(fdft, h, preferred_element_type=jnp.float32)      # (2MP, W)
        xri = jnp.concatenate([xcat[:MODES_P], xcat[MODES_P:]], axis=1)  # (MP, 2W)

        # per-mode complex channel mix as ONE batched MXU contraction:
        #   out[m, :] = [Re | Im][m, :] @ [[wr, wi], [-wi, wr]][m]      (bf16 x bf16 -> f32)
        mix = lax.dot_general(
            xri[:, None, :].astype(jnp.bfloat16),                        # (MP, 1, 2W)
            wbig_ref[k],                                                 # (MP, 2W, 2W) bf16
            dimension_numbers=(((2,), (1,)), ((0,), (0,))),
            preferred_element_type=jnp.float32)[:, 0, :]                 # (MP, 2W)

        # fused irfft: [out_r; out_i] stacked on rows, one matmul
        outstack = jnp.concatenate([mix[:, :WIDTH], mix[:, WIDTH:]], axis=0)   # (2MP, W)
        x1 = jnp.dot(idft, outstack, preferred_element_type=jnp.float32)       # (L_PAD, W)

        # ---- Conv1d(width, width, kernel_size=1): pointwise channel mix ----
        x2 = jnp.dot(h, cw_ref[k], preferred_element_type=jnp.float32) + cb_ref[k]

        hn = x1 + x2
        if k != N_LAYERS - 1:
            hn = _gelu(hn)
        h_ref[...] = hn

    # crop the padding, then the projection head; emit a lane-dense (1, SEQ) row.
    hc = h_ref[:SEQ, :]                                                  # (SEQ, WIDTH)
    h1 = _gelu(jnp.dot(hc, fc1_w_ref[...],
                       preferred_element_type=jnp.float32) + fc1_b_ref[...])   # (SEQ, PROJ)
    y = lax.dot_general(fc2_wt_ref[...], h1,                             # (1, PROJ) x (SEQ, PROJ)^T
                        dimension_numbers=(((1,), (1,)), ((), ())),
                        preferred_element_type=jnp.float32) + fc2_b_ref[...]    # (1, SEQ)
    out_ref[0] = y


def _rep(shape):
    zeros = (0,) * len(shape)
    return pl.BlockSpec(shape, lambda b, _z=zeros: _z)


def fno1d_forward(x, kp):
    out = pl.pallas_call(
        fno1d_kernel,
        out_shape=jax.ShapeDtypeStruct((BATCH, 1, SEQ), jnp.float32),
        grid=(BATCH,),
        in_specs=[
            pl.BlockSpec((1, SEQ, IN_CH), lambda b: (b, 0, 0)),           # x
            _rep((IN_CH, WIDTH)), _rep((1, WIDTH)),                       # fc0
            _rep((2 * MODES_P, L_PAD)), _rep((L_PAD, 2 * MODES_P)),       # fused fwd/inv DFT
            _rep((N_LAYERS, MODES_P, W2, W2)),                            # spectral block weights (bf16)
            _rep((N_LAYERS, WIDTH, WIDTH)), _rep((N_LAYERS, 1, WIDTH)),   # 1x1 conv
            _rep((WIDTH, PROJ)), _rep((1, PROJ)),                         # fc1
            _rep((1, PROJ)), _rep((1, 1)),                                # fc2 (transposed) + bias
        ],
        out_specs=pl.BlockSpec((1, 1, SEQ), lambda b: (b, 0, 0)),
        scratch_shapes=[pltpu.VMEM((L_PAD, WIDTH), jnp.float32)],
        compiler_params=pltpu.CompilerParams(dimension_semantics=("parallel",)),
    )(x, kp["fc0_w"], kp["fc0_b"], kp["fdft"], kp["idft"],
      kp["spec_wbig"], kp["conv_w"], kp["conv_b"],
      kp["fc1_w"], kp["fc1_b"], kp["fc2_wt"], kp["fc2_b"])
    return out[:, 0, :]    # (BATCH, SEQ)  == .squeeze(-1) of the NCW output


# ----------------------------------------------------------------------------
# One-time (outside jit) layout preparation for the kernel:
#   - fused, mode-padded DFT matrices,
#   - per-mode complex-mix weights packed as [[wr, wi], [-wi, wr]] in bf16,
#   - fc2 weight transposed for the lane-dense epilogue.
# ----------------------------------------------------------------------------
def prepare_kernel_params(params):
    fdft, idft = make_dft_matrices()
    wr = params["spec_wr"]
    wi = params["spec_wi"]
    wr_p = jnp.zeros((N_LAYERS, MODES_P, WIDTH, WIDTH), jnp.float32).at[:, :MODES].set(wr)
    wi_p = jnp.zeros((N_LAYERS, MODES_P, WIDTH, WIDTH), jnp.float32).at[:, :MODES].set(wi)
    wbig = jnp.concatenate(
        [jnp.concatenate([wr_p, wi_p], axis=-1),
         jnp.concatenate([-wi_p, wr_p], axis=-1)], axis=-2).astype(jnp.bfloat16)
    return dict(
        fc0_w=params["fc0_w"], fc0_b=params["fc0_b"],
        fdft=jnp.asarray(fdft), idft=jnp.asarray(idft),
        spec_wbig=wbig,
        conv_w=params["conv_w"], conv_b=params["conv_b"],
        fc1_w=params["fc1_w"], fc1_b=params["fc1_b"],
        fc2_wt=params["fc2_w"].T, fc2_b=params["fc2_b"],
    )


# ----------------------------------------------------------------------------
# Deterministic parameter init (same shapes / scales as the PyTorch module; spectral
# weights are stored as (layer, mode, in, out) instead of (in, out, mode)).
# ----------------------------------------------------------------------------
def init_params(key):
    ks = jax.random.split(key, 10)
    u = lambda k, shape, b: jax.random.uniform(k, shape, jnp.float32, -b, b)
    b_in = 1.0 / np.sqrt(IN_CH)
    b_w = 1.0 / np.sqrt(WIDTH)
    b_p = 1.0 / np.sqrt(PROJ)
    spec_scale = 1.0 / (WIDTH * WIDTH)
    return dict(
        fc0_w=u(ks[0], (IN_CH, WIDTH), b_in),                 # torch weight.T
        fc0_b=u(ks[1], (1, WIDTH), b_in),
        spec_wr=spec_scale * jax.random.uniform(ks[2], (N_LAYERS, MODES, WIDTH, WIDTH), jnp.float32),
        spec_wi=spec_scale * jax.random.uniform(ks[3], (N_LAYERS, MODES, WIDTH, WIDTH), jnp.float32),
        conv_w=u(ks[4], (N_LAYERS, WIDTH, WIDTH), b_w),        # (layer, in, out)
        conv_b=u(ks[5], (N_LAYERS, 1, WIDTH), b_w),
        fc1_w=u(ks[6], (WIDTH, PROJ), b_w),
        fc1_b=u(ks[7], (1, PROJ), b_w),
        fc2_w=u(ks[8], (PROJ, 1), b_p),
        fc2_b=u(ks[9], (1, 1), b_p),
    )


# ----------------------------------------------------------------------------
# Pure-JAX reference mirroring the PyTorch forward (real FFTs + erf-GELU, full f32).
# ----------------------------------------------------------------------------
def fno1d_reference(x, params):
    h = x @ params["fc0_w"] + params["fc0_b"]                  # (B, S, W)
    h = jnp.transpose(h, (0, 2, 1))                            # (B, W, S)  == NCW
    h = jnp.pad(h, ((0, 0), (0, 0), (0, PAD)))
    for k in range(N_LAYERS):
        hft = jnp.fft.rfft(h, axis=-1)                         # (B, W, L//2+1)
        w = params["spec_wr"][k] + 1j * params["spec_wi"][k]   # (MODES, Win, Wout)
        prod = jnp.einsum("bim,mio->bom", hft[:, :, :MODES], w.astype(jnp.complex64))
        out_ft = jnp.zeros((h.shape[0], WIDTH, L_PAD // 2 + 1), dtype=jnp.complex64)
        out_ft = out_ft.at[:, :, :MODES].set(prod)
        x1 = jnp.fft.irfft(out_ft, n=L_PAD, axis=-1)
        x2 = (jnp.einsum("bil,io->bol", h, params["conv_w"][k])
              + params["conv_b"][k][0][None, :, None])
        h = x1 + x2
        if k != N_LAYERS - 1:
            h = jax.nn.gelu(h, approximate=False)
    h = h[..., :-PAD]
    h = jnp.transpose(h, (0, 2, 1))                            # (B, S, W)
    h = jax.nn.gelu(h @ params["fc1_w"] + params["fc1_b"], approximate=False)
    h = h @ params["fc2_w"] + params["fc2_b"]
    return h[..., 0]


if __name__ == "__main__":
    key = jax.random.PRNGKey(0)
    pkey, xkey = jax.random.split(key)
    params = init_params(pkey)
    x = jax.random.normal(xkey, (BATCH, SEQ, IN_CH), jnp.float32)   # (batchsize, x=s, c=2)

    kparams = prepare_kernel_params(params)        # one-time layout prep, outside jit
    out = jax.jit(fno1d_forward)(x, kparams)
    out = jax.block_until_ready(out)
    assert out.shape == (BATCH, SEQ) and out.dtype == jnp.float32

    with jax.default_matmul_precision("highest"):
        ref = fno1d_reference(x, params)
    ref = jax.block_until_ready(ref)
    np.testing.assert_allclose(np.asarray(out), np.asarray(ref), rtol=2e-2, atol=2e-3)

    print("KERNEL_OK")
</pallas_src>

<mosaic_0001>
module attributes {stable_mosaic.version = 11 : i64} {
  func.func @fno1d_kernel(%arg0: i32, %arg1: memref<1x32x2xf32, #tpu.memory_space<vmem>>, %arg2: memref<2x32xf32, #tpu.memory_space<vmem>>, %arg3: memref<1x32xf32, #tpu.memory_space<vmem>>, %arg4: memref<32x40xf32, #tpu.memory_space<vmem>>, %arg5: memref<40x32xf32, #tpu.memory_space<vmem>>, %arg6: memref<3x16x64x64xbf16, #tpu.memory_space<vmem>>, %arg7: memref<3x32x32xf32, #tpu.memory_space<vmem>>, %arg8: memref<3x1x32xf32, #tpu.memory_space<vmem>>, %arg9: memref<32x32xf32, #tpu.memory_space<vmem>>, %arg10: memref<1x32xf32, #tpu.memory_space<vmem>>, %arg11: memref<1x32xf32, #tpu.memory_space<vmem>>, %arg12: memref<1x1xf32, #tpu.memory_space<vmem>>, %arg13: memref<1x1x32xf32, #tpu.memory_space<vmem>>, %arg14: memref<40x32xf32, #tpu.memory_space<vmem>>) attributes {dimension_semantics = [#tpu.dimension_semantics<parallel>], iteration_bounds = array<i64: 2>, scalar_prefetch = 0 : i64, scratch_operands = 1 : i64, tpu.core_type = #tpu.core_type<tc>, window_params = [{transform_indices = @transform_0, window_bounds = array<i64: 1, 32, 2>}, {pipeline_mode = #tpu.pipeline_mode<synchronous>, transform_indices = @transform_1, window_bounds = array<i64: 2, 32>}, {pipeline_mode = #tpu.pipeline_mode<synchronous>, transform_indices = @transform_2, window_bounds = array<i64: 1, 32>}, {pipeline_mode = #tpu.pipeline_mode<synchronous>, transform_indices = @transform_3, window_bounds = array<i64: 32, 40>}, {pipeline_mode = #tpu.pipeline_mode<synchronous>, transform_indices = @transform_4, window_bounds = array<i64: 40, 32>}, {pipeline_mode = #tpu.pipeline_mode<synchronous>, transform_indices = @transform_5, window_bounds = array<i64: 3, 16, 64, 64>}, {pipeline_mode = #tpu.pipeline_mode<synchronous>, transform_indices = @transform_6, window_bounds = array<i64: 3, 32, 32>}, {pipeline_mode = #tpu.pipeline_mode<synchronous>, transform_indices = @transform_7, window_bounds = array<i64: 3, 1, 32>}, {pipeline_mode = #tpu.pipeline_mode<synchronous>, transform_indices = @transform_8, window_bounds = array<i64: 32, 32>}, {pipeline_mode = #tpu.pipeline_mode<synchronous>, transform_indices = @transform_9, window_bounds = array<i64: 1, 32>}, {pipeline_mode = #tpu.pipeline_mode<synchronous>, transform_indices = @transform_10, window_bounds = array<i64: 1, 32>}, {pipeline_mode = #tpu.pipeline_mode<synchronous>, transform_indices = @transform_11, window_bounds = array<i64: 1, 1>}, {transform_indices = @transform_12, window_bounds = array<i64: 1, 1, 32>}]} {
    %c0 = arith.constant 0 : index
    %c0_0 = arith.constant 0 : index
    %c0_1 = arith.constant 0 : index
    %0 = vector.load %arg1[%c0, %c0_0, %c0_1] : memref<1x32x2xf32, #tpu.memory_space<vmem>>, vector<1x32x2xf32>
    %1 = vector.shape_cast %0 : vector<1x32x2xf32> to vector<32x2xf32>
    %c0_2 = arith.constant 0 : index
    %c0_3 = arith.constant 0 : index
    %2 = vector.load %arg2[%c0_2, %c0_3] : memref<2x32xf32, #tpu.memory_space<vmem>>, vector<2x32xf32>
    %cst = arith.constant dense<0.000000e+00> : vector<32x32xf32>
    %3 = tpu.matmul %1, %2, %cst {dimension_numbers = #tpu.dot_dimension_numbers<[1], [0], [0], [1], [0, 0, 1, 1], [], []>} : vector<32x2xf32>, vector<2x32xf32>, vector<32x32xf32> -> vector<32x32xf32>
    %c0_4 = arith.constant 0 : index
    %c0_5 = arith.constant 0 : index
    %4 = vector.load %arg3[%c0_4, %c0_5] : memref<1x32xf32, #tpu.memory_space<vmem>>, vector<1x32xf32>
    %5 = vector.broadcast %4 : vector<1x32xf32> to vector<32x32xf32>
    %6 = arith.addf %3, %5 : vector<32x32xf32>
    %c0_6 = arith.constant 0 : index
    %c0_7 = arith.constant 0 : index
    %7 = vector.load %arg14[%c0_6, %c0_7] : memref<40x32xf32, #tpu.memory_space<vmem>>, vector<32x32xf32>
    tpu.vector_store %arg14[%c0_6, %c0_7], %6 {strides = array<i32>} : memref<40x32xf32, #tpu.memory_space<vmem>>, vector<32x32xf32>,
    %cst_8 = arith.constant 0.000000e+00 : f32
    %8 = vector.broadcast %cst_8 : f32 to vector<8x32xf32>
    %c32 = arith.constant 32 : index
    %c0_9 = arith.constant 0 : index
    %9 = vector.load %arg14[%c32, %c0_9] : memref<40x32xf32, #tpu.memory_space<vmem>>, vector<8x32xf32>
    tpu.vector_store %arg14[%c32, %c0_9], %8 {strides = array<i32>} : memref<40x32xf32, #tpu.memory_space<vmem>>, vector<8x32xf32>,
    %c0_10 = arith.constant 0 : index
    %c0_11 = arith.constant 0 : index
    %10 = vector.load %arg4[%c0_10, %c0_11] : memref<32x40xf32, #tpu.memory_space<vmem>>, vector<32x40xf32>
    %c0_12 = arith.constant 0 : index
    %c0_13 = arith.constant 0 : index
    %11 = vector.load %arg5[%c0_12, %c0_13] : memref<40x32xf32, #tpu.memory_space<vmem>>, vector<40x32xf32>
    %c0_14 = arith.constant 0 : index
    %c0_15 = arith.constant 0 : index
    %12 = vector.load %arg14[%c0_14, %c0_15] : memref<40x32xf32, #tpu.memory_space<vmem>>, vector<40x32xf32>
    %cst_16 = arith.constant dense<0.000000e+00> : vector<32x32xf32>
    %13 = tpu.matmul %10, %12, %cst_16 {dimension_numbers = #tpu.dot_dimension_numbers<[1], [0], [0], [1], [0, 0, 1, 1], [], []>} : vector<32x40xf32>, vector<40x32xf32>, vector<32x32xf32> -> vector<32x32xf32>
    %14 = vector.extract_strided_slice %13 {offsets = [0, 0], sizes = [16, 32], strides = [1, 1]} : vector<32x32xf32> to vector<16x32xf32>
    %15 = vector.extract_strided_slice %13 {offsets = [16, 0], sizes = [16, 32], strides = [1, 1]} : vector<32x32xf32> to vector<16x32xf32>
    %16 = tpu.concatenate %14, %15 in 1 : vector<16x32xf32>, vector<16x32xf32> -> vector<16x64xf32>
    %17 = vector.shape_cast %16 : vector<16x64xf32> to vector<16x1x64xf32>
    %18 = arith.truncf %17 : vector<16x1x64xf32> to vector<16x1x64xbf16>
    %c0_17 = arith.constant 0 : index
    %c0_18 = arith.constant 0 : index
    %c0_19 = arith.constant 0 : index
    %c0_20 = arith.constant 0 : index
    %19 = vector.load %arg6[%c0_17, %c0_18, %c0_19, %c0_20] : memref<3x16x64x64xbf16, #tpu.memory_space<vmem>>, vector<1x16x64x64xbf16>
    %20 = vector.shape_cast %19 : vector<1x16x64x64xbf16> to vector<16x64x64xbf16>
    %cst_21 = arith.constant dense<0.000000e+00> : vector<16x1x64xf32>
    %21 = tpu.matmul %18, %20, %cst_21 {dimension_numbers = #tpu.dot_dimension_numbers<[2], [1], [1], [2], [0, 0, 0, 1, 1, 2], [0], [0]>} : vector<16x1x64xbf16>, vector<16x64x64xbf16>, vector<16x1x64xf32> -> vector<16x1x64xf32>
    %22 = vector.shape_cast %21 : vector<16x1x64xf32> to vector<16x64xf32>
    %23 = vector.extract_strided_slice %22 {offsets = [0, 0], sizes = [16, 32], strides = [1, 1]} : vector<16x64xf32> to vector<16x32xf32>
    %24 = vector.extract_strided_slice %22 {offsets = [0, 32], sizes = [16, 32], strides = [1, 1]} : vector<16x64xf32> to vector<16x32xf32>
    %25 = tpu.concatenate %23, %24 in 0 : vector<16x32xf32>, vector<16x32xf32> -> vector<32x32xf32>
    %cst_22 = arith.constant dense<0.000000e+00> : vector<40x32xf32>
    %26 = tpu.matmul %11, %25, %cst_22 {dimension_numbers = #tpu.dot_dimension_numbers<[1], [0], [0], [1], [0, 0, 1, 1], [], []>} : vector<40x32xf32>, vector<32x32xf32>, vector<40x32xf32> -> vector<40x32xf32>
    %c0_23 = arith.constant 0 : index
    %c0_24 = arith.constant 0 : index
    %c0_25 = arith.constant 0 : index
    %27 = vector.load %arg7[%c0_23, %c0_24, %c0_25] : memref<3x32x32xf32, #tpu.memory_space<vmem>>, vector<1x32x32xf32>
    %28 = vector.shape_cast %27 : vector<1x32x32xf32> to vector<32x32xf32>
    %cst_26 = arith.constant dense<0.000000e+00> : vector<40x32xf32>
    %29 = tpu.matmul %12, %28, %cst_26 {dimension_numbers = #tpu.dot_dimension_numbers<[1], [0], [0], [1], [0, 0, 1, 1], [], []>} : vector<40x32xf32>, vector<32x32xf32>, vector<40x32xf32> -> vector<40x32xf32>
    %c0_27 = arith.constant 0 : index
    %c0_28 = arith.constant 0 : index
    %c0_29 = arith.constant 0 : index
    %30 = vector.load %arg8[%c0_27, %c0_28, %c0_29] : memref<3x1x32xf32, #tpu.memory_space<vmem>>, vector<1x1x32xf32>
    %31 = vector.shape_cast %30 : vector<1x1x32xf32> to vector<1x32xf32>
    %32 = vector.broadcast %31 : vector<1x32xf32> to vector<40x32xf32>
    %33 = arith.addf %29, %32 : vector<40x32xf32>
    %34 = arith.addf %26, %33 : vector<40x32xf32>
    %cst_30 = arith.constant 5.000000e-01 : f32
    %35 = vector.broadcast %cst_30 : f32 to vector<40x32xf32>
    %36 = arith.mulf %35, %34 : vector<40x32xf32>
    %cst_31 = arith.constant 0.707106769 : f32
    %37 = vector.broadcast %cst_31 : f32 to vector<40x32xf32>
    %38 = arith.mulf %34, %37 : vector<40x32xf32>
    %39 = math.absf %38 : vector<40x32xf32>
    %cst_32 = arith.constant 0.327591091 : f32
    %40 = vector.broadcast %cst_32 : f32 to vector<40x32xf32>
    %41 = arith.mulf %40, %39 : vector<40x32xf32>
    %cst_33 = arith.constant 1.000000e+00 : f32
    %42 = vector.broadcast %cst_33 : f32 to vector<40x32xf32>
    %43 = arith.addf %42, %41 : vector<40x32xf32>
    %cst_34 = arith.constant 1.000000e+00 : f32
    %44 = vector.broadcast %cst_34 : f32 to vector<40x32xf32>
    %45 = arith.divf %44, %43 : vector<40x32xf32>
    %cst_35 = arith.constant 1.06140542 : f32
    %46 = vector.broadcast %cst_35 : f32 to vector<40x32xf32>
    %47 = arith.mulf %45, %46 : vector<40x32xf32>
    %cst_36 = arith.constant -1.45315206 : f32
    %48 = vector.broadcast %cst_36 : f32 to vector<40x32xf32>
    %49 = arith.addf %48, %47 : vector<40x32xf32>
    %50 = arith.mulf %45, %49 : vector<40x32xf32>
    %cst_37 = arith.constant 1.42141378 : f32
    %51 = vector.broadcast %cst_37 : f32 to vector<40x32xf32>
    %52 = arith.addf %51, %50 : vector<40x32xf32>
    %53 = arith.mulf %45, %52 : vector<40x32xf32>
    %cst_38 = arith.constant -0.284496725 : f32
    %54 = vector.broadcast %cst_38 : f32 to vector<40x32xf32>
    %55 = arith.addf %54, %53 : vector<40x32xf32>
    %56 = arith.mulf %45, %55 : vector<40x32xf32>
    %cst_39 = arith.constant 0.254829586 : f32
    %57 = vector.broadcast %cst_39 : f32 to vector<40x32xf32>
    %58 = arith.addf %57, %56 : vector<40x32xf32>
    %59 = arith.mulf %45, %58 : vector<40x32xf32>
    %cst_40 = arith.constant 0.000000e+00 : f32
    %60 = vector.broadcast %cst_40 : f32 to vector<40x32xf32>
    %61 = arith.subf %60, %39 : vector<40x32xf32>
    %62 = arith.mulf %61, %39 : vector<40x32xf32>
    %63 = math.exp %62 : vector<40x32xf32>
    %64 = arith.mulf %59, %63 : vector<40x32xf32>
    %cst_41 = arith.constant 1.000000e+00 : f32
    %65 = vector.broadcast %cst_41 : f32 to vector<40x32xf32>
    %66 = arith.subf %65, %64 : vector<40x32xf32>
    %cst_42 = arith.constant 0.000000e+00 : f32
    %67 = vector.broadcast %cst_42 : f32 to vector<40x32xf32>
    %68 = arith.cmpf oge, %38, %67 : vector<40x32xf32>
    %cst_43 = arith.constant 0.000000e+00 : f32
    %69 = vector.broadcast %cst_43 : f32 to vector<40x32xf32>
    %70 = arith.subf %69, %66 : vector<40x32xf32>
    %71 = arith.select %68, %66, %70 : vector<40x32xi1>, vector<40x32xf32>
    %cst_44 = arith.constant 1.000000e+00 : f32
    %72 = vector.broadcast %cst_44 : f32 to vector<40x32xf32>
    %73 = arith.addf %72, %71 : vector<40x32xf32>
    %74 = arith.mulf %36, %73 : vector<40x32xf32>
    %c0_45 = arith.constant 0 : index
    %c0_46 = arith.constant 0 : index
    %75 = vector.load %arg14[%c0_45, %c0_46] : memref<40x32xf32, #tpu.memory_space<vmem>>, vector<40x32xf32>
    tpu.vector_store %arg14[%c0_45, %c0_46], %74 {strides = array<i32>} : memref<40x32xf32, #tpu.memory_space<vmem>>, vector<40x32xf32>,
    %c0_47 = arith.constant 0 : index
    %c0_48 = arith.constant 0 : index
    %76 = vector.load %arg14[%c0_47, %c0_48] : memref<40x32xf32, #tpu.memory_space<vmem>>, vector<40x32xf32>
    %cst_49 = arith.constant dense<0.000000e+00> : vector<32x32xf32>
    %77 = tpu.matmul %10, %76, %cst_49 {dimension_numbers = #tpu.dot_dimension_numbers<[1], [0], [0], [1], [0, 0, 1, 1], [], []>} : vector<32x40xf32>, vector<40x32xf32>, vector<32x32xf32> -> vector<32x32xf32>
    %78 = vector.extract_strided_slice %77 {offsets = [0, 0], sizes = [16, 32], strides = [1, 1]} : vector<32x32xf32> to vector<16x32xf32>
    %79 = vector.extract_strided_slice %77 {offsets = [16, 0], sizes = [16, 32], strides = [1, 1]} : vector<32x32xf32> to vector<16x32xf32>
    %80 = tpu.concatenate %78, %79 in 1 : vector<16x32xf32>, vector<16x32xf32> -> vector<16x64xf32>
    %81 = vector.shape_cast %80 : vector<16x64xf32> to vector<16x1x64xf32>
    %82 = arith.truncf %81 : vector<16x1x64xf32> to vector<16x1x64xbf16>
    %c1 = arith.constant 1 : index
    %c0_50 = arith.constant 0 : index
    %c0_51 = arith.constant 0 : index
    %c0_52 = arith.constant 0 : index
    %83 = vector.load %arg6[%c1, %c0_50, %c0_51, %c0_52] : memref<3x16x64x64xbf16, #tpu.memory_space<vmem>>, vector<1x16x64x64xbf16>
    %84 = vector.shape_cast %83 : vector<1x16x64x64xbf16> to vector<16x64x64xbf16>
    %cst_53 = arith.constant dense<0.000000e+00> : vector<16x1x64xf32>
    %85 = tpu.matmul %82, %84, %cst_53 {dimension_numbers = #tpu.dot_dimension_numbers<[2], [1], [1], [2], [0, 0, 0, 1, 1, 2], [0], [0]>} : vector<16x1x64xbf16>, vector<16x64x64xbf16>, vector<16x1x64xf32> -> vector<16x1x64xf32>
    %86 = vector.shape_cast %85 : vector<16x1x64xf32> to vector<16x64xf32>
    %87 = vector.extract_strided_slice %86 {offsets = [0, 0], sizes = [16, 32], strides = [1, 1]} : vector<16x64xf32> to vector<16x32xf32>
    %88 = vector.extract_strided_slice %86 {offsets = [0, 32], sizes = [16, 32], strides = [1, 1]} : vector<16x64xf32> to vector<16x32xf32>
    %89 = tpu.concatenate %87, %88 in 0 : vector<16x32xf32>, vector<16x32xf32> -> vector<32x32xf32>
    %cst_54 = arith.constant dense<0.000000e+00> : vector<40x32xf32>
    %90 = tpu.matmul %11, %89, %cst_54 {dimension_numbers = #tpu.dot_dimension_numbers<[1], [0], [0], [1], [0, 0, 1, 1], [], []>} : vector<40x32xf32>, vector<32x32xf32>, vector<40x32xf32> -> vector<40x32xf32>
    %c1_55 = arith.constant 1 : index
    %c0_56 = arith.constant 0 : index
    %c0_57 = arith.constant 0 : index
    %91 = vector.load %arg7[%c1_55, %c0_56, %c0_57] : memref<3x32x32xf32, #tpu.memory_space<vmem>>, vector<1x32x32xf32>
    %92 = vector.shape_cast %91 : vector<1x32x32xf32> to vector<32x32xf32>
    %cst_58 = arith.constant dense<0.000000e+00> : vector<40x32xf32>
    %93 = tpu.matmul %76, %92, %cst_58 {dimension_numbers = #tpu.dot_dimension_numbers<[1], [0], [0], [1], [0, 0, 1, 1], [], []>} : vector<40x32xf32>, vector<32x32xf32>, vector<40x32xf32> -> vector<40x32xf32>
    %c1_59 = arith.constant 1 : index
    %c0_60 = arith.constant 0 : index
    %c0_61 = arith.constant 0 : index
    %94 = vector.load %arg8[%c1_59, %c0_60, %c0_61] : memref<3x1x32xf32, #tpu.memory_space<vmem>>, vector<1x1x32xf32>
    %95 = vector.shape_cast %94 : vector<1x1x32xf32> to vector<1x32xf32>
    %96 = vector.broadcast %95 : vector<1x32xf32> to vector<40x32xf32>
    %97 = arith.addf %93, %96 : vector<40x32xf32>
    %98 = arith.addf %90, %97 : vector<40x32xf32>
    %cst_62 = arith.constant 5.000000e-01 : f32
    %99 = vector.broadcast %cst_62 : f32 to vector<40x32xf32>
    %100 = arith.mulf %99, %98 : vector<40x32xf32>
    %cst_63 = arith.constant 0.707106769 : f32
    %101 = vector.broadcast %cst_63 : f32 to vector<40x32xf32>
    %102 = arith.mulf %98, %101 : vector<40x32xf32>
    %103 = math.absf %102 : vector<40x32xf32>
    %cst_64 = arith.constant 0.327591091 : f32
    %104 = vector.broadcast %cst_64 : f32 to vector<40x32xf32>
    %105 = arith.mulf %104, %103 : vector<40x32xf32>
    %cst_65 = arith.constant 1.000000e+00 : f32
    %106 = vector.broadcast %cst_65 : f32 to vector<40x32xf32>
    %107 = arith.addf %106, %105 : vector<40x32xf32>
    %cst_66 = arith.constant 1.000000e+00 : f32
    %108 = vector.broadcast %cst_66 : f32 to vector<40x32xf32>
    %109 = arith.divf %108, %107 : vector<40x32xf32>
    %cst_67 = arith.constant 1.06140542 : f32
    %110 = vector.broadcast %cst_67 : f32 to vector<40x32xf32>
    %111 = arith.mulf %109, %110 : vector<40x32xf32>
    %cst_68 = arith.constant -1.45315206 : f32
    %112 = vector.broadcast %cst_68 : f32 to vector<40x32xf32>
    %113 = arith.addf %112, %111 : vector<40x32xf32>
    %114 = arith.mulf %109, %113 : vector<40x32xf32>
    %cst_69 = arith.constant 1.42141378 : f32
    %115 = vector.broadcast %cst_69 : f32 to vector<40x32xf32>
    %116 = arith.addf %115, %114 : vector<40x32xf32>
    %117 = arith.mulf %109, %116 : vector<40x32xf32>
    %cst_70 = arith.constant -0.284496725 : f32
    %118 = vector.broadcast %cst_70 : f32 to vector<40x32xf32>
    %119 = arith.addf %118, %117 : vector<40x32xf32>
    %120 = arith.mulf %109, %119 : vector<40x32xf32>
    %cst_71 = arith.constant 0.254829586 : f32
    %121 = vector.broadcast %cst_71 : f32 to vector<40x32xf32>
    %122 = arith.addf %121, %120 : vector<40x32xf32>
    %123 = arith.mulf %109, %122 : vector<40x32xf32>
    %cst_72 = arith.constant 0.000000e+00 : f32
    %124 = vector.broadcast %cst_72 : f32 to vector<40x32xf32>
    %125 = arith.subf %124, %103 : vector<40x32xf32>
    %126 = arith.mulf %125, %103 : vector<40x32xf32>
    %127 = math.exp %126 : vector<40x32xf32>
    %128 = arith.mulf %123, %127 : vector<40x32xf32>
    %cst_73 = arith.constant 1.000000e+00 : f32
    %129 = vector.broadcast %cst_73 : f32 to vector<40x32xf32>
    %130 = arith.subf %129, %128 : vector<40x32xf32>
    %cst_74 = arith.constant 0.000000e+00 : f32
    %131 = vector.broadcast %cst_74 : f32 to vector<40x32xf32>
    %132 = arith.cmpf oge, %102, %131 : vector<40x32xf32>
    %cst_75 = arith.constant 0.000000e+00 : f32
    %133 = vector.broadcast %cst_75 : f32 to vector<40x32xf32>
    %134 = arith.subf %133, %130 : vector<40x32xf32>
    %135 = arith.select %132, %130, %134 : vector<40x32xi1>, vector<40x32xf32>
    %cst_76 = arith.constant 1.000000e+00 : f32
    %136 = vector.broadcast %cst_76 : f32 to vector<40x32xf32>
    %137 = arith.addf %136, %135 : vector<40x32xf32>
    %138 = arith.mulf %100, %137 : vector<40x32xf32>
    %c0_77 = arith.constant 0 : index
    %c0_78 = arith.constant 0 : index
    %139 = vector.load %arg14[%c0_77, %c0_78] : memref<40x32xf32, #tpu.memory_space<vmem>>, vector<40x32xf32>
    tpu.vector_store %arg14[%c0_77, %c0_78], %138 {strides = array<i32>} : memref<40x32xf32, #tpu.memory_space<vmem>>, vector<40x32xf32>,
    %c0_79 = arith.constant 0 : index
    %c0_80 = arith.constant 0 : index
    %140 = vector.load %arg14[%c0_79, %c0_80] : memref<40x32xf32, #tpu.memory_space<vmem>>, vector<40x32xf32>
    %cst_81 = arith.constant dense<0.000000e+00> : vector<32x32xf32>
    %141 = tpu.matmul %10, %140, %cst_81 {dimension_numbers = #tpu.dot_dimension_numbers<[1], [0], [0], [1], [0, 0, 1, 1], [], []>} : vector<32x40xf32>, vector<40x32xf32>, vector<32x32xf32> -> vector<32x32xf32>
    %142 = vector.extract_strided_slice %141 {offsets = [0, 0], sizes = [16, 32], strides = [1, 1]} : vector<32x32xf32> to vector<16x32xf32>
    %143 = vector.extract_strided_slice %141 {offsets = [16, 0], sizes = [16, 32], strides = [1, 1]} : vector<32x32xf32> to vector<16x32xf32>
    %144 = tpu.concatenate %142, %143 in 1 : vector<16x32xf32>, vector<16x32xf32> -> vector<16x64xf32>
    %145 = vector.shape_cast %144 : vector<16x64xf32> to vector<16x1x64xf32>
    %146 = arith.truncf %145 : vector<16x1x64xf32> to vector<16x1x64xbf16>
    %c2 = arith.constant 2 : index
    %c0_82 = arith.constant 0 : index
    %c0_83 = arith.constant 0 : index
    %c0_84 = arith.constant 0 : index
    %147 = vector.load %arg6[%c2, %c0_82, %c0_83, %c0_84] : memref<3x16x64x64xbf16, #tpu.memory_space<vmem>>, vector<1x16x64x64xbf16>
    %148 = vector.shape_cast %147 : vector<1x16x64x64xbf16> to vector<16x64x64xbf16>
    %cst_85 = arith.constant dense<0.000000e+00> : vector<16x1x64xf32>
    %149 = tpu.matmul %146, %148, %cst_85 {dimension_numbers = #tpu.dot_dimension_numbers<[2], [1], [1], [2], [0, 0, 0, 1, 1, 2], [0], [0]>} : vector<16x1x64xbf16>, vector<16x64x64xbf16>, vector<16x1x64xf32> -> vector<16x1x64xf32>
    %150 = vector.shape_cast %149 : vector<16x1x64xf32> to vector<16x64xf32>
    %151 = vector.extract_strided_slice %150 {offsets = [0, 0], sizes = [16, 32], strides = [1, 1]} : vector<16x64xf32> to vector<16x32xf32>
    %152 = vector.extract_strided_slice %150 {offsets = [0, 32], sizes = [16, 32], strides = [1, 1]} : vector<16x64xf32> to vector<16x32xf32>
    %153 = tpu.concatenate %151, %152 in 0 : vector<16x32xf32>, vector<16x32xf32> -> vector<32x32xf32>
    %cst_86 = arith.constant dense<0.000000e+00> : vector<40x32xf32>
    %154 = tpu.matmul %11, %153, %cst_86 {dimension_numbers = #tpu.dot_dimension_numbers<[1], [0], [0], [1], [0, 0, 1, 1], [], []>} : vector<40x32xf32>, vector<32x32xf32>, vector<40x32xf32> -> vector<40x32xf32>
    %c2_87 = arith.constant 2 : index
    %c0_88 = arith.constant 0 : index
    %c0_89 = arith.constant 0 : index
    %155 = vector.load %arg7[%c2_87, %c0_88, %c0_89] : memref<3x32x32xf32, #tpu.memory_space<vmem>>, vector<1x32x32xf32>
    %156 = vector.shape_cast %155 : vector<1x32x32xf32> to vector<32x32xf32>
    %cst_90 = arith.constant dense<0.000000e+00> : vector<40x32xf32>
    %157 = tpu.matmul %140, %156, %cst_90 {dimension_numbers = #tpu.dot_dimension_numbers<[1], [0], [0], [1], [0, 0, 1, 1], [], []>} : vector<40x32xf32>, vector<32x32xf32>, vector<40x32xf32> -> vector<40x32xf32>
    %c2_91 = arith.constant 2 : index
    %c0_92 = arith.constant 0 : index
    %c0_93 = arith.constant 0 : index
    %158 = vector.load %arg8[%c2_91, %c0_92, %c0_93] : memref<3x1x32xf32, #tpu.memory_space<vmem>>, vector<1x1x32xf32>
    %159 = vector.shape_cast %158 : vector<1x1x32xf32> to vector<1x32xf32>
    %160 = vector.broadcast %159 : vector<1x32xf32> to vector<40x32xf32>
    %161 = arith.addf %157, %160 : vector<40x32xf32>
    %162 = arith.addf %154, %161 : vector<40x32xf32>
    %c0_94 = arith.constant 0 : index
    %c0_95 = arith.constant 0 : index
    %163 = vector.load %arg14[%c0_94, %c0_95] : memref<40x32xf32, #tpu.memory_space<vmem>>, vector<40x32xf32>
    tpu.vector_store %arg14[%c0_94, %c0_95], %162 {strides = array<i32>} : memref<40x32xf32, #tpu.memory_space<vmem>>, vector<40x32xf32>,
    %c0_96 = arith.constant 0 : index
    %c0_97 = arith.constant 0 : index
    %164 = vector.load %arg14[%c0_96, %c0_97] : memref<40x32xf32, #tpu.memory_space<vmem>>, vector<32x32xf32>
    %c0_98 = arith.constant 0 : index
    %c0_99 = arith.constant 0 : index
    %165 = vector.load %arg9[%c0_98, %c0_99] : memref<32x32xf32, #tpu.memory_space<vmem>>, vector<32x32xf32>
    %cst_100 = arith.constant dense<0.000000e+00> : vector<32x32xf32>
    %166 = tpu.matmul %164, %165, %cst_100 {dimension_numbers = #tpu.dot_dimension_numbers<[1], [0], [0], [1], [0, 0, 1, 1], [], []>} : vector<32x32xf32>, vector<32x32xf32>, vector<32x32xf32> -> vector<32x32xf32>
    %c0_101 = arith.constant 0 : index
    %c0_102 = arith.constant 0 : index
    %167 = vector.load %arg10[%c0_101, %c0_102] : memref<1x32xf32, #tpu.memory_space<vmem>>, vector<1x32xf32>
    %168 = vector.broadcast %167 : vector<1x32xf32> to vector<32x32xf32>
    %169 = arith.addf %166, %168 : vector<32x32xf32>
    %cst_103 = arith.constant 5.000000e-01 : f32
    %170 = vector.broadcast %cst_103 : f32 to vector<32x32xf32>
    %171 = arith.mulf %170, %169 : vector<32x32xf32>
    %cst_104 = arith.constant 0.707106769 : f32
    %172 = vector.broadcast %cst_104 : f32 to vector<32x32xf32>
    %173 = arith.mulf %169, %172 : vector<32x32xf32>
    %174 = math.absf %173 : vector<32x32xf32>
    %cst_105 = arith.constant 0.327591091 : f32
    %175 = vector.broadcast %cst_105 : f32 to vector<32x32xf32>
    %176 = arith.mulf %175, %174 : vector<32x32xf32>
    %cst_106 = arith.constant 1.000000e+00 : f32
    %177 = vector.broadcast %cst_106 : f32 to vector<32x32xf32>
    %178 = arith.addf %177, %176 : vector<32x32xf32>
    %cst_107 = arith.constant 1.000000e+00 : f32
    %179 = vector.broadcast %cst_107 : f32 to vector<32x32xf32>
    %180 = arith.divf %179, %178 : vector<32x32xf32>
    %cst_108 = arith.constant 1.06140542 : f32
    %181 = vector.broadcast %cst_108 : f32 to vector<32x32xf32>
    %182 = arith.mulf %180, %181 : vector<32x32xf32>
    %cst_109 = arith.constant -1.45315206 : f32
    %183 = vector.broadcast %cst_109 : f32 to vector<32x32xf32>
    %184 = arith.addf %183, %182 : vector<32x32xf32>
    %185 = arith.mulf %180, %184 : vector<32x32xf32>
    %cst_110 = arith.constant 1.42141378 : f32
    %186 = vector.broadcast %cst_110 : f32 to vector<32x32xf32>
    %187 = arith.addf %186, %185 : vector<32x32xf32>
    %188 = arith.mulf %180, %187 : vector<32x32xf32>
    %cst_111 = arith.constant -0.284496725 : f32
    %189 = vector.broadcast %cst_111 : f32 to vector<32x32xf32>
    %190 = arith.addf %189, %188 : vector<32x32xf32>
    %191 = arith.mulf %180, %190 : vector<32x32xf32>
    %cst_112 = arith.constant 0.254829586 : f32
    %192 = vector.broadcast %cst_112 : f32 to vector<32x32xf32>
    %193 = arith.addf %192, %191 : vector<32x32xf32>
    %194 = arith.mulf %180, %193 : vector<32x32xf32>
    %cst_113 = arith.constant 0.000000e+00 : f32
    %195 = vector.broadcast %cst_113 : f32 to vector<32x32xf32>
    %196 = arith.subf %195, %174 : vector<32x32xf32>
    %197 = arith.mulf %196, %174 : vector<32x32xf32>
    %198 = math.exp %197 : vector<32x32xf32>
    %199 = arith.mulf %194, %198 : vector<32x32xf32>
    %cst_114 = arith.constant 1.000000e+00 : f32
    %200 = vector.broadcast %cst_114 : f32 to vector<32x32xf32>
    %201 = arith.subf %200, %199 : vector<32x32xf32>
    %cst_115 = arith.constant 0.000000e+00 : f32
    %202 = vector.broadcast %cst_115 : f32 to vector<32x32xf32>
    %203 = arith.cmpf oge, %173, %202 : vector<32x32xf32>
    %cst_116 = arith.constant 0.000000e+00 : f32
    %204 = vector.broadcast %cst_116 : f32 to vector<32x32xf32>
    %205 = arith.subf %204, %201 : vector<32x32xf32>
    %206 = arith.select %203, %201, %205 : vector<32x32xi1>, vector<32x32xf32>
    %cst_117 = arith.constant 1.000000e+00 : f32
    %207 = vector.broadcast %cst_117 : f32 to vector<32x32xf32>
    %208 = arith.addf %207, %206 : vector<32x32xf32>
    %209 = arith.mulf %171, %208 : vector<32x32xf32>
    %c0_118 = arith.constant 0 : index
    %c0_119 = arith.constant 0 : index
    %210 = vector.load %arg11[%c0_118, %c0_119] : memref<1x32xf32, #tpu.memory_space<vmem>>, vector<1x32xf32>
    %cst_120 = arith.constant dense<0.000000e+00> : vector<1x32xf32>
    %211 = tpu.matmul %210, %209, %cst_120 {dimension_numbers = #tpu.dot_dimension_numbers<[1], [1], [0], [0], [0, 0, 1, 0], [], []>} : vector<1x32xf32>, vector<32x32xf32>, vector<1x32xf32> -> vector<1x32xf32>
    %c0_121 = arith.constant 0 : index
    %c0_122 = arith.constant 0 : index
    %212 = vector.load %arg12[%c0_121, %c0_122] : memref<1x1xf32, #tpu.memory_space<vmem>>, vector<1x1xf32>
    %213 = vector.broadcast %212 : vector<1x1xf32> to vector<1x32xf32>
    %214 = arith.addf %211, %213 : vector<1x32xf32>
    %c0_123 = arith.constant 0 : index
    %c0_124 = arith.constant 0 : index
    %c0_125 = arith.constant 0 : index
    %215 = vector.load %arg13[%c0_123, %c0_124, %c0_125] : memref<1x1x32xf32, #tpu.memory_space<vmem>>, vector<1x1x32xf32>
    %216 = vector.shape_cast %215 : vector<1x1x32xf32> to vector<1x32xf32>
    %217 = vector.shape_cast %214 : vector<1x32xf32> to vector<1x1x32xf32>
    tpu.vector_store %arg13[%c0_123, %c0_124, %c0_125], %217 {strides = array<i32>} : memref<1x1x32xf32, #tpu.memory_space<vmem>>, vector<1x1x32xf32>,
    return
  }
  func.func @transform_0(%arg0: i32) -> (i32, i32, i32) {
    %c0_i32 = arith.constant 0 : i32
    %c0_i32_0 = arith.constant 0 : i32
    %c0_i32_1 = arith.constant 0 : i32
    return %arg0, %c0_i32, %c0_i32_0 : i32, i32, i32
  }
  func.func @transform_1(%arg0: i32) -> (i32, i32) {
    %c0_i32 = arith.constant 0 : i32
    %c0_i32_0 = arith.constant 0 : i32
    %c0_i32_1 = arith.constant 0 : i32
    return %c0_i32, %c0_i32_0 : i32, i32
  }
  func.func @transform_2(%arg0: i32) -> (i32, i32) {
    %c0_i32 = arith.constant 0 : i32
    %c0_i32_0 = arith.constant 0 : i32
    %c0_i32_1 = arith.constant 0 : i32
    return %c0_i32, %c0_i32_0 : i32, i32
  }
  func.func @transform_3(%arg0: i32) -> (i32, i32) {
    %c0_i32 = arith.constant 0 : i32
    %c0_i32_0 = arith.constant 0 : i32
    %c0_i32_1 = arith.constant 0 : i32
    return %c0_i32, %c0_i32_0 : i32, i32
  }
  func.func @transform_4(%arg0: i32) -> (i32, i32) {
    %c0_i32 = arith.constant 0 : i32
    %c0_i32_0 = arith.constant 0 : i32
    %c0_i32_1 = arith.constant 0 : i32
    return %c0_i32, %c0_i32_0 : i32, i32
  }
  func.func @transform_5(%arg0: i32) -> (i32, i32, i32, i32) {
    %c0_i32 = arith.constant 0 : i32
    %c0_i32_0 = arith.constant 0 : i32
    %c0_i32_1 = arith.constant 0 : i32
    %c0_i32_2 = arith.constant 0 : i32
    %c0_i32_3 = arith.constant 0 : i32
    return %c0_i32, %c0_i32_0, %c0_i32_1, %c0_i32_2 : i32, i32, i32, i32
  }
  func.func @transform_6(%arg0: i32) -> (i32, i32, i32) {
    %c0_i32 = arith.constant 0 : i32
    %c0_i32_0 = arith.constant 0 : i32
    %c0_i32_1 = arith.constant 0 : i32
    %c0_i32_2 = arith.constant 0 : i32
    return %c0_i32, %c0_i32_0, %c0_i32_1 : i32, i32, i32
  }
  func.func @transform_7(%arg0: i32) -> (i32, i32, i32) {
    %c0_i32 = arith.constant 0 : i32
    %c0_i32_0 = arith.constant 0 : i32
    %c0_i32_1 = arith.constant 0 : i32
    %c0_i32_2 = arith.constant 0 : i32
    return %c0_i32, %c0_i32_0, %c0_i32_1 : i32, i32, i32
  }
  func.func @transform_8(%arg0: i32) -> (i32, i32) {
    %c0_i32 = arith.constant 0 : i32
    %c0_i32_0 = arith.constant 0 : i32
    %c0_i32_1 = arith.constant 0 : i32
    return %c0_i32, %c0_i32_0 : i32, i32
  }
  func.func @transform_9(%arg0: i32) -> (i32, i32) {
    %c0_i32 = arith.constant 0 : i32
    %c0_i32_0 = arith.constant 0 : i32
    %c0_i32_1 = arith.constant 0 : i32
    return %c0_i32, %c0_i32_0 : i32, i32
  }
  func.func @transform_10(%arg0: i32) -> (i32, i32) {
    %c0_i32 = arith.constant 0 : i32
    %c0_i32_0 = arith.constant 0 : i32
    %c0_i32_1 = arith.constant 0 : i32
    return %c0_i32, %c0_i32_0 : i32, i32
  }
  func.func @transform_11(%arg0: i32) -> (i32, i32) {
    %c0_i32 = arith.constant 0 : i32
    %c0_i32_0 = arith.constant 0 : i32
    %c0_i32_1 = arith.constant 0 : i32
    return %c0_i32, %c0_i32_0 : i32, i32
  }
  func.func @transform_12(%arg0: i32) -> (i32, i32, i32) {
    %c0_i32 = arith.constant 0 : i32
    %c0_i32_0 = arith.constant 0 : i32
    %c0_i32_1 = arith.constant 0 : i32
    return %arg0, %c0_i32, %c0_i32_0 : i32, i32, i32
  }
}

</mosaic_0001>

<llo_original>
// kernel: fno1d_forward.1
$region0: #{fno1d_forward.1}
  #allocation0 [shape = 'u32[]', space=smem, size = 0x4, offset = 0x4, fixed_abs, tag = 'smem constant byte address 0x4 - core index']
  #allocation1 [shape = 'u32[144,128]{1,0:T(1,128)}', space=vmem, size = 0x12000, scoped, tag = 'internal scratch']
  #allocation2 [shape = 'f32[40,32]{1,0:T(8,128)}', space=vmem, size = 0x5000, scoped, tag = 'scratch operand']
  #allocation3 [shape = 'f32[1,1]{1,0:T(1,128)S(1)}', space=vmem, size = 0x200, scoped, tag = 'scoped memory for fno1d_forward.1']
  %s0 = inlined_call_operand.vmem [shape: f32[2,32,2], index: 0, kind: input, shape index: {}]
  %s1 = inlined_call_operand.vmem [shape: f32[2,32], index: 1, kind: input, shape index: {}]
  %s2 = inlined_call_operand.hbm [shape: f32[1,32], index: 2, kind: input, shape index: {}]
  %s3 = inlined_call_operand.vmem [shape: f32[32,40], index: 3, kind: input, shape index: {}]
  %s4 = inlined_call_operand.vmem [shape: f32[40,32], index: 4, kind: input, shape index: {}]
  %s5 = inlined_call_operand.hbm [shape: bf16[3,16,64,64], index: 5, kind: input, shape index: {}]
  %s6 = inlined_call_operand.vmem [shape: f32[3,32,32], index: 6, kind: input, shape index: {}]
  %s7 = inlined_call_operand.hbm [shape: f32[3,1,32], index: 7, kind: input, shape index: {}]
  %s8 = inlined_call_operand.vmem [shape: f32[32,32], index: 8, kind: input, shape index: {}]
  %s9 = inlined_call_operand.hbm [shape: f32[1,32], index: 9, kind: input, shape index: {}]
  %s10 = inlined_call_operand.vmem [shape: f32[1,32], index: 10, kind: input, shape index: {}]
  %s11 = inlined_call_operand.<no memory space> [shape: f32[1,1], index: 11, kind: input, shape index: {}]
  %s12 = inlined_call_operand.hbm [shape: f32[2,1,32], index: 12, kind: output, shape index: {}]
  %s13 = sld [smem:[#allocation0]]
  $region97: #{fno1d_forward.1} parent=0
    _
  %s15 = ssub.s32 1, %s13
  %s16 = scalar_select 0, %s15, %s13
  %v17 = vstv %s11
  %18 = vst [vmem:[#allocation3] sm:$0x1] %v17
  $region1: #{fno1d_forward.1} parent=0
    #allocation4 [shape = 'u8[512]{0}', space=vmem, size = 0x400, scoped, tag = 'input window, operand 2, single buffered']
    #allocation5 [shape = 's32[2]{0}', space=sflag, size = 0x8, scoped, tag = 'scoped memory for fno1d_forward.1']
    #allocation6 [shape = 's32[2]{0}', space=sflag, size = 0x8, scoped, tag = 'scoped memory for fno1d_forward.1']
    #allocation7 [shape = 'u8[786432]{0}', space=vmem, size = 0xc0000, scoped, tag = 'input window, operand 5, single buffered']
    #allocation8 [shape = 's32[1]{0}', space=sflag, size = 0x4, scoped, tag = 'scoped memory for fno1d_forward.1']
    #allocation9 [shape = 'u8[1536]{0}', space=vmem, size = 0x800, scoped, tag = 'input window, operand 7, single buffered']
    #allocation10 [shape = 'u8[512]{0}', space=vmem, size = 0x400, scoped, tag = 'input window, operand 9, single buffered']
    #allocation11 [shape = 's32[1]{0}', space=sflag, size = 0x4, scoped, tag = 'scoped memory for fno1d_forward.1']
    #allocation12 [shape = 'u8[1024]{0}', space=vmem, size = 0x400, scoped, tag = 'output window, operand 0']
    %19 = vsyncpa [#allocation5], 0
    %20 = vsyncpa [#allocation8], 0
    %21 = vsyncpa [#allocation11], 0
    %22 = vsyncpa [#allocation6], 0
    %s23 = scalar_lea.sflag [#allocation6], 1
    %24 = vsyncpa %s23, 0
    loop: start=0, step=1, limit=4
    $region2: #{fno1d_forward.1} parent=1 // loop_pre_header
      _
    $region3: #{fno1d_forward.1} parent=1 // loop_header
      %s26 = sphi 0, %s30
      %p27 = scmp.ge.s32.totalorder %s26, 4
      %s36 = sphi 0, %s38
      %s39 = sphi 0, %s36
      %s40 = sphi 0, %s39
      %s56 = sphi 0, %s40
      %s60 = sphi 0, %s60
      %s62 = sphi 0, %s60
      %s63 = sphi 0, %s62
      %s77 = sphi 0, %s63
      %s81 = sphi 0, %s81
      %s83 = sphi 0, %s81
      %s84 = sphi 0, %s83
      %s98 = sphi 0, %s84
      %s102 = sphi 0, %s102
      %s104 = sphi 0, %s102
      %s105 = sphi 0, %s104
      %s119 = sphi 0, %s105
      %s123 = sphi 0, %s123
      %s125 = sphi 0, %s123
      %s126 = sphi 0, %s125
      %s140 = sphi 0, %s126
      %s144 = sphi 0, %s144
      %s146 = sphi 0, %s144
      %s147 = sphi 0, %s146
      %s161 = sphi 0, %s147
      %s165 = sphi 0, %s165
      %s167 = sphi 0, %s165
      %s168 = sphi 0, %s167
      %s182 = sphi 0, %s168
      %s186 = sphi 0, %s186
      %s188 = sphi 0, %s186
      %s189 = sphi 0, %s188
      %s203 = sphi 0, %s189
      %s207 = sphi 0, %s207
      %s209 = sphi 0, %s207
      %s210 = sphi 0, %s209
      %s224 = sphi 0, %s210
      %s228 = sphi 0, %s228
      %s230 = sphi 0, %s228
      %s231 = sphi 0, %s230
      %s245 = sphi 0, %s231
      %s249 = sphi 0, %s249
      %s251 = sphi 0, %s249
      %s252 = sphi 0, %s251
      %s266 = sphi 0, %s252
      %s270 = sphi 0, %s270
      %s272 = sphi 0, %s270
      %s273 = sphi 0, %s272
      %s287 = sphi 0, %s273
      %s293 = sphi 0, %s295
      %s296 = sphi 0, %s293
      %s297 = sphi 0, %s296
      %s313 = sphi 0, %s297
    $region4: #{fno1d_forward.1} parent=1 // loop_header_branch
      %29 = sbr.rel (%p27) target = $region8
    $region5: #{fno1d_forward.1} parent=1 // loop_body
      %s31 = ssub.s32 %s26, 1
      %s32 = ssub.s32 %s26, 2
      %s33 = sadd.s32 %s26, 1
      %s34 = ssub.s32 %s26, %s33
      %p35 = scmp.eq.s32.totalorder %s34, 0
      %s37 = sadd.s32 %s36, 1
      %s38 = scalar_select %p35, %s36, %s37
      %p41 = pneg %p35
      %p42 = scmp.eq.s32.totalorder %s26, 1
      %p43 = por %p41, %p42
      %p44 = scmp.ne.s32.totalorder %s36, %s39
      %p45 = scmp.eq.s32.totalorder %s26, 0
      %p46 = por %p44, %p45
      %p47 = scmp.ne.s32.totalorder %s36, %s39
      %p48 = scmp.eq.s32.totalorder %s31, 1
      %p49 = por %p47, %p48
      %p50 = scmp.ne.s32.totalorder %s39, %s40
      %p51 = scmp.eq.s32.totalorder %s31, 0
      %p52 = por %p50, %p51
      %p53 = scmp.ne.s32.totalorder %s39, %s40
      %p54 = scmp.eq.s32.totalorder %s32, 1
      %p55 = por %p53, %p54
      %p57 = scmp.ne.s32.totalorder %s40, %s56
      %p58 = scmp.eq.s32.totalorder %s32, 0
      %p59 = por %p57, %p58
      %s61 = sadd.s32 %s60, 1
      %p64 = scmp.eq.s32.totalorder %s26, 1
      %p65 = scmp.ne.s32.totalorder %s60, %s62
      %p66 = scmp.eq.s32.totalorder %s26, 0
      %p67 = por %p65, %p66
      %p68 = scmp.ne.s32.totalorder %s60, %s62
      %p69 = scmp.eq.s32.totalorder %s31, 1
      %p70 = por %p68, %p69
      %p71 = scmp.ne.s32.totalorder %s62, %s63
      %p72 = scmp.eq.s32.totalorder %s31, 0
      %p73 = por %p71, %p72
      %p74 = scmp.ne.s32.totalorder %s62, %s63
      %p75 = scmp.eq.s32.totalorder %s32, 1
      %p76 = por %p74, %p75
      %p78 = scmp.ne.s32.totalorder %s63, %s77
      %p79 = scmp.eq.s32.totalorder %s32, 0
      %p80 = por %p78, %p79
      %s82 = sadd.s32 %s81, 1
      %p85 = scmp.eq.s32.totalorder %s26, 1
      %p86 = scmp.ne.s32.totalorder %s81, %s83
      %p87 = scmp.eq.s32.totalorder %s26, 0
      %p88 = por %p86, %p87
      %p89 = scmp.ne.s32.totalorder %s81, %s83
      %p90 = scmp.eq.s32.totalorder %s31, 1
      %p91 = por %p89, %p90
      %p92 = scmp.ne.s32.totalorder %s83, %s84
      %p93 = scmp.eq.s32.totalorder %s31, 0
      %p94 = por %p92, %p93
      %p95 = scmp.ne.s32.totalorder %s83, %s84
      %p96 = scmp.eq.s32.totalorder %s32, 1
      %p97 = por %p95, %p96
      %p99 = scmp.ne.s32.totalorder %s84, %s98
      %p100 = scmp.eq.s32.totalorder %s32, 0
      %p101 = por %p99, %p100
      %s103 = sadd.s32 %s102, 1
      %p106 = scmp.eq.s32.totalorder %s26, 1
      %p107 = scmp.ne.s32.totalorder %s102, %s104
      %p108 = scmp.eq.s32.totalorder %s26, 0
      %p109 = por %p107, %p108
      %p110 = scmp.ne.s32.totalorder %s102, %s104
      %p111 = scmp.eq.s32.totalorder %s31, 1
      %p112 = por %p110, %p111
      %p113 = scmp.ne.s32.totalorder %s104, %s105
      %p114 = scmp.eq.s32.totalorder %s31, 0
      %p115 = por %p113, %p114
      %p116 = scmp.ne.s32.totalorder %s104, %s105
      %p117 = scmp.eq.s32.totalorder %s32, 1
      %p118 = por %p116, %p117
      %p120 = scmp.ne.s32.totalorder %s105, %s119
      %p121 = scmp.eq.s32.totalorder %s32, 0
      %p122 = por %p120, %p121
      %s124 = sadd.s32 %s123, 1
      %p127 = scmp.eq.s32.totalorder %s26, 1
      %p128 = scmp.ne.s32.totalorder %s123, %s125
      %p129 = scmp.eq.s32.totalorder %s26, 0
      %p130 = por %p128, %p129
      %p131 = scmp.ne.s32.totalorder %s123, %s125
      %p132 = scmp.eq.s32.totalorder %s31, 1
      %p133 = por %p131, %p132
      %p134 = scmp.ne.s32.totalorder %s125, %s126
      %p135 = scmp.eq.s32.totalorder %s31, 0
      %p136 = por %p134, %p135
      %p137 = scmp.ne.s32.totalorder %s125, %s126
      %p138 = scmp.eq.s32.totalorder %s32, 1
      %p139 = por %p137, %p138
      %p141 = scmp.ne.s32.totalorder %s126, %s140
      %p142 = scmp.eq.s32.totalorder %s32, 0
      %p143 = por %p141, %p142
      %s145 = sadd.s32 %s144, 1
      %p148 = scmp.eq.s32.totalorder %s26, 1
      %p149 = scmp.ne.s32.totalorder %s144, %s146
      %p150 = scmp.eq.s32.totalorder %s26, 0
      %p151 = por %p149, %p150
      %p152 = scmp.ne.s32.totalorder %s144, %s146
      %p153 = scmp.eq.s32.totalorder %s31, 1
      %p154 = por %p152, %p153
      %p155 = scmp.ne.s32.totalorder %s146, %s147
      %p156 = scmp.eq.s32.totalorder %s31, 0
      %p157 = por %p155, %p156
      %p158 = scmp.ne.s32.totalorder %s146, %s147
      %p159 = scmp.eq.s32.totalorder %s32, 1
      %p160 = por %p158, %p159
      %p162 = scmp.ne.s32.totalorder %s147, %s161
      %p163 = scmp.eq.s32.totalorder %s32, 0
      %p164 = por %p162, %p163
      %s166 = sadd.s32 %s165, 1
      %p169 = scmp.eq.s32.totalorder %s26, 1
      %p170 = scmp.ne.s32.totalorder %s165, %s167
      %p171 = scmp.eq.s32.totalorder %s26, 0
      %p172 = por %p170, %p171
      %p173 = scmp.ne.s32.totalorder %s165, %s167
      %p174 = scmp.eq.s32.totalorder %s31, 1
      %p175 = por %p173, %p174
      %p176 = scmp.ne.s32.totalorder %s167, %s168
      %p177 = scmp.eq.s32.totalorder %s31, 0
      %p178 = por %p176, %p177
      %p179 = scmp.ne.s32.totalorder %s167, %s168
      %p180 = scmp.eq.s32.totalorder %s32, 1
      %p181 = por %p179, %p180
      %p183 = scmp.ne.s32.totalorder %s168, %s182
      %p184 = scmp.eq.s32.totalorder %s32, 0
      %p185 = por %p183, %p184
      %s187 = sadd.s32 %s186, 1
      %p190 = scmp.eq.s32.totalorder %s26, 1
      %p191 = scmp.ne.s32.totalorder %s186, %s188
      %p192 = scmp.eq.s32.totalorder %s26, 0
      %p193 = por %p191, %p192
      %p194 = scmp.ne.s32.totalorder %s186, %s188
      %p195 = scmp.eq.s32.totalorder %s31, 1
      %p196 = por %p194, %p195
      %p197 = scmp.ne.s32.totalorder %s188, %s189
      %p198 = scmp.eq.s32.totalorder %s31, 0
      %p199 = por %p197, %p198
      %p200 = scmp.ne.s32.totalorder %s188, %s189
      %p201 = scmp.eq.s32.totalorder %s32, 1
      %p202 = por %p200, %p201
      %p204 = scmp.ne.s32.totalorder %s189, %s203
      %p205 = scmp.eq.s32.totalorder %s32, 0
      %p206 = por %p204, %p205
      %s208 = sadd.s32 %s207, 1
      %p211 = scmp.eq.s32.totalorder %s26, 1
      %p212 = scmp.ne.s32.totalorder %s207, %s209
      %p213 = scmp.eq.s32.totalorder %s26, 0
      %p214 = por %p212, %p213
      %p215 = scmp.ne.s32.totalorder %s207, %s209
      %p216 = scmp.eq.s32.totalorder %s31, 1
      %p217 = por %p215, %p216
      %p218 = scmp.ne.s32.totalorder %s209, %s210
      %p219 = scmp.eq.s32.totalorder %s31, 0
      %p220 = por %p218, %p219
      %p221 = scmp.ne.s32.totalorder %s209, %s210
      %p222 = scmp.eq.s32.totalorder %s32, 1
      %p223 = por %p221, %p222
      %p225 = scmp.ne.s32.totalorder %s210, %s224
      %p226 = scmp.eq.s32.totalorder %s32, 0
      %p227 = por %p225, %p226
      %s229 = sadd.s32 %s228, 1
      %p232 = scmp.eq.s32.totalorder %s26, 1
      %p233 = scmp.ne.s32.totalorder %s228, %s230
      %p234 = scmp.eq.s32.totalorder %s26, 0
      %p235 = por %p233, %p234
      %p236 = scmp.ne.s32.totalorder %s228, %s230
      %p237 = scmp.eq.s32.totalorder %s31, 1
      %p238 = por %p236, %p237
      %p239 = scmp.ne.s32.totalorder %s230, %s231
      %p240 = scmp.eq.s32.totalorder %s31, 0
      %p241 = por %p239, %p240
      %p242 = scmp.ne.s32.totalorder %s230, %s231
      %p243 = scmp.eq.s32.totalorder %s32, 1
      %p244 = por %p242, %p243
      %p246 = scmp.ne.s32.totalorder %s231, %s245
      %p247 = scmp.eq.s32.totalorder %s32, 0
      %p248 = por %p246, %p247
      %s250 = sadd.s32 %s249, 1
      %p253 = scmp.eq.s32.totalorder %s26, 1
      %p254 = scmp.ne.s32.totalorder %s249, %s251
      %p255 = scmp.eq.s32.totalorder %s26, 0
      %p256 = por %p254, %p255
      %p257 = scmp.ne.s32.totalorder %s249, %s251
      %p258 = scmp.eq.s32.totalorder %s31, 1
      %p259 = por %p257, %p258
      %p260 = scmp.ne.s32.totalorder %s251, %s252
      %p261 = scmp.eq.s32.totalorder %s31, 0
      %p262 = por %p260, %p261
      %p263 = scmp.ne.s32.totalorder %s251, %s252
      %p264 = scmp.eq.s32.totalorder %s32, 1
      %p265 = por %p263, %p264
      %p267 = scmp.ne.s32.totalorder %s252, %s266
      %p268 = scmp.eq.s32.totalorder %s32, 0
      %p269 = por %p267, %p268
      %s271 = sadd.s32 %s270, 1
      %p274 = scmp.eq.s32.totalorder %s26, 1
      %p275 = scmp.ne.s32.totalorder %s270, %s272
      %p276 = scmp.eq.s32.totalorder %s26, 0
      %p277 = por %p275, %p276
      %p278 = scmp.ne.s32.totalorder %s270, %s272
      %p279 = scmp.eq.s32.totalorder %s31, 1
      %p280 = por %p278, %p279
      %p281 = scmp.ne.s32.totalorder %s272, %s273
      %p282 = scmp.eq.s32.totalorder %s31, 0
      %p283 = por %p281, %p282
      %p284 = scmp.ne.s32.totalorder %s272, %s273
      %p285 = scmp.eq.s32.totalorder %s32, 1
      %p286 = por %p284, %p285
      %p288 = scmp.ne.s32.totalorder %s273, %s287
      %p289 = scmp.eq.s32.totalorder %s32, 0
      %p290 = por %p288, %p289
      %s291 = ssub.s32 %s26, %s33
      %p292 = scmp.eq.s32.totalorder %s291, 0
      %s294 = sadd.s32 %s293, 1
      %s295 = scalar_select %p292, %s293, %s294
      %p298 = pneg %p292
      %p299 = scmp.eq.s32.totalorder %s26, 1
      %p300 = por %p298, %p299
      %p301 = scmp.ne.s32.totalorder %s293, %s296
      %p302 = scmp.eq.s32.totalorder %s26, 0
      %p303 = por %p301, %p302
      %p304 = scmp.ne.s32.totalorder %s293, %s296
      %p305 = scmp.eq.s32.totalorder %s31, 1
      %p306 = por %p304, %p305
      %p307 = scmp.ne.s32.totalorder %s296, %s297
      %p308 = scmp.eq.s32.totalorder %s31, 0
      %p309 = por %p307, %p308
      %p310 = scmp.ne.s32.totalorder %s296, %s297
      %p311 = scmp.eq.s32.totalorder %s32, 1
      %p312 = por %p310, %p311
      %p314 = scmp.ne.s32.totalorder %s297, %s313
      %p315 = scmp.eq.s32.totalorder %s32, 0
      %p316 = por %p314, %p315
      %p317 = scmp.le.s32.totalorder 1, %s26
      %p318 = scmp.lt.s32.totalorder %s26, 3
      %p319 = pnand %p317, %p318
      %p320 = pneg %p319
      // Predicated region
      $region9: #{fno1d_forward.1} parent=5 // pred_check
        _
      $region10: #{fno1d_forward.1} parent=5 // pred_check_branch
        %322 = sbr.rel (%p319) target = $region12
      $region11: #{fno1d_forward.1} parent=5 // pred_region
        %s323 = ssub.s32 %s26, 1
        // Predicated region
        $region13: #{fno1d_forward.1} parent=11 // pred_check
          %p324 = pneg %p73
        $region14: #{fno1d_forward.1} parent=11 // pred_check_branch
          %326 = sbr.rel (%p324) target = $region16
        $region15: #{fno1d_forward.1} parent=11 // pred_region
          _
        $region16: #{fno1d_forward.1} parent=11 // pred_fallthru
          _
        // Predicated region
        $region17: #{fno1d_forward.1} parent=11 // pred_check
          %p327 = pneg %p94
        $region18: #{fno1d_forward.1} parent=11 // pred_check_branch
          %329 = sbr.rel (%p327) target = $region20
        $region19: #{fno1d_forward.1} parent=11 // pred_region
          %s331 = ssub.s32 16, 16
          %332 = vsyncadd [#allocation5], %s331
          %s334 = sshll.u32 [#allocation4], 4
          %s335 = int_to_ptr.vmem [resolvable:$true] %s334
          %337 = dma.hbm_to_vmem [thread:$0]  %s2, 16, %s335, [#allocation5]
        $region20: #{fno1d_forward.1} parent=11 // pred_fallthru
          _
        // Predicated region
        $region21: #{fno1d_forward.1} parent=11 // pred_check
          %p338 = pneg %p115
        $region22: #{fno1d_forward.1} parent=11 // pred_check_branch
          %340 = sbr.rel (%p338) target = $region24
        $region23: #{fno1d_forward.1} parent=11 // pred_region
          _
        $region24: #{fno1d_forward.1} parent=11 // pred_fallthru
          _
        // Predicated region
        $region25: #{fno1d_forward.1} parent=11 // pred_check
          %p341 = pneg %p136
        $region26: #{fno1d_forward.1} parent=11 // pred_check_branch
          %343 = sbr.rel (%p341) target = $region28
        $region27: #{fno1d_forward.1} parent=11 // pred_region
          _
        $region28: #{fno1d_forward.1} parent=11 // pred_fallthru
          _
        // Predicated region
        $region29: #{fno1d_forward.1} parent=11 // pred_check
          %p344 = pneg %p157
        $region30: #{fno1d_forward.1} parent=11 // pred_check_branch
          %346 = sbr.rel (%p344) target = $region32
        $region31: #{fno1d_forward.1} parent=11 // pred_region
          %s348 = ssub.s32 24576, 24576
          %349 = vsyncadd [#allocation8], %s348
          %s350 = sshll.u32 [#allocation7], 4
          %s351 = int_to_ptr.vmem [resolvable:$true] %s350
          %356 = dma.hbm_to_vmem [thread:$0]  %s5, 24576, %s351, [#allocation8], 64, 64, 4
        $region32: #{fno1d_forward.1} parent=11 // pred_fallthru
          _
        // Predicated region
        $region33: #{fno1d_forward.1} parent=11 // pred_check
          %p357 = pneg %p178
        $region34: #{fno1d_forward.1} parent=11 // pred_check_branch
          %359 = sbr.rel (%p357) target = $region36
        $region35: #{fno1d_forward.1} parent=11 // pred_region
          _
        $region36: #{fno1d_forward.1} parent=11 // pred_fallthru
          _
        // Predicated region
        $region37: #{fno1d_forward.1} parent=11 // pred_check
          %p360 = pneg %p199
        $region38: #{fno1d_forward.1} parent=11 // pred_check_branch
          %362 = sbr.rel (%p360) target = $region40
        $region39: #{fno1d_forward.1} parent=11 // pred_region
          %s364 = ssub.s32 48, 48
          %365 = vsyncadd [#allocation8], %s364
          %s366 = sshll.u32 [#allocation9], 4
          %s367 = int_to_ptr.vmem [resolvable:$true] %s366
          %372 = dma.hbm_to_vmem [thread:$0]  %s7, 48, %s367, [#allocation8], 16, 16, 1
        $region40: #{fno1d_forward.1} parent=11 // pred_fallthru
          _
        // Predicated region
        $region41: #{fno1d_forward.1} parent=11 // pred_check
          %p373 = pneg %p220
        $region42: #{fno1d_forward.1} parent=11 // pred_check_branch
          %375 = sbr.rel (%p373) target = $region44
        $region43: #{fno1d_forward.1} parent=11 // pred_region
          _
        $region44: #{fno1d_forward.1} parent=11 // pred_fallthru
          _
        // Predicated region
        $region45: #{fno1d_forward.1} parent=11 // pred_check
          %p376 = pneg %p241
        $region46: #{fno1d_forward.1} parent=11 // pred_check_branch
          %378 = sbr.rel (%p376) target = $region48
        $region47: #{fno1d_forward.1} parent=11 // pred_region
          %s380 = ssub.s32 16, 16
          %381 = vsyncadd [#allocation11], %s380
          %s383 = sshll.u32 [#allocation10], 4
          %s384 = int_to_ptr.vmem [resolvable:$true] %s383
          %386 = dma.hbm_to_vmem [thread:$0]  %s9, 16, %s384, [#allocation11]
        $region48: #{fno1d_forward.1} parent=11 // pred_fallthru
          _
        // Predicated region
        $region49: #{fno1d_forward.1} parent=11 // pred_check
          %p387 = pneg %p262
        $region50: #{fno1d_forward.1} parent=11 // pred_check_branch
          %389 = sbr.rel (%p387) target = $region52
        $region51: #{fno1d_forward.1} parent=11 // pred_region
          _
        $region52: #{fno1d_forward.1} parent=11 // pred_fallthru
          _
        // Predicated region
        $region53: #{fno1d_forward.1} parent=11 // pred_check
          %p390 = pneg %p283
        $region54: #{fno1d_forward.1} parent=11 // pred_check_branch
          %392 = sbr.rel (%p390) target = $region56
        $region55: #{fno1d_forward.1} parent=11 // pred_region
          _
        $region56: #{fno1d_forward.1} parent=11 // pred_fallthru
          _
      $region12: #{fno1d_forward.1} parent=5 // pred_fallthru
        _
      %p393 = scmp.lt.s32.totalorder %s26, 2
      // Predicated region
      $region57: #{fno1d_forward.1} parent=5 // pred_check
        %p394 = pneg %p393
      $region58: #{fno1d_forward.1} parent=5 // pred_check_branch
        %396 = sbr.rel (%p394) target = $region60
      $region59: #{fno1d_forward.1} parent=5 // pred_region
        // Predicated region
        $region61: #{fno1d_forward.1} parent=59 // pred_check
          %p397 = pneg %p46
        $region62: #{fno1d_forward.1} parent=59 // pred_check_branch
          %399 = sbr.rel (%p397) target = $region64
        $region63: #{fno1d_forward.1} parent=59 // pred_region
          %p400 = scmp.lt.s32.totalorder %s26, 1
          %s401 = scalar_select %p400, %s26, 1
          %s402 = smul.addr %s401, 4
          %s403 = smul.addr %s402, 8
          %s404 = scalar_lea.vmem %s0, %s403
        $region64: #{fno1d_forward.1} parent=59 // pred_fallthru
          _
      $region60: #{fno1d_forward.1} parent=5 // pred_fallthru
        _
      %p405 = scmp.le.s32.totalorder 1, %s26
      %p406 = scmp.lt.s32.totalorder %s26, 3
      %p407 = pnand %p405, %p406
      %p408 = pneg %p407
      // Predicated region
      $region65: #{fno1d_forward.1} parent=5 // pred_check
        _
      $region66: #{fno1d_forward.1} parent=5 // pred_check_branch
        %410 = sbr.rel (%p407) target = $region68
      $region67: #{fno1d_forward.1} parent=5 // pred_region
        %s411 = ssub.s32 %s26, 1
        // Predicated region
        $region69: #{fno1d_forward.1} parent=67 // pred_check
          %p412 = pneg %p94
        $region70: #{fno1d_forward.1} parent=67 // pred_check_branch
          %414 = sbr.rel (%p412) target = $region72
        $region71: #{fno1d_forward.1} parent=67 // pred_region
          %415 = dma.done [#allocation5], 16
        $region72: #{fno1d_forward.1} parent=67 // pred_fallthru
          _
        // Predicated region
        $region73: #{fno1d_forward.1} parent=67 // pred_check
          %p416 = pneg %p157
        $region74: #{fno1d_forward.1} parent=67 // pred_check_branch
          %418 = sbr.rel (%p416) target = $region76
        $region75: #{fno1d_forward.1} parent=67 // pred_region
          %419 = dma.done [#allocation8], 24576
        $region76: #{fno1d_forward.1} parent=67 // pred_fallthru
          _
        // Predicated region
        $region77: #{fno1d_forward.1} parent=67 // pred_check
          %p420 = pneg %p199
        $region78: #{fno1d_forward.1} parent=67 // pred_check_branch
          %422 = sbr.rel (%p420) target = $region80
        $region79: #{fno1d_forward.1} parent=67 // pred_region
          %423 = dma.done [#allocation8], 48
        $region80: #{fno1d_forward.1} parent=67 // pred_fallthru
          _
        // Predicated region
        $region81: #{fno1d_forward.1} parent=67 // pred_check
          %p424 = pneg %p241
        $region82: #{fno1d_forward.1} parent=67 // pred_check_branch
          %426 = sbr.rel (%p424) target = $region84
        $region83: #{fno1d_forward.1} parent=67 // pred_region
          %427 = dma.done [#allocation11], 16
        $region84: #{fno1d_forward.1} parent=67 // pred_fallthru
          _
        %p428 = scmp.lt.s32.totalorder %s31, 1
        %s429 = scalar_select %p428, %s31, 1
        %s430 = smul.addr %s429, 4
        %s431 = smul.addr %s430, 8
        %s432 = scalar_lea.vmem %s0, %s431
        %p433 = pneg %p52
        %p434 = pneg %p49
        %p435 = pneg %p73
        %p436 = pneg %p70
        %p437 = pneg %p94
        %p438 = pneg %p91
        %p439 = pneg %p115
        %p440 = pneg %p112
        %p441 = pneg %p136
        %p442 = pneg %p133
        %p443 = pneg %p157
        %p444 = pneg %p154
        %p445 = pneg %p178
        %p446 = pneg %p175
        %p447 = pneg %p199
        %p448 = pneg %p196
        %p449 = pneg %p220
        %p450 = pneg %p217
        %p451 = pneg %p241
        %p452 = pneg %p238
        %p453 = pneg %p262
        %p454 = pneg %p259
        %p455 = pneg %p283
        %p456 = pneg %p280
        %p457 = pneg %p309
        %p458 = pneg %p306
        %s459 = sand.u32 %s296, 1
        %s460 = scalar_lea.sflag [#allocation6], %s459
        %s461 = sand.u32 %s296, 1
        %s462 = scalar_lea.vmem [#allocation12], %s461
        %p463 = scmp.lt.s32.totalorder %s31, 1
        %s464 = scalar_select %p463, %s31, 1
        %s465 = smul.addr %s464, 4
        %s466 = smul.addr %s465, 8
        %s467 = scalar_lea.vmem %s0, %s466
        %v469 = vld [vmem:[%s467] sm:$0xff]
        %v470 = vld [vmem:[%s467 + $0x8] sm:$0xff]
        %v471 = vld [vmem:[%s467 + $0x10] sm:$0xff]
        %v472 = vld [vmem:[%s467 + $0x18] sm:$0xff]
        %v473 = vld [vmem:[%s1] sm:$0x3]
        %v474 = vld [vmem:[#allocation4] sm:$0x1]
        %v476 = vlaneseq
        %v477 = vshrl.u32 %v476, 7
        %v478 = vsub.s32 0, %v477
        %v479 = vrot.slane %v474, %v478
        %vm481 = vcmask 15360
        %v483 = vsel %vm481, %v469, 0
        %v486 = vsel %vm481, %v470, 0
        %v489 = vsel %vm481, %v471, 0
        %v492 = vsel %vm481, %v472, 0
        %vm494 = vcmask 1041408
        %v496 = vsel %vm494, %v473, 0
        %498 = vmatprep.subr.mxu0 0.0
        %499 = vmatpush1.msra.mxu0 %v496
        %500 = vmatprep.subr.mxu0 0.0
        %501 = vmatpush1.msra.mxu0 0.0
        %502 = vmatprep.subr.mxu0 0.0
        %503 = vmatpush1.msra.mxu0 0.0
        %504 = vmatprep.subr.mxu0 0.0
        %505 = vmatpush1.msra.mxu0 0.0
        %506 = vmatprep.subr.mxu0 0.0
        %507 = vmatpush1.msra.mxu0 0.0
        %508 = vmatprep.subr.mxu0 0.0
        %509 = vmatpush1.msra.mxu0 0.0
        %510 = vmatprep.subr.mxu0 0.0
        %511 = vmatpush1.msra.mxu0 0.0
        %512 = vmatprep.subr.mxu0 0.0
        %513 = vmatpush1.msra.mxu0 0.0
        %514 = vmatprep.subr.mxu0 0.0
        %515 = vmatpush1.msra.mxu0 0.0
        %516 = vmatprep.subr.mxu0 0.0
        %517 = vmatpush1.msra.mxu0 0.0
        %518 = vmatprep.subr.mxu0 0.0
        %519 = vmatpush1.msra.mxu0 0.0
        %520 = vmatprep.subr.mxu0 0.0
        %521 = vmatpush1.msra.mxu0 0.0
        %522 = vmatprep.subr.mxu0 0.0
        %523 = vmatpush1.msra.mxu0 0.0
        %524 = vmatprep.subr.mxu0 0.0
        %525 = vmatpush1.msra.mxu0 0.0
        %526 = vmatprep.subr.mxu0 0.0
        %527 = vmatpush1.msra.mxu0 0.0
        %528 = vmatprep.subr.mxu0 0.0
        %529 = vmatpush1.msra.mxu0 0.0
        %530 = vmatprep.subr.mxu0 0.0
        %531 = vmatpush1.msra.mxu0 0.0
        %532 = vmatprep.subr.mxu0 0.0
        %533 = vmatpush1.msra.mxu0 0.0
        %534 = vmatprep.subr.mxu0 0.0
        %535 = vmatpush1.msra.mxu0 0.0
        %536 = vmatprep.subr.mxu0 0.0
        %537 = vmatpush1.msra.mxu0 0.0
        %538 = vmatprep.subr.mxu0 0.0
        %539 = vmatpush1.msra.mxu0 0.0
        %540 = vmatprep.subr.mxu0 0.0
        %541 = vmatpush1.msra.mxu0 0.0
        %542 = vmatprep.subr.mxu0 0.0
        %543 = vmatpush1.msra.mxu0 0.0
        %544 = vmatprep.subr.mxu0 0.0
        %545 = vmatpush1.msra.mxu0 0.0
        %546 = vmatprep.subr.mxu0 0.0
        %547 = vmatpush1.msra.mxu0 0.0
        %548 = vmatprep.subr.mxu0 0.0
        %549 = vmatpush1.msra.mxu0 0.0
        %550 = vmatprep.subr.mxu0 0.0
        %551 = vmatpush1.msra.mxu0 0.0
        %552 = vmatprep.subr.mxu0 0.0
        %553 = vmatpush1.msra.mxu0 0.0
        %554 = vmatprep.subr.mxu0 0.0
        %555 = vmatpush1.msra.mxu0 0.0
        %556 = vmatprep.subr.mxu0 0.0
        %557 = vmatpush1.msra.mxu0 0.0
        %558 = vmatprep.subr.mxu0 0.0
        %559 = vmatpush1.msra.mxu0 0.0
        %560 = vmatprep.subr.mxu0 0.0
        %561 = vmatpush1.msra.mxu0 0.0
        %562 = vmatprep.mubr.f32.mxu0 0.0
        %563 = vmatmul.mubr.f32.gmra.mrb[0].mxu0 %v483
        %v564 = vpop.f32.mrb[0].mxu0
        %v565 = vadd.f32 %v479, %v564
        %v566 = vpop.f32.mrb[0].mxu0
        %567 = vmatprep.mubr.f32.mxu0 0.0
        %568 = vmatmul.mubr.f32.gmra.mrb[0].mxu0 %v486
        %v569 = vpop.f32.mrb[0].mxu0
        %v570 = vadd.f32 %v479, %v569
        %v571 = vpop.f32.mrb[0].mxu0
        %572 = vmatprep.mubr.f32.mxu0 0.0
        %573 = vmatmul.mubr.f32.gmra.mrb[0].mxu0 %v489
        %v574 = vpop.f32.mrb[0].mxu0
        %v575 = vadd.f32 %v479, %v574
        %v576 = vpop.f32.mrb[0].mxu0
        %577 = vmatprep.mubr.f32.mxu0 0.0
        %578 = vmatmul.mubr.f32.gmra.mrb[0].mxu0 %v492
        %v579 = vpop.f32.mrb[0].mxu0
        %v580 = vadd.f32 %v479, %v579
        %v581 = vpop.f32.mrb[0].mxu0
        %582 = vdwg.mxu0
        %vm583 = vcmask 261120
        %584 = vst.msk [vmem:[#allocation2] sm:$0xff] %vm583, %v565
        %585 = vst.msk [vmem:[#allocation2 + $0x8] sm:$0xff] %vm583, %v570
        %586 = vst.msk [vmem:[#allocation2 + $0x10] sm:$0xff] %vm583, %v575
        %587 = vst.msk [vmem:[#allocation2 + $0x18] sm:$0xff] %vm583, %v580
        %588 = vst.msk [vmem:[#allocation2 + $0x20] sm:$0xff] %vm583, 0.0
        %v589 = vld [vmem:[%s3] sm:$0xff]
        %v590 = vld [vmem:[%s3 + $0x8] sm:$0xff]
        %v591 = vld [vmem:[%s3 + $0x10] sm:$0xff]
        %v592 = vld [vmem:[%s3 + $0x18] sm:$0xff]
        %v593 = vld [vmem:[%s4] sm:$0xff]
        %v594 = vld [vmem:[%s4 + $0x8] sm:$0xff]
        %v595 = vld [vmem:[%s4 + $0x10] sm:$0xff]
        %v596 = vld [vmem:[%s4 + $0x18] sm:$0xff]
        %v597 = vld [vmem:[%s4 + $0x20] sm:$0xff]
        %v598 = vld [vmem:[#allocation2] sm:$0xff]
        %v599 = vld [vmem:[#allocation2 + $0x8] sm:$0xff]
        %v600 = vld [vmem:[#allocation2 + $0x10] sm:$0xff]
        %v601 = vld [vmem:[#allocation2 + $0x18] sm:$0xff]
        %v602 = vld [vmem:[#allocation2 + $0x20] sm:$0xff]
        %vm603 = vcmask 326656
        %v605 = vsel %vm603, %v589, 0
        %v608 = vsel %vm603, %v590, 0
        %v611 = vsel %vm603, %v591, 0
        %v614 = vsel %vm603, %v592, 0
        %616 = vmatprep.subr.mxu0 0.0
        %617 = vmatpush1.msra.mxu0 %v598
        %618 = vmatprep.subr.mxu0 0.0
        %619 = vmatpush1.msra.mxu0 %v599
        %620 = vmatprep.subr.mxu0 0.0
        %621 = vmatpush1.msra.mxu0 %v600
        %622 = vmatprep.subr.mxu0 0.0
        %623 = vmatpush1.msra.mxu0 %v601
        %624 = vmatprep.subr.mxu0 0.0
        %625 = vmatpush1.msra.mxu0 %v602
        %626 = vmatprep.subr.mxu0 0.0
        %627 = vmatpush1.msra.mxu0 0.0
        %628 = vmatprep.subr.mxu0 0.0
        %629 = vmatpush1.msra.mxu0 0.0
        %630 = vmatprep.subr.mxu0 0.0
        %631 = vmatpush1.msra.mxu0 0.0
        %632 = vmatprep.subr.mxu0 0.0
        %633 = vmatpush1.msra.mxu0 0.0
        %634 = vmatprep.subr.mxu0 0.0
        %635 = vmatpush1.msra.mxu0 0.0
        %636 = vmatprep.subr.mxu0 0.0
        %637 = vmatpush1.msra.mxu0 0.0
        %638 = vmatprep.subr.mxu0 0.0
        %639 = vmatpush1.msra.mxu0 0.0
        %640 = vmatprep.subr.mxu0 0.0
        %641 = vmatpush1.msra.mxu0 0.0
        %642 = vmatprep.subr.mxu0 0.0
        %643 = vmatpush1.msra.mxu0 0.0
        %644 = vmatprep.subr.mxu0 0.0
        %645 = vmatpush1.msra.mxu0 0.0
        %646 = vmatprep.subr.mxu0 0.0
        %647 = vmatpush1.msra.mxu0 0.0
        %648 = vmatprep.subr.mxu0 0.0
        %649 = vmatpush1.msra.mxu0 0.0
        %650 = vmatprep.subr.mxu0 0.0
        %651 = vmatpush1.msra.mxu0 0.0
        %652 = vmatprep.subr.mxu0 0.0
        %653 = vmatpush1.msra.mxu0 0.0
        %654 = vmatprep.subr.mxu0 0.0
        %655 = vmatpush1.msra.mxu0 0.0
        %656 = vmatprep.subr.mxu0 0.0
        %657 = vmatpush1.msra.mxu0 0.0
        %658 = vmatprep.subr.mxu0 0.0
        %659 = vmatpush1.msra.mxu0 0.0
        %660 = vmatprep.subr.mxu0 0.0
        %661 = vmatpush1.msra.mxu0 0.0
        %662 = vmatprep.subr.mxu0 0.0
        %663 = vmatpush1.msra.mxu0 0.0
        %664 = vmatprep.subr.mxu0 0.0
        %665 = vmatpush1.msra.mxu0 0.0
        %666 = vmatprep.subr.mxu0 0.0
        %667 = vmatpush1.msra.mxu0 0.0
        %668 = vmatprep.subr.mxu0 0.0
        %669 = vmatpush1.msra.mxu0 0.0
        %670 = vmatprep.subr.mxu0 0.0
        %671 = vmatpush1.msra.mxu0 0.0
        %672 = vmatprep.subr.mxu0 0.0
        %673 = vmatpush1.msra.mxu0 0.0
        %674 = vmatprep.subr.mxu0 0.0
        %675 = vmatpush1.msra.mxu0 0.0
        %676 = vmatprep.subr.mxu0 0.0
        %677 = vmatpush1.msra.mxu0 0.0
        %678 = vmatprep.subr.mxu0 0.0
        %679 = vmatpush1.msra.mxu0 0.0
        %680 = vmatprep.mubr.f32.mxu0 0.0
        %681 = vmatmul.mubr.f32.gmra.mrb[0].mxu0 %v605
        %v682 = vpop.f32.mrb[0].mxu0
        %v683 = vadd.f32 0.0, %v682
        %v684 = vpop.f32.mrb[0].mxu0
        %685 = vmatprep.mubr.f32.mxu0 0.0
        %686 = vmatmul.mubr.f32.gmra.mrb[0].mxu0 %v608
        %v687 = vpop.f32.mrb[0].mxu0
        %v688 = vadd.f32 0.0, %v687
        %v689 = vpop.f32.mrb[0].mxu0
        %690 = vmatprep.mubr.f32.mxu0 0.0
        %691 = vmatmul.mubr.f32.gmra.mrb[0].mxu0 %v611
        %v692 = vpop.f32.mrb[0].mxu0
        %v693 = vadd.f32 0.0, %v692
        %v694 = vpop.f32.mrb[0].mxu0
        %695 = vmatprep.mubr.f32.mxu0 0.0
        %696 = vmatmul.mubr.f32.gmra.mrb[0].mxu0 %v614
        %v697 = vpop.f32.mrb[0].mxu0
        %v698 = vadd.f32 0.0, %v697
        %v699 = vpop.f32.mrb[0].mxu0
        %700 = vdwg.mxu0
        %703 = vrot.lane.b32.xlu0 %v693, 32
        %v704 = vpop.permute.xlu0 %703
        %705 = vrot.lane.b32.xlu0 %v698, 32
        %v706 = vpop.permute.xlu0 %705
        %v709 = vsel %vm583, %v683, %v704
        %v710 = vsel %vm583, %v688, %v706
        %v713 = vcombine.high %v709, %v709
        %v715 = vunpack.c.l.s4 1966171168
        %v716 = vunpack.c.0.s8 %v715
        %v717 = vlaneseq
        %v718 = vshrl.u32 %v717, 7
        %v719 = vsub.s32 %v716, %v718
        %v720 = vrot.slane %v709, %v719
        %v722 = vunpack.c.l.s4 1966171168
        %v723 = vunpack.c.0.s8 %v722
        %v724 = vlaneseq
        %v725 = vshrl.u32 %v724, 7
        %v726 = vsub.s32 %v723, %v725
        %v727 = vrot.slane %v713, %v726
        %v728 = vcombine.high %v720, %v720
        %v729 = vcombine.high %v727, %v727
        %v731 = vunpack.c.l.s4 1966171168
        %v732 = vunpack.c.0.s8 %v731
        %v733 = vlaneseq
        %v734 = vshrl.u32 %v733, 7
        %v735 = vsub.s32 %v732, %v734
        %v736 = vrot.slane %v720, %v735
        %v738 = vunpack.c.l.s4 1966171168
        %v739 = vunpack.c.0.s8 %v738
        %v740 = vlaneseq
        %v741 = vshrl.u32 %v740, 7
        %v742 = vsub.s32 %v739, %v741
        %v743 = vrot.slane %v727, %v742
        %v745 = vunpack.c.l.s4 1966171168
        %v746 = vunpack.c.0.s8 %v745
        %v747 = vlaneseq
        %v748 = vshrl.u32 %v747, 7
        %v749 = vsub.s32 %v746, %v748
        %v750 = vrot.slane %v728, %v749
        %v752 = vunpack.c.l.s4 1966171168
        %v753 = vunpack.c.0.s8 %v752
        %v754 = vlaneseq
        %v755 = vshrl.u32 %v754, 7
        %v756 = vsub.s32 %v753, %v755
        %v757 = vrot.slane %v729, %v756
        %v758 = vcombine.high %v736, %v736
        %v759 = vcombine.high %v743, %v743
        %v760 = vcombine.high %v750, %v750
        %v761 = vcombine.high %v757, %v757
        %v762 = vcombine.high %v710, %v710
        %v764 = vunpack.c.l.s4 1966171168
        %v765 = vunpack.c.0.s8 %v764
        %v766 = vlaneseq
        %v767 = vshrl.u32 %v766, 7
        %v768 = vsub.s32 %v765, %v767
        %v769 = vrot.slane %v710, %v768
        %v771 = vunpack.c.l.s4 1966171168
        %v772 = vunpack.c.0.s8 %v771
        %v773 = vlaneseq
        %v774 = vshrl.u32 %v773, 7
        %v775 = vsub.s32 %v772, %v774
        %v776 = vrot.slane %v762, %v775
        %v777 = vcombine.high %v769, %v769
        %v778 = vcombine.high %v776, %v776
        %v780 = vunpack.c.l.s4 1966171168
        %v781 = vunpack.c.0.s8 %v780
        %v782 = vlaneseq
        %v783 = vshrl.u32 %v782, 7
        %v784 = vsub.s32 %v781, %v783
        %v785 = vrot.slane %v769, %v784
        %v787 = vunpack.c.l.s4 1966171168
        %v788 = vunpack.c.0.s8 %v787
        %v789 = vlaneseq
        %v790 = vshrl.u32 %v789, 7
        %v791 = vsub.s32 %v788, %v790
        %v792 = vrot.slane %v776, %v791
        %v794 = vunpack.c.l.s4 1966171168
        %v795 = vunpack.c.0.s8 %v794
        %v796 = vlaneseq
        %v797 = vshrl.u32 %v796, 7
        %v798 = vsub.s32 %v795, %v797
        %v799 = vrot.slane %v777, %v798
        %v801 = vunpack.c.l.s4 1966171168
        %v802 = vunpack.c.0.s8 %v801
        %v803 = vlaneseq
        %v804 = vshrl.u32 %v803, 7
        %v805 = vsub.s32 %v802, %v804
        %v806 = vrot.slane %v778, %v805
        %v807 = vcombine.high %v785, %v785
        %v808 = vcombine.high %v792, %v792
        %v809 = vcombine.high %v799, %v799
        %v810 = vcombine.high %v806, %v806
        %v827 = vpack.c.bf16 %v736, %v736
        %v828 = vpack.c.bf16 %v750, %v750
        %v829 = vpack.c.bf16 %v758, %v758
        %v830 = vpack.c.bf16 %v760, %v760
        %v831 = vpack.c.bf16 %v743, %v743
        %v832 = vpack.c.bf16 %v757, %v757
        %v833 = vpack.c.bf16 %v759, %v759
        %v834 = vpack.c.bf16 %v761, %v761
        %v835 = vpack.c.bf16 %v785, %v785
        %v836 = vpack.c.bf16 %v799, %v799
        %v837 = vpack.c.bf16 %v807, %v807
        %v838 = vpack.c.bf16 %v809, %v809
        %v839 = vpack.c.bf16 %v792, %v792
        %v840 = vpack.c.bf16 %v806, %v806
        %v841 = vpack.c.bf16 %v808, %v808
        %v842 = vpack.c.bf16 %v810, %v810
        %v843 = vld [vmem:[#allocation7] sm:$0xf]
        %v844 = vld [vmem:[#allocation7 + $0x4] sm:$0xf]
        %v845 = vld [vmem:[#allocation7 + $0x8] sm:$0xf]
        %v846 = vld [vmem:[#allocation7 + $0xc] sm:$0xf]
        %v847 = vld [vmem:[#allocation7 + $0x10] sm:$0xf]
        %v848 = vld [vmem:[#allocation7 + $0x14] sm:$0xf]
        %v849 = vld [vmem:[#allocation7 + $0x18] sm:$0xf]
        %v850 = vld [vmem:[#allocation7 + $0x1c] sm:$0xf]
        %v851 = vld [vmem:[#allocation7 + $0x20] sm:$0xf]
        %v852 = vld [vmem:[#allocation7 + $0x24] sm:$0xf]
        %v853 = vld [vmem:[#allocation7 + $0x28] sm:$0xf]
        %v854 = vld [vmem:[#allocation7 + $0x2c] sm:$0xf]
        %v855 = vld [vmem:[#allocation7 + $0x30] sm:$0xf]
        %v856 = vld [vmem:[#allocation7 + $0x34] sm:$0xf]
        %v857 = vld [vmem:[#allocation7 + $0x38] sm:$0xf]
        %v858 = vld [vmem:[#allocation7 + $0x3c] sm:$0xf]
        %v859 = vld [vmem:[#allocation7 + $0x40] sm:$0xf]
        %v860 = vld [vmem:[#allocation7 + $0x44] sm:$0xf]
        %v861 = vld [vmem:[#allocation7 + $0x48] sm:$0xf]
        %v862 = vld [vmem:[#allocation7 + $0x4c] sm:$0xf]
        %v863 = vld [vmem:[#allocation7 + $0x50] sm:$0xf]
        %v864 = vld [vmem:[#allocation7 + $0x54] sm:$0xf]
        %v865 = vld [vmem:[#allocation7 + $0x58] sm:$0xf]
        %v866 = vld [vmem:[#allocation7 + $0x5c] sm:$0xf]
        %v867 = vld [vmem:[#allocation7 + $0x60] sm:$0xf]
        %v868 = vld [vmem:[#allocation7 + $0x64] sm:$0xf]
        %v869 = vld [vmem:[#allocation7 + $0x68] sm:$0xf]
        %v870 = vld [vmem:[#allocation7 + $0x6c] sm:$0xf]
        %v871 = vld [vmem:[#allocation7 + $0x70] sm:$0xf]
        %v872 = vld [vmem:[#allocation7 + $0x74] sm:$0xf]
        %v873 = vld [vmem:[#allocation7 + $0x78] sm:$0xf]
        %v874 = vld [vmem:[#allocation7 + $0x7c] sm:$0xf]
        %v875 = vld [vmem:[#allocation7 + $0x80] sm:$0xf]
        %v876 = vld [vmem:[#allocation7 + $0x84] sm:$0xf]
        %v877 = vld [vmem:[#allocation7 + $0x88] sm:$0xf]
        %v878 = vld [vmem:[#allocation7 + $0x8c] sm:$0xf]
        %v879 = vld [vmem:[#allocation7 + $0x90] sm:$0xf]
        %v880 = vld [vmem:[#allocation7 + $0x94] sm:$0xf]
        %v881 = vld [vmem:[#allocation7 + $0x98] sm:$0xf]
        %v882 = vld [vmem:[#allocation7 + $0x9c] sm:$0xf]
        %v883 = vld [vmem:[#allocation7 + $0xa0] sm:$0xf]
        %v884 = vld [vmem:[#allocation7 + $0xa4] sm:$0xf]
        %v885 = vld [vmem:[#allocation7 + $0xa8] sm:$0xf]
        %v886 = vld [vmem:[#allocation7 + $0xac] sm:$0xf]
        %v887 = vld [vmem:[#allocation7 + $0xb0] sm:$0xf]
        %v888 = vld [vmem:[#allocation7 + $0xb4] sm:$0xf]
        %v889 = vld [vmem:[#allocation7 + $0xb8] sm:$0xf]
        %v890 = vld [vmem:[#allocation7 + $0xbc] sm:$0xf]
        %v891 = vld [vmem:[#allocation7 + $0xc0] sm:$0xf]
        %v892 = vld [vmem:[#allocation7 + $0xc4] sm:$0xf]
        %v893 = vld [vmem:[#allocation7 + $0xc8] sm:$0xf]
        %v894 = vld [vmem:[#allocation7 + $0xcc] sm:$0xf]
        %v895 = vld [vmem:[#allocation7 + $0xd0] sm:$0xf]
        %v896 = vld [vmem:[#allocation7 + $0xd4] sm:$0xf]
        %v897 = vld [vmem:[#allocation7 + $0xd8] sm:$0xf]
        %v898 = vld [vmem:[#allocation7 + $0xdc] sm:$0xf]
        %v899 = vld [vmem:[#allocation7 + $0xe0] sm:$0xf]
        %v900 = vld [vmem:[#allocation7 + $0xe4] sm:$0xf]
        %v901 = vld [vmem:[#allocation7 + $0xe8] sm:$0xf]
        %v902 = vld [vmem:[#allocation7 + $0xec] sm:$0xf]
        %v903 = vld [vmem:[#allocation7 + $0xf0] sm:$0xf]
        %v904 = vld [vmem:[#allocation7 + $0xf4] sm:$0xf]
        %v905 = vld [vmem:[#allocation7 + $0xf8] sm:$0xf]
        %v906 = vld [vmem:[#allocation7 + $0xfc] sm:$0xf]
        %v907 = vld [vmem:[#allocation7 + $0x100] sm:$0xf]
        %v908 = vld [vmem:[#allocation7 + $0x104] sm:$0xf]
        %v909 = vld [vmem:[#allocation7 + $0x108] sm:$0xf]
        %v910 = vld [vmem:[#allocation7 + $0x10c] sm:$0xf]
        %v911 = vld [vmem:[#allocation7 + $0x110] sm:$0xf]
        %v912 = vld [vmem:[#allocation7 + $0x114] sm:$0xf]
        %v913 = vld [vmem:[#allocation7 + $0x118] sm:$0xf]
        %v914 = vld [vmem:[#allocation7 + $0x11c] sm:$0xf]
        %v915 = vld [vmem:[#allocation7 + $0x120] sm:$0xf]
        %v916 = vld [vmem:[#allocation7 + $0x124] sm:$0xf]
        %v917 = vld [vmem:[#allocation7 + $0x128] sm:$0xf]
        %v918 = vld [vmem:[#allocation7 + $0x12c] sm:$0xf]
        %v919 = vld [vmem:[#allocation7 + $0x130] sm:$0xf]
        %v920 = vld [vmem:[#allocation7 + $0x134] sm:$0xf]
        %v921 = vld [vmem:[#allocation7 + $0x138] sm:$0xf]
        %v922 = vld [vmem:[#allocation7 + $0x13c] sm:$0xf]
        %v923 = vld [vmem:[#allocation7 + $0x140] sm:$0xf]
        %v924 = vld [vmem:[#allocation7 + $0x144] sm:$0xf]
        %v925 = vld [vmem:[#allocation7 + $0x148] sm:$0xf]
        %v926 = vld [vmem:[#allocation7 + $0x14c] sm:$0xf]
        %v927 = vld [vmem:[#allocation7 + $0x150] sm:$0xf]
        %v928 = vld [vmem:[#allocation7 + $0x154] sm:$0xf]
        %v929 = vld [vmem:[#allocation7 + $0x158] sm:$0xf]
        %v930 = vld [vmem:[#allocation7 + $0x15c] sm:$0xf]
        %v931 = vld [vmem:[#allocation7 + $0x160] sm:$0xf]
        %v932 = vld [vmem:[#allocation7 + $0x164] sm:$0xf]
        %v933 = vld [vmem:[#allocation7 + $0x168] sm:$0xf]
        %v934 = vld [vmem:[#allocation7 + $0x16c] sm:$0xf]
        %v935 = vld [vmem:[#allocation7 + $0x170] sm:$0xf]
        %v936 = vld [vmem:[#allocation7 + $0x174] sm:$0xf]
        %v937 = vld [vmem:[#allocation7 + $0x178] sm:$0xf]
        %v938 = vld [vmem:[#allocation7 + $0x17c] sm:$0xf]
        %v939 = vld [vmem:[#allocation7 + $0x180] sm:$0xf]
        %v940 = vld [vmem:[#allocation7 + $0x184] sm:$0xf]
        %v941 = vld [vmem:[#allocation7 + $0x188] sm:$0xf]
        %v942 = vld [vmem:[#allocation7 + $0x18c] sm:$0xf]
        %v943 = vld [vmem:[#allocation7 + $0x190] sm:$0xf]
        %v944 = vld [vmem:[#allocation7 + $0x194] sm:$0xf]
        %v945 = vld [vmem:[#allocation7 + $0x198] sm:$0xf]
        %v946 = vld [vmem:[#allocation7 + $0x19c] sm:$0xf]
        %v947 = vld [vmem:[#allocation7 + $0x1a0] sm:$0xf]
        %v948 = vld [vmem:[#allocation7 + $0x1a4] sm:$0xf]
        %v949 = vld [vmem:[#allocation7 + $0x1a8] sm:$0xf]
        %v950 = vld [vmem:[#allocation7 + $0x1ac] sm:$0xf]
        %v951 = vld [vmem:[#allocation7 + $0x1b0] sm:$0xf]
        %v952 = vld [vmem:[#allocation7 + $0x1b4] sm:$0xf]
        %v953 = vld [vmem:[#allocation7 + $0x1b8] sm:$0xf]
        %v954 = vld [vmem:[#allocation7 + $0x1bc] sm:$0xf]
        %v955 = vld [vmem:[#allocation7 + $0x1c0] sm:$0xf]
        %v956 = vld [vmem:[#allocation7 + $0x1c4] sm:$0xf]
        %v957 = vld [vmem:[#allocation7 + $0x1c8] sm:$0xf]
        %v958 = vld [vmem:[#allocation7 + $0x1cc] sm:$0xf]
        %v959 = vld [vmem:[#allocation7 + $0x1d0] sm:$0xf]
        %v960 = vld [vmem:[#allocation7 + $0x1d4] sm:$0xf]
        %v961 = vld [vmem:[#allocation7 + $0x1d8] sm:$0xf]
        %v962 = vld [vmem:[#allocation7 + $0x1dc] sm:$0xf]
        %v963 = vld [vmem:[#allocation7 + $0x1e0] sm:$0xf]
        %v964 = vld [vmem:[#allocation7 + $0x1e4] sm:$0xf]
        %v965 = vld [vmem:[#allocation7 + $0x1e8] sm:$0xf]
        %v966 = vld [vmem:[#allocation7 + $0x1ec] sm:$0xf]
        %v967 = vld [vmem:[#allocation7 + $0x1f0] sm:$0xf]
        %v968 = vld [vmem:[#allocation7 + $0x1f4] sm:$0xf]
        %v969 = vld [vmem:[#allocation7 + $0x1f8] sm:$0xf]
        %v970 = vld [vmem:[#allocation7 + $0x1fc] sm:$0xf]
        %v979 = vunpack.c.l.b16 %v843
        %v980 = vunpack.c.l.b16 %v844
        %v981 = vunpack.c.l.b16 %v845
        %v982 = vunpack.c.l.b16 %v846
        %v983 = vunpack.c.l.b16 %v847
        %v984 = vunpack.c.l.b16 %v848
        %v985 = vunpack.c.l.b16 %v849
        %v986 = vunpack.c.l.b16 %v850
        %v987 = vpack.c.b16 %v980, %v979
        %v988 = vpack.c.b16 %v982, %v981
        %v989 = vpack.c.b16 %v984, %v983
        %v990 = vpack.c.b16 %v986, %v985
        %vm995 = vcmask 523264
        %v997 = vsel %vm995, %v827, 0
        %999 = vmatprep.subr.bf16.mxu0 0
        %1000 = vmatpush1.bf16.msra.mxu0 %v987
        %1001 = vmatprep.subr.bf16.mxu0 0
        %1002 = vmatpush1.bf16.msra.mxu0 %v988
        %1003 = vmatprep.subr.bf16.mxu0 0
        %1004 = vmatpush1.bf16.msra.mxu0 %v989
        %1005 = vmatprep.subr.bf16.mxu0 0
        %1006 = vmatpush1.bf16.msra.mxu0 %v990
        %1007 = vmatprep.subr.bf16.mxu0 0
        %1008 = vmatpush1.bf16.msra.mxu0 0
        %1009 = vmatprep.subr.bf16.mxu0 0
        %1010 = vmatpush1.bf16.msra.mxu0 0
        %1011 = vmatprep.subr.bf16.mxu0 0
        %1012 = vmatpush1.bf16.msra.mxu0 0
        %1013 = vmatprep.subr.bf16.mxu0 0
        %1014 = vmatpush1.bf16.msra.mxu0 0
        %1015 = vmatprep.subr.bf16.mxu0 0
        %1016 = vmatpush1.bf16.msra.mxu0 0
        %1017 = vmatprep.subr.bf16.mxu0 0
        %1018 = vmatpush1.bf16.msra.mxu0 0
        %1019 = vmatprep.subr.bf16.mxu0 0
        %1020 = vmatpush1.bf16.msra.mxu0 0
        %1021 = vmatprep.subr.bf16.mxu0 0
        %1022 = vmatpush1.bf16.msra.mxu0 0
        %1023 = vmatprep.subr.bf16.mxu0 0
        %1024 = vmatpush1.bf16.msra.mxu0 0
        %1025 = vmatprep.subr.bf16.mxu0 0
        %1026 = vmatpush1.bf16.msra.mxu0 0
        %1027 = vmatprep.subr.bf16.mxu0 0
        %1028 = vmatpush1.bf16.msra.mxu0 0
        %1029 = vmatprep.subr.bf16.mxu0 0
        %1030 = vmatpush1.bf16.msra.mxu0 0
        %1031 = vmatprep.mubr.bf16.mxu0 0
        %1032 = vmatmul.mubr.bf16.gmra.mrb[0].mxu0 %v997
        %v1033 = vpop.f32.mrb[0].mxu0
        %v1034 = vadd.f32 0.0, %v1033
        %v1035 = vpop.f32.mrb[0].mxu0
        %v1036 = vpop.f32.mrb[0].mxu0
        %v1037 = vpop.f32.mrb[0].mxu0
        %1038 = vdwg.mxu0
        %v1047 = vunpack.c.l.b16 %v851
        %v1048 = vunpack.c.l.b16 %v852
        %v1049 = vunpack.c.l.b16 %v853
        %v1050 = vunpack.c.l.b16 %v854
        %v1051 = vunpack.c.l.b16 %v855
        %v1052 = vunpack.c.l.b16 %v856
        %v1053 = vunpack.c.l.b16 %v857
        %v1054 = vunpack.c.l.b16 %v858
        %v1055 = vpack.c.b16 %v1048, %v1047
        %v1056 = vpack.c.b16 %v1050, %v1049
        %v1057 = vpack.c.b16 %v1052, %v1051
        %v1058 = vpack.c.b16 %v1054, %v1053
        %v1064 = vsel %vm995, %v828, 0
        %1066 = vmatprep.subr.bf16.mxu0 0
        %1067 = vmatpush1.bf16.msra.mxu0 %v1055
        %1068 = vmatprep.subr.bf16.mxu0 0
        %1069 = vmatpush1.bf16.msra.mxu0 %v1056
        %1070 = vmatprep.subr.bf16.mxu0 0
        %1071 = vmatpush1.bf16.msra.mxu0 %v1057
        %1072 = vmatprep.subr.bf16.mxu0 0
        %1073 = vmatpush1.bf16.msra.mxu0 %v1058
        %1074 = vmatprep.subr.bf16.mxu0 0
        %1075 = vmatpush1.bf16.msra.mxu0 0
        %1076 = vmatprep.subr.bf16.mxu0 0
        %1077 = vmatpush1.bf16.msra.mxu0 0
        %1078 = vmatprep.subr.bf16.mxu0 0
        %1079 = vmatpush1.bf16.msra.mxu0 0
        %1080 = vmatprep.subr.bf16.mxu0 0
        %1081 = vmatpush1.bf16.msra.mxu0 0
        %1082 = vmatprep.subr.bf16.mxu0 0
        %1083 = vmatpush1.bf16.msra.mxu0 0
        %1084 = vmatprep.subr.bf16.mxu0 0
        %1085 = vmatpush1.bf16.msra.mxu0 0
        %1086 = vmatprep.subr.bf16.mxu0 0
        %1087 = vmatpush1.bf16.msra.mxu0 0
        %1088 = vmatprep.subr.bf16.mxu0 0
        %1089 = vmatpush1.bf16.msra.mxu0 0
        %1090 = vmatprep.subr.bf16.mxu0 0
        %1091 = vmatpush1.bf16.msra.mxu0 0
        %1092 = vmatprep.subr.bf16.mxu0 0
        %1093 = vmatpush1.bf16.msra.mxu0 0
        %1094 = vmatprep.subr.bf16.mxu0 0
        %1095 = vmatpush1.bf16.msra.mxu0 0
        %1096 = vmatprep.subr.bf16.mxu0 0
        %1097 = vmatpush1.bf16.msra.mxu0 0
        %1098 = vmatprep.mubr.bf16.mxu0 0
        %1099 = vmatmul.mubr.bf16.gmra.mrb[0].mxu0 %v1064
        %v1100 = vpop.f32.mrb[0].mxu0
        %v1101 = vadd.f32 0.0, %v1100
        %v1102 = vpop.f32.mrb[0].mxu0
        %v1103 = vpop.f32.mrb[0].mxu0
        %v1104 = vpop.f32.mrb[0].mxu0
        %1105 = vdwg.mxu0
        %v1114 = vunpack.c.l.b16 %v859
        %v1115 = vunpack.c.l.b16 %v860
        %v1116 = vunpack.c.l.b16 %v861
        %v1117 = vunpack.c.l.b16 %v862
        %v1118 = vunpack.c.l.b16 %v863
        %v1119 = vunpack.c.l.b16 %v864
        %v1120 = vunpack.c.l.b16 %v865
        %v1121 = vunpack.c.l.b16 %v866
        %v1122 = vpack.c.b16 %v1115, %v1114
        %v1123 = vpack.c.b16 %v1117, %v1116
        %v1124 = vpack.c.b16 %v1119, %v1118
        %v1125 = vpack.c.b16 %v1121, %v1120
        %v1131 = vsel %vm995, %v829, 0
        %1133 = vmatprep.subr.bf16.mxu0 0
        %1134 = vmatpush1.bf16.msra.mxu0 %v1122
        %1135 = vmatprep.subr.bf16.mxu0 0
        %1136 = vmatpush1.bf16.msra.mxu0 %v1123
        %1137 = vmatprep.subr.bf16.mxu0 0
        %1138 = vmatpush1.bf16.msra.mxu0 %v1124
        %1139 = vmatprep.subr.bf16.mxu0 0
        %1140 = vmatpush1.bf16.msra.mxu0 %v1125
        %1141 = vmatprep.subr.bf16.mxu0 0
        %1142 = vmatpush1.bf16.msra.mxu0 0
        %1143 = vmatprep.subr.bf16.mxu0 0
        %1144 = vmatpush1.bf16.msra.mxu0 0
        %1145 = vmatprep.subr.bf16.mxu0 0
        %1146 = vmatpush1.bf16.msra.mxu0 0
        %1147 = vmatprep.subr.bf16.mxu0 0
        %1148 = vmatpush1.bf16.msra.mxu0 0
        %1149 = vmatprep.subr.bf16.mxu0 0
        %1150 = vmatpush1.bf16.msra.mxu0 0
        %1151 = vmatprep.subr.bf16.mxu0 0
        %1152 = vmatpush1.bf16.msra.mxu0 0
        %1153 = vmatprep.subr.bf16.mxu0 0
        %1154 = vmatpush1.bf16.msra.mxu0 0
        %1155 = vmatprep.subr.bf16.mxu0 0
        %1156 = vmatpush1.bf16.msra.mxu0 0
        %1157 = vmatprep.subr.bf16.mxu0 0
        %1158 = vmatpush1.bf16.msra.mxu0 0
        %1159 = vmatprep.subr.bf16.mxu0 0
        %1160 = vmatpush1.bf16.msra.mxu0 0
        %1161 = vmatprep.subr.bf16.mxu0 0
        %1162 = vmatpush1.bf16.msra.mxu0 0
        %1163 = vmatprep.subr.bf16.mxu0 0
        %1164 = vmatpush1.bf16.msra.mxu0 0
        %1165 = vmatprep.mubr.bf16.mxu0 0
        %1166 = vmatmul.mubr.bf16.gmra.mrb[0].mxu0 %v1131
        %v1167 = vpop.f32.mrb[0].mxu0
        %v1168 = vadd.f32 0.0, %v1167
        %v1169 = vpop.f32.mrb[0].mxu0
        %v1170 = vpop.f32.mrb[0].mxu0
        %v1171 = vpop.f32.mrb[0].mxu0
        %1172 = vdwg.mxu0
        %v1181 = vunpack.c.l.b16 %v867
        %v1182 = vunpack.c.l.b16 %v868
        %v1183 = vunpack.c.l.b16 %v869
        %v1184 = vunpack.c.l.b16 %v870
        %v1185 = vunpack.c.l.b16 %v871
        %v1186 = vunpack.c.l.b16 %v872
        %v1187 = vunpack.c.l.b16 %v873
        %v1188 = vunpack.c.l.b16 %v874
        %v1189 = vpack.c.b16 %v1182, %v1181
        %v1190 = vpack.c.b16 %v1184, %v1183
        %v1191 = vpack.c.b16 %v1186, %v1185
        %v1192 = vpack.c.b16 %v1188, %v1187
        %v1198 = vsel %vm995, %v830, 0
        %1200 = vmatprep.subr.bf16.mxu0 0
        %1201 = vmatpush1.bf16.msra.mxu0 %v1189
        %1202 = vmatprep.subr.bf16.mxu0 0
        %1203 = vmatpush1.bf16.msra.mxu0 %v1190
        %1204 = vmatprep.subr.bf16.mxu0 0
        %1205 = vmatpush1.bf16.msra.mxu0 %v1191
        %1206 = vmatprep.subr.bf16.mxu0 0
        %1207 = vmatpush1.bf16.msra.mxu0 %v1192
        %1208 = vmatprep.subr.bf16.mxu0 0
        %1209 = vmatpush1.bf16.msra.mxu0 0
        %1210 = vmatprep.subr.bf16.mxu0 0
        %1211 = vmatpush1.bf16.msra.mxu0 0
        %1212 = vmatprep.subr.bf16.mxu0 0
        %1213 = vmatpush1.bf16.msra.mxu0 0
        %1214 = vmatprep.subr.bf16.mxu0 0
        %1215 = vmatpush1.bf16.msra.mxu0 0
        %1216 = vmatprep.subr.bf16.mxu0 0
        %1217 = vmatpush1.bf16.msra.mxu0 0
        %1218 = vmatprep.subr.bf16.mxu0 0
        %1219 = vmatpush1.bf16.msra.mxu0 0
        %1220 = vmatprep.subr.bf16.mxu0 0
        %1221 = vmatpush1.bf16.msra.mxu0 0
        %1222 = vmatprep.subr.bf16.mxu0 0
        %1223 = vmatpush1.bf16.msra.mxu0 0
        %1224 = vmatprep.subr.bf16.mxu0 0
        %1225 = vmatpush1.bf16.msra.mxu0 0
        %1226 = vmatprep.subr.bf16.mxu0 0
        %1227 = vmatpush1.bf16.msra.mxu0 0
        %1228 = vmatprep.subr.bf16.mxu0 0
        %1229 = vmatpush1.bf16.msra.mxu0 0
        %1230 = vmatprep.subr.bf16.mxu0 0
        %1231 = vmatpush1.bf16.msra.mxu0 0
        %1232 = vmatprep.mubr.bf16.mxu0 0
        %1233 = vmatmul.mubr.bf16.gmra.mrb[0].mxu0 %v1198
        %v1234 = vpop.f32.mrb[0].mxu0
        %v1235 = vadd.f32 0.0, %v1234
        %v1236 = vpop.f32.mrb[0].mxu0
        %v1237 = vpop.f32.mrb[0].mxu0
        %v1238 = vpop.f32.mrb[0].mxu0
        %1239 = vdwg.mxu0
        %v1248 = vunpack.c.l.b16 %v875
        %v1249 = vunpack.c.l.b16 %v876
        %v1250 = vunpack.c.l.b16 %v877
        %v1251 = vunpack.c.l.b16 %v878
        %v1252 = vunpack.c.l.b16 %v879
        %v1253 = vunpack.c.l.b16 %v880
        %v1254 = vunpack.c.l.b16 %v881
        %v1255 = vunpack.c.l.b16 %v882
        %v1256 = vpack.c.b16 %v1249, %v1248
        %v1257 = vpack.c.b16 %v1251, %v1250
        %v1258 = vpack.c.b16 %v1253, %v1252
        %v1259 = vpack.c.b16 %v1255, %v1254
        %v1265 = vsel %vm995, %v831, 0
        %1267 = vmatprep.subr.bf16.mxu0 0
        %1268 = vmatpush1.bf16.msra.mxu0 %v1256
        %1269 = vmatprep.subr.bf16.mxu0 0
        %1270 = vmatpush1.bf16.msra.mxu0 %v1257
        %1271 = vmatprep.subr.bf16.mxu0 0
        %1272 = vmatpush1.bf16.msra.mxu0 %v1258
        %1273 = vmatprep.subr.bf16.mxu0 0
        %1274 = vmatpush1.bf16.msra.mxu0 %v1259
        %1275 = vmatprep.subr.bf16.mxu0 0
        %1276 = vmatpush1.bf16.msra.mxu0 0
        %1277 = vmatprep.subr.bf16.mxu0 0
        %1278 = vmatpush1.bf16.msra.mxu0 0
        %1279 = vmatprep.subr.bf16.mxu0 0
        %1280 = vmatpush1.bf16.msra.mxu0 0
        %1281 = vmatprep.subr.bf16.mxu0 0
        %1282 = vmatpush1.bf16.msra.mxu0 0
        %1283 = vmatprep.subr.bf16.mxu0 0
        %1284 = vmatpush1.bf16.msra.mxu0 0
        %1285 = vmatprep.subr.bf16.mxu0 0
        %1286 = vmatpush1.bf16.msra.mxu0 0
        %1287 = vmatprep.subr.bf16.mxu0 0
        %1288 = vmatpush1.bf16.msra.mxu0 0
        %1289 = vmatprep.subr.bf16.mxu0 0
        %1290 = vmatpush1.bf16.msra.mxu0 0
        %1291 = vmatprep.subr.bf16.mxu0 0
        %1292 = vmatpush1.bf16.msra.mxu0 0
        %1293 = vmatprep.subr.bf16.mxu0 0
        %1294 = vmatpush1.bf16.msra.mxu0 0
        %1295 = vmatprep.subr.bf16.mxu0 0
        %1296 = vmatpush1.bf16.msra.mxu0 0
        %1297 = vmatprep.subr.bf16.mxu0 0
        %1298 = vmatpush1.bf16.msra.mxu0 0
        %1299 = vmatprep.mubr.bf16.mxu0 0
        %1300 = vmatmul.mubr.bf16.gmra.mrb[0].mxu0 %v1265
        %v1301 = vpop.f32.mrb[0].mxu0
        %v1302 = vadd.f32 0.0, %v1301
        %v1303 = vpop.f32.mrb[0].mxu0
        %v1304 = vpop.f32.mrb[0].mxu0
        %v1305 = vpop.f32.mrb[0].mxu0
        %1306 = vdwg.mxu0
        %v1315 = vunpack.c.l.b16 %v883
        %v1316 = vunpack.c.l.b16 %v884
        %v1317 = vunpack.c.l.b16 %v885
        %v1318 = vunpack.c.l.b16 %v886
        %v1319 = vunpack.c.l.b16 %v887
        %v1320 = vunpack.c.l.b16 %v888
        %v1321 = vunpack.c.l.b16 %v889
        %v1322 = vunpack.c.l.b16 %v890
        %v1323 = vpack.c.b16 %v1316, %v1315
        %v1324 = vpack.c.b16 %v1318, %v1317
        %v1325 = vpack.c.b16 %v1320, %v1319
        %v1326 = vpack.c.b16 %v1322, %v1321
        %v1332 = vsel %vm995, %v832, 0
        %1334 = vmatprep.subr.bf16.mxu0 0
        %1335 = vmatpush1.bf16.msra.mxu0 %v1323
        %1336 = vmatprep.subr.bf16.mxu0 0
        %1337 = vmatpush1.bf16.msra.mxu0 %v1324
        %1338 = vmatprep.subr.bf16.mxu0 0
        %1339 = vmatpush1.bf16.msra.mxu0 %v1325
        %1340 = vmatprep.subr.bf16.mxu0 0
        %1341 = vmatpush1.bf16.msra.mxu0 %v1326
        %1342 = vmatprep.subr.bf16.mxu0 0
        %1343 = vmatpush1.bf16.msra.mxu0 0
        %1344 = vmatprep.subr.bf16.mxu0 0
        %1345 = vmatpush1.bf16.msra.mxu0 0
        %1346 = vmatprep.subr.bf16.mxu0 0
        %1347 = vmatpush1.bf16.msra.mxu0 0
        %1348 = vmatprep.subr.bf16.mxu0 0
        %1349 = vmatpush1.bf16.msra.mxu0 0
        %1350 = vmatprep.subr.bf16.mxu0 0
        %1351 = vmatpush1.bf16.msra.mxu0 0
        %1352 = vmatprep.subr.bf16.mxu0 0
        %1353 = vmatpush1.bf16.msra.mxu0 0
        %1354 = vmatprep.subr.bf16.mxu0 0
        %1355 = vmatpush1.bf16.msra.mxu0 0
        %1356 = vmatprep.subr.bf16.mxu0 0
        %1357 = vmatpush1.bf16.msra.mxu0 0
        %1358 = vmatprep.subr.bf16.mxu0 0
        %1359 = vmatpush1.bf16.msra.mxu0 0
        %1360 = vmatprep.subr.bf16.mxu0 0
        %1361 = vmatpush1.bf16.msra.mxu0 0
        %1362 = vmatprep.subr.bf16.mxu0 0
        %1363 = vmatpush1.bf16.msra.mxu0 0
        %1364 = vmatprep.subr.bf16.mxu0 0
        %1365 = vmatpush1.bf16.msra.mxu0 0
        %1366 = vmatprep.mubr.bf16.mxu0 0
        %1367 = vmatmul.mubr.bf16.gmra.mrb[0].mxu0 %v1332
        %v1368 = vpop.f32.mrb[0].mxu0
        %v1369 = vadd.f32 0.0, %v1368
        %v1370 = vpop.f32.mrb[0].mxu0
        %v1371 = vpop.f32.mrb[0].mxu0
        %v1372 = vpop.f32.mrb[0].mxu0
        %1373 = vdwg.mxu0
        %v1382 = vunpack.c.l.b16 %v891
        %v1383 = vunpack.c.l.b16 %v892
        %v1384 = vunpack.c.l.b16 %v893
        %v1385 = vunpack.c.l.b16 %v894
        %v1386 = vunpack.c.l.b16 %v895
        %v1387 = vunpack.c.l.b16 %v896
        %v1388 = vunpack.c.l.b16 %v897
        %v1389 = vunpack.c.l.b16 %v898
        %v1390 = vpack.c.b16 %v1383, %v1382
        %v1391 = vpack.c.b16 %v1385, %v1384
        %v1392 = vpack.c.b16 %v1387, %v1386
        %v1393 = vpack.c.b16 %v1389, %v1388
        %v1399 = vsel %vm995, %v833, 0
        %1401 = vmatprep.subr.bf16.mxu0 0
        %1402 = vmatpush1.bf16.msra.mxu0 %v1390
        %1403 = vmatprep.subr.bf16.mxu0 0
        %1404 = vmatpush1.bf16.msra.mxu0 %v1391
        %1405 = vmatprep.subr.bf16.mxu0 0
        %1406 = vmatpush1.bf16.msra.mxu0 %v1392
        %1407 = vmatprep.subr.bf16.mxu0 0
        %1408 = vmatpush1.bf16.msra.mxu0 %v1393
        %1409 = vmatprep.subr.bf16.mxu0 0
        %1410 = vmatpush1.bf16.msra.mxu0 0
        %1411 = vmatprep.subr.bf16.mxu0 0
        %1412 = vmatpush1.bf16.msra.mxu0 0
        %1413 = vmatprep.subr.bf16.mxu0 0
        %1414 = vmatpush1.bf16.msra.mxu0 0
        %1415 = vmatprep.subr.bf16.mxu0 0
        %1416 = vmatpush1.bf16.msra.mxu0 0
        %1417 = vmatprep.subr.bf16.mxu0 0
        %1418 = vmatpush1.bf16.msra.mxu0 0
        %1419 = vmatprep.subr.bf16.mxu0 0
        %1420 = vmatpush1.bf16.msra.mxu0 0
        %1421 = vmatprep.subr.bf16.mxu0 0
        %1422 = vmatpush1.bf16.msra.mxu0 0
        %1423 = vmatprep.subr.bf16.mxu0 0
        %1424 = vmatpush1.bf16.msra.mxu0 0
        %1425 = vmatprep.subr.bf16.mxu0 0
        %1426 = vmatpush1.bf16.msra.mxu0 0
        %1427 = vmatprep.subr.bf16.mxu0 0
        %1428 = vmatpush1.bf16.msra.mxu0 0
        %1429 = vmatprep.subr.bf16.mxu0 0
        %1430 = vmatpush1.bf16.msra.mxu0 0
        %1431 = vmatprep.subr.bf16.mxu0 0
        %1432 = vmatpush1.bf16.msra.mxu0 0
        %1433 = vmatprep.mubr.bf16.mxu0 0
        %1434 = vmatmul.mubr.bf16.gmra.mrb[0].mxu0 %v1399
        %v1435 = vpop.f32.mrb[0].mxu0
        %v1436 = vadd.f32 0.0, %v1435
        %v1437 = vpop.f32.mrb[0].mxu0
        %v1438 = vpop.f32.mrb[0].mxu0
        %v1439 = vpop.f32.mrb[0].mxu0
        %1440 = vdwg.mxu0
        %v1449 = vunpack.c.l.b16 %v899
        %v1450 = vunpack.c.l.b16 %v900
        %v1451 = vunpack.c.l.b16 %v901
        %v1452 = vunpack.c.l.b16 %v902
        %v1453 = vunpack.c.l.b16 %v903
        %v1454 = vunpack.c.l.b16 %v904
        %v1455 = vunpack.c.l.b16 %v905
        %v1456 = vunpack.c.l.b16 %v906
        %v1457 = vpack.c.b16 %v1450, %v1449
        %v1458 = vpack.c.b16 %v1452, %v1451
        %v1459 = vpack.c.b16 %v1454, %v1453
        %v1460 = vpack.c.b16 %v1456, %v1455
        %v1466 = vsel %vm995, %v834, 0
        %1468 = vmatprep.subr.bf16.mxu0 0
        %1469 = vmatpush1.bf16.msra.mxu0 %v1457
        %1470 = vmatprep.subr.bf16.mxu0 0
        %1471 = vmatpush1.bf16.msra.mxu0 %v1458
        %1472 = vmatprep.subr.bf16.mxu0 0
        %1473 = vmatpush1.bf16.msra.mxu0 %v1459
        %1474 = vmatprep.subr.bf16.mxu0 0
        %1475 = vmatpush1.bf16.msra.mxu0 %v1460
        %1476 = vmatprep.subr.bf16.mxu0 0
        %1477 = vmatpush1.bf16.msra.mxu0 0
        %1478 = vmatprep.subr.bf16.mxu0 0
        %1479 = vmatpush1.bf16.msra.mxu0 0
        %1480 = vmatprep.subr.bf16.mxu0 0
        %1481 = vmatpush1.bf16.msra.mxu0 0
        %1482 = vmatprep.subr.bf16.mxu0 0
        %1483 = vmatpush1.bf16.msra.mxu0 0
        %1484 = vmatprep.subr.bf16.mxu0 0
        %1485 = vmatpush1.bf16.msra.mxu0 0
        %1486 = vmatprep.subr.bf16.mxu0 0
        %1487 = vmatpush1.bf16.msra.mxu0 0
        %1488 = vmatprep.subr.bf16.mxu0 0
        %1489 = vmatpush1.bf16.msra.mxu0 0
        %1490 = vmatprep.subr.bf16.mxu0 0
        %1491 = vmatpush1.bf16.msra.mxu0 0
        %1492 = vmatprep.subr.bf16.mxu0 0
        %1493 = vmatpush1.bf16.msra.mxu0 0
        %1494 = vmatprep.subr.bf16.mxu0 0
        %1495 = vmatpush1.bf16.msra.mxu0 0
        %1496 = vmatprep.subr.bf16.mxu0 0
        %1497 = vmatpush1.bf16.msra.mxu0 0
        %1498 = vmatprep.subr.bf16.mxu0 0
        %1499 = vmatpush1.bf16.msra.mxu0 0
        %1500 = vmatprep.mubr.bf16.mxu0 0
        %1501 = vmatmul.mubr.bf16.gmra.mrb[0].mxu0 %v1466
        %v1502 = vpop.f32.mrb[0].mxu0
        %v1503 = vadd.f32 0.0, %v1502
        %v1504 = vpop.f32.mrb[0].mxu0
        %v1505 = vpop.f32.mrb[0].mxu0
        %v1506 = vpop.f32.mrb[0].mxu0
        %1507 = vdwg.mxu0
        %v1516 = vunpack.c.l.b16 %v907
        %v1517 = vunpack.c.l.b16 %v908
        %v1518 = vunpack.c.l.b16 %v909
        %v1519 = vunpack.c.l.b16 %v910
        %v1520 = vunpack.c.l.b16 %v911
        %v1521 = vunpack.c.l.b16 %v912
        %v1522 = vunpack.c.l.b16 %v913
        %v1523 = vunpack.c.l.b16 %v914
        %v1524 = vpack.c.b16 %v1517, %v1516
        %v1525 = vpack.c.b16 %v1519, %v1518
        %v1526 = vpack.c.b16 %v1521, %v1520
        %v1527 = vpack.c.b16 %v1523, %v1522
        %v1533 = vsel %vm995, %v835, 0
        %1535 = vmatprep.subr.bf16.mxu0 0
        %1536 = vmatpush1.bf16.msra.mxu0 %v1524
        %1537 = vmatprep.subr.bf16.mxu0 0
        %1538 = vmatpush1.bf16.msra.mxu0 %v1525
        %1539 = vmatprep.subr.bf16.mxu0 0
        %1540 = vmatpush1.bf16.msra.mxu0 %v1526
        %1541 = vmatprep.subr.bf16.mxu0 0
        %1542 = vmatpush1.bf16.msra.mxu0 %v1527
        %1543 = vmatprep.subr.bf16.mxu0 0
        %1544 = vmatpush1.bf16.msra.mxu0 0
        %1545 = vmatprep.subr.bf16.mxu0 0
        %1546 = vmatpush1.bf16.msra.mxu0 0
        %1547 = vmatprep.subr.bf16.mxu0 0
        %1548 = vmatpush1.bf16.msra.mxu0 0
        %1549 = vmatprep.subr.bf16.mxu0 0
        %1550 = vmatpush1.bf16.msra.mxu0 0
        %1551 = vmatprep.subr.bf16.mxu0 0
        %1552 = vmatpush1.bf16.msra.mxu0 0
        %1553 = vmatprep.subr.bf16.mxu0 0
        %1554 = vmatpush1.bf16.msra.mxu0 0
        %1555 = vmatprep.subr.bf16.mxu0 0
        %1556 = vmatpush1.bf16.msra.mxu0 0
        %1557 = vmatprep.subr.bf16.mxu0 0
        %1558 = vmatpush1.bf16.msra.mxu0 0
        %1559 = vmatprep.subr.bf16.mxu0 0
        %1560 = vmatpush1.bf16.msra.mxu0 0
        %1561 = vmatprep.subr.bf16.mxu0 0
        %1562 = vmatpush1.bf16.msra.mxu0 0
        %1563 = vmatprep.subr.bf16.mxu0 0
        %1564 = vmatpush1.bf16.msra.mxu0 0
        %1565 = vmatprep.subr.bf16.mxu0 0
        %1566 = vmatpush1.bf16.msra.mxu0 0
        %1567 = vmatprep.mubr.bf16.mxu0 0
        %1568 = vmatmul.mubr.bf16.gmra.mrb[0].mxu0 %v1533
        %v1569 = vpop.f32.mrb[0].mxu0
        %v1570 = vadd.f32 0.0, %v1569
        %v1571 = vpop.f32.mrb[0].mxu0
        %v1572 = vpop.f32.mrb[0].mxu0
        %v1573 = vpop.f32.mrb[0].mxu0
        %1574 = vdwg.mxu0
        %v1583 = vunpack.c.l.b16 %v915
        %v1584 = vunpack.c.l.b16 %v916
        %v1585 = vunpack.c.l.b16 %v917
        %v1586 = vunpack.c.l.b16 %v918
        %v1587 = vunpack.c.l.b16 %v919
        %v1588 = vunpack.c.l.b16 %v920
        %v1589 = vunpack.c.l.b16 %v921
        %v1590 = vunpack.c.l.b16 %v922
        %v1591 = vpack.c.b16 %v1584, %v1583
        %v1592 = vpack.c.b16 %v1586, %v1585
        %v1593 = vpack.c.b16 %v1588, %v1587
        %v1594 = vpack.c.b16 %v1590, %v1589
        %v1600 = vsel %vm995, %v836, 0
        %1602 = vmatprep.subr.bf16.mxu0 0
        %1603 = vmatpush1.bf16.msra.mxu0 %v1591
        %1604 = vmatprep.subr.bf16.mxu0 0
        %1605 = vmatpush1.bf16.msra.mxu0 %v1592
        %1606 = vmatprep.subr.bf16.mxu0 0
        %1607 = vmatpush1.bf16.msra.mxu0 %v1593
        %1608 = vmatprep.subr.bf16.mxu0 0
        %1609 = vmatpush1.bf16.msra.mxu0 %v1594
        %1610 = vmatprep.subr.bf16.mxu0 0
        %1611 = vmatpush1.bf16.msra.mxu0 0
        %1612 = vmatprep.subr.bf16.mxu0 0
        %1613 = vmatpush1.bf16.msra.mxu0 0
        %1614 = vmatprep.subr.bf16.mxu0 0
        %1615 = vmatpush1.bf16.msra.mxu0 0
        %1616 = vmatprep.subr.bf16.mxu0 0
        %1617 = vmatpush1.bf16.msra.mxu0 0
        %1618 = vmatprep.subr.bf16.mxu0 0
        %1619 = vmatpush1.bf16.msra.mxu0 0
        %1620 = vmatprep.subr.bf16.mxu0 0
        %1621 = vmatpush1.bf16.msra.mxu0 0
        %1622 = vmatprep.subr.bf16.mxu0 0
        %1623 = vmatpush1.bf16.msra.mxu0 0
        %1624 = vmatprep.subr.bf16.mxu0 0
        %1625 = vmatpush1.bf16.msra.mxu0 0
        %1626 = vmatprep.subr.bf16.mxu0 0
        %1627 = vmatpush1.bf16.msra.mxu0 0
        %1628 = vmatprep.subr.bf16.mxu0 0
        %1629 = vmatpush1.bf16.msra.mxu0 0
        %1630 = vmatprep.subr.bf16.mxu0 0
        %1631 = vmatpush1.bf16.msra.mxu0 0
        %1632 = vmatprep.subr.bf16.mxu0 0
        %1633 = vmatpush1.bf16.msra.mxu0 0
        %1634 = vmatprep.mubr.bf16.mxu0 0
        %1635 = vmatmul.mubr.bf16.gmra.mrb[0].mxu0 %v1600
        %v1636 = vpop.f32.mrb[0].mxu0
        %v1637 = vadd.f32 0.0, %v1636
        %v1638 = vpop.f32.mrb[0].mxu0
        %v1639 = vpop.f32.mrb[0].mxu0
        %v1640 = vpop.f32.mrb[0].mxu0
        %1641 = vdwg.mxu0
        %v1650 = vunpack.c.l.b16 %v923
        %v1651 = vunpack.c.l.b16 %v924
        %v1652 = vunpack.c.l.b16 %v925
        %v1653 = vunpack.c.l.b16 %v926
        %v1654 = vunpack.c.l.b16 %v927
        %v1655 = vunpack.c.l.b16 %v928
        %v1656 = vunpack.c.l.b16 %v929
        %v1657 = vunpack.c.l.b16 %v930
        %v1658 = vpack.c.b16 %v1651, %v1650
        %v1659 = vpack.c.b16 %v1653, %v1652
        %v1660 = vpack.c.b16 %v1655, %v1654
        %v1661 = vpack.c.b16 %v1657, %v1656
        %v1667 = vsel %vm995, %v837, 0
        %1669 = vmatprep.subr.bf16.mxu0 0
        %1670 = vmatpush1.bf16.msra.mxu0 %v1658
        %1671 = vmatprep.subr.bf16.mxu0 0
        %1672 = vmatpush1.bf16.msra.mxu0 %v1659
        %1673 = vmatprep.subr.bf16.mxu0 0
        %1674 = vmatpush1.bf16.msra.mxu0 %v1660
        %1675 = vmatprep.subr.bf16.mxu0 0
        %1676 = vmatpush1.bf16.msra.mxu0 %v1661
        %1677 = vmatprep.subr.bf16.mxu0 0
        %1678 = vmatpush1.bf16.msra.mxu0 0
        %1679 = vmatprep.subr.bf16.mxu0 0
        %1680 = vmatpush1.bf16.msra.mxu0 0
        %1681 = vmatprep.subr.bf16.mxu0 0
        %1682 = vmatpush1.bf16.msra.mxu0 0
        %1683 = vmatprep.subr.bf16.mxu0 0
        %1684 = vmatpush1.bf16.msra.mxu0 0
        %1685 = vmatprep.subr.bf16.mxu0 0
        %1686 = vmatpush1.bf16.msra.mxu0 0
        %1687 = vmatprep.subr.bf16.mxu0 0
        %1688 = vmatpush1.bf16.msra.mxu0 0
        %1689 = vmatprep.subr.bf16.mxu0 0
        %1690 = vmatpush1.bf16.msra.mxu0 0
        %1691 = vmatprep.subr.bf16.mxu0 0
        %1692 = vmatpush1.bf16.msra.mxu0 0
        %1693 = vmatprep.subr.bf16.mxu0 0
        %1694 = vmatpush1.bf16.msra.mxu0 0
        %1695 = vmatprep.subr.bf16.mxu0 0
        %1696 = vmatpush1.bf16.msra.mxu0 0
        %1697 = vmatprep.subr.bf16.mxu0 0
        %1698 = vmatpush1.bf16.msra.mxu0 0
        %1699 = vmatprep.subr.bf16.mxu0 0
        %1700 = vmatpush1.bf16.msra.mxu0 0
        %1701 = vmatprep.mubr.bf16.mxu0 0
        %1702 = vmatmul.mubr.bf16.gmra.mrb[0].mxu0 %v1667
        %v1703 = vpop.f32.mrb[0].mxu0
        %v1704 = vadd.f32 0.0, %v1703
        %v1705 = vpop.f32.mrb[0].mxu0
        %v1706 = vpop.f32.mrb[0].mxu0
        %v1707 = vpop.f32.mrb[0].mxu0
        %1708 = vdwg.mxu0
        %v1717 = vunpack.c.l.b16 %v931
        %v1718 = vunpack.c.l.b16 %v932
        %v1719 = vunpack.c.l.b16 %v933
        %v1720 = vunpack.c.l.b16 %v934
        %v1721 = vunpack.c.l.b16 %v935
        %v1722 = vunpack.c.l.b16 %v936
        %v1723 = vunpack.c.l.b16 %v937
        %v1724 = vunpack.c.l.b16 %v938
        %v1725 = vpack.c.b16 %v1718, %v1717
        %v1726 = vpack.c.b16 %v1720, %v1719
        %v1727 = vpack.c.b16 %v1722, %v1721
        %v1728 = vpack.c.b16 %v1724, %v1723
        %v1734 = vsel %vm995, %v838, 0
        %1736 = vmatprep.subr.bf16.mxu0 0
        %1737 = vmatpush1.bf16.msra.mxu0 %v1725
        %1738 = vmatprep.subr.bf16.mxu0 0
        %1739 = vmatpush1.bf16.msra.mxu0 %v1726
        %1740 = vmatprep.subr.bf16.mxu0 0
        %1741 = vmatpush1.bf16.msra.mxu0 %v1727
        %1742 = vmatprep.subr.bf16.mxu0 0
        %1743 = vmatpush1.bf16.msra.mxu0 %v1728
        %1744 = vmatprep.subr.bf16.mxu0 0
        %1745 = vmatpush1.bf16.msra.mxu0 0
        %1746 = vmatprep.subr.bf16.mxu0 0
        %1747 = vmatpush1.bf16.msra.mxu0 0
        %1748 = vmatprep.subr.bf16.mxu0 0
        %1749 = vmatpush1.bf16.msra.mxu0 0
        %1750 = vmatprep.subr.bf16.mxu0 0
        %1751 = vmatpush1.bf16.msra.mxu0 0
        %1752 = vmatprep.subr.bf16.mxu0 0
        %1753 = vmatpush1.bf16.msra.mxu0 0
        %1754 = vmatprep.subr.bf16.mxu0 0
        %1755 = vmatpush1.bf16.msra.mxu0 0
        %1756 = vmatprep.subr.bf16.mxu0 0
        %1757 = vmatpush1.bf16.msra.mxu0 0
        %1758 = vmatprep.subr.bf16.mxu0 0
        %1759 = vmatpush1.bf16.msra.mxu0 0
        %1760 = vmatprep.subr.bf16.mxu0 0
        %1761 = vmatpush1.bf16.msra.mxu0 0
        %1762 = vmatprep.subr.bf16.mxu0 0
        %1763 = vmatpush1.bf16.msra.mxu0 0
        %1764 = vmatprep.subr.bf16.mxu0 0
        %1765 = vmatpush1.bf16.msra.mxu0 0
        %1766 = vmatprep.subr.bf16.mxu0 0
        %1767 = vmatpush1.bf16.msra.mxu0 0
        %1768 = vmatprep.mubr.bf16.mxu0 0
        %1769 = vmatmul.mubr.bf16.gmra.mrb[0].mxu0 %v1734
        %v1770 = vpop.f32.mrb[0].mxu0
        %v1771 = vadd.f32 0.0, %v1770
        %v1772 = vpop.f32.mrb[0].mxu0
        %v1773 = vpop.f32.mrb[0].mxu0
        %v1774 = vpop.f32.mrb[0].mxu0
        %1775 = vdwg.mxu0
        %v1784 = vunpack.c.l.b16 %v939
        %v1785 = vunpack.c.l.b16 %v940
        %v1786 = vunpack.c.l.b16 %v941
        %v1787 = vunpack.c.l.b16 %v942
        %v1788 = vunpack.c.l.b16 %v943
        %v1789 = vunpack.c.l.b16 %v944
        %v1790 = vunpack.c.l.b16 %v945
        %v1791 = vunpack.c.l.b16 %v946
        %v1792 = vpack.c.b16 %v1785, %v1784
        %v1793 = vpack.c.b16 %v1787, %v1786
        %v1794 = vpack.c.b16 %v1789, %v1788
        %v1795 = vpack.c.b16 %v1791, %v1790
        %v1801 = vsel %vm995, %v839, 0
        %1803 = vmatprep.subr.bf16.mxu0 0
        %1804 = vmatpush1.bf16.msra.mxu0 %v1792
        %1805 = vmatprep.subr.bf16.mxu0 0
        %1806 = vmatpush1.bf16.msra.mxu0 %v1793
        %1807 = vmatprep.subr.bf16.mxu0 0
        %1808 = vmatpush1.bf16.msra.mxu0 %v1794
        %1809 = vmatprep.subr.bf16.mxu0 0
        %1810 = vmatpush1.bf16.msra.mxu0 %v1795
        %1811 = vmatprep.subr.bf16.mxu0 0
        %1812 = vmatpush1.bf16.msra.mxu0 0
        %1813 = vmatprep.subr.bf16.mxu0 0
        %1814 = vmatpush1.bf16.msra.mxu0 0
        %1815 = vmatprep.subr.bf16.mxu0 0
        %1816 = vmatpush1.bf16.msra.mxu0 0
        %1817 = vmatprep.subr.bf16.mxu0 0
        %1818 = vmatpush1.bf16.msra.mxu0 0
        %1819 = vmatprep.subr.bf16.mxu0 0
        %1820 = vmatpush1.bf16.msra.mxu0 0
        %1821 = vmatprep.subr.bf16.mxu0 0
        %1822 = vmatpush1.bf16.msra.mxu0 0
        %1823 = vmatprep.subr.bf16.mxu0 0
        %1824 = vmatpush1.bf16.msra.mxu0 0
        %1825 = vmatprep.subr.bf16.mxu0 0
        %1826 = vmatpush1.bf16.msra.mxu0 0
        %1827 = vmatprep.subr.bf16.mxu0 0
        %1828 = vmatpush1.bf16.msra.mxu0 0
        %1829 = vmatprep.subr.bf16.mxu0 0
        %1830 = vmatpush1.bf16.msra.mxu0 0
        %1831 = vmatprep.subr.bf16.mxu0 0
        %1832 = vmatpush1.bf16.msra.mxu0 0
        %1833 = vmatprep.subr.bf16.mxu0 0
        %1834 = vmatpush1.bf16.msra.mxu0 0
        %1835 = vmatprep.mubr.bf16.mxu0 0
        %1836 = vmatmul.mubr.bf16.gmra.mrb[0].mxu0 %v1801
        %v1837 = vpop.f32.mrb[0].mxu0
        %v1838 = vadd.f32 0.0, %v1837
        %v1839 = vpop.f32.mrb[0].mxu0
        %v1840 = vpop.f32.mrb[0].mxu0
        %v1841 = vpop.f32.mrb[0].mxu0
        %1842 = vdwg.mxu0
        %v1851 = vunpack.c.l.b16 %v947
        %v1852 = vunpack.c.l.b16 %v948
        %v1853 = vunpack.c.l.b16 %v949
        %v1854 = vunpack.c.l.b16 %v950
        %v1855 = vunpack.c.l.b16 %v951
        %v1856 = vunpack.c.l.b16 %v952
        %v1857 = vunpack.c.l.b16 %v953
        %v1858 = vunpack.c.l.b16 %v954
        %v1859 = vpack.c.b16 %v1852, %v1851
        %v1860 = vpack.c.b16 %v1854, %v1853
        %v1861 = vpack.c.b16 %v1856, %v1855
        %v1862 = vpack.c.b16 %v1858, %v1857
        %v1868 = vsel %vm995, %v840, 0
        %1870 = vmatprep.subr.bf16.mxu0 0
        %1871 = vmatpush1.bf16.msra.mxu0 %v1859
        %1872 = vmatprep.subr.bf16.mxu0 0
        %1873 = vmatpush1.bf16.msra.mxu0 %v1860
        %1874 = vmatprep.subr.bf16.mxu0 0
        %1875 = vmatpush1.bf16.msra.mxu0 %v1861
        %1876 = vmatprep.subr.bf16.mxu0 0
        %1877 = vmatpush1.bf16.msra.mxu0 %v1862
        %1878 = vmatprep.subr.bf16.mxu0 0
        %1879 = vmatpush1.bf16.msra.mxu0 0
        %1880 = vmatprep.subr.bf16.mxu0 0
        %1881 = vmatpush1.bf16.msra.mxu0 0
        %1882 = vmatprep.subr.bf16.mxu0 0
        %1883 = vmatpush1.bf16.msra.mxu0 0
        %1884 = vmatprep.subr.bf16.mxu0 0
        %1885 = vmatpush1.bf16.msra.mxu0 0
        %1886 = vmatprep.subr.bf16.mxu0 0
        %1887 = vmatpush1.bf16.msra.mxu0 0
        %1888 = vmatprep.subr.bf16.mxu0 0
        %1889 = vmatpush1.bf16.msra.mxu0 0
        %1890 = vmatprep.subr.bf16.mxu0 0
        %1891 = vmatpush1.bf16.msra.mxu0 0
        %1892 = vmatprep.subr.bf16.mxu0 0
        %1893 = vmatpush1.bf16.msra.mxu0 0
        %1894 = vmatprep.subr.bf16.mxu0 0
        %1895 = vmatpush1.bf16.msra.mxu0 0
        %1896 = vmatprep.subr.bf16.mxu0 0
        %1897 = vmatpush1.bf16.msra.mxu0 0
        %1898 = vmatprep.subr.bf16.mxu0 0
        %1899 = vmatpush1.bf16.msra.mxu0 0
        %1900 = vmatprep.subr.bf16.mxu0 0
        %1901 = vmatpush1.bf16.msra.mxu0 0
        %1902 = vmatprep.mubr.bf16.mxu0 0
        %1903 = vmatmul.mubr.bf16.gmra.mrb[0].mxu0 %v1868
        %v1904 = vpop.f32.mrb[0].mxu0
        %v1905 = vadd.f32 0.0, %v1904
        %v1906 = vpop.f32.mrb[0].mxu0
        %v1907 = vpop.f32.mrb[0].mxu0
        %v1908 = vpop.f32.mrb[0].mxu0
        %1909 = vdwg.mxu0
        %v1918 = vunpack.c.l.b16 %v955
        %v1919 = vunpack.c.l.b16 %v956
        %v1920 = vunpack.c.l.b16 %v957
        %v1921 = vunpack.c.l.b16 %v958
        %v1922 = vunpack.c.l.b16 %v959
        %v1923 = vunpack.c.l.b16 %v960
        %v1924 = vunpack.c.l.b16 %v961
        %v1925 = vunpack.c.l.b16 %v962
        %v1926 = vpack.c.b16 %v1919, %v1918
        %v1927 = vpack.c.b16 %v1921, %v1920
        %v1928 = vpack.c.b16 %v1923, %v1922
        %v1929 = vpack.c.b16 %v1925, %v1924
        %v1935 = vsel %vm995, %v841, 0
        %1937 = vmatprep.subr.bf16.mxu0 0
        %1938 = vmatpush1.bf16.msra.mxu0 %v1926
        %1939 = vmatprep.subr.bf16.mxu0 0
        %1940 = vmatpush1.bf16.msra.mxu0 %v1927
        %1941 = vmatprep.subr.bf16.mxu0 0
        %1942 = vmatpush1.bf16.msra.mxu0 %v1928
        %1943 = vmatprep.subr.bf16.mxu0 0
        %1944 = vmatpush1.bf16.msra.mxu0 %v1929
        %1945 = vmatprep.subr.bf16.mxu0 0
        %1946 = vmatpush1.bf16.msra.mxu0 0
        %1947 = vmatprep.subr.bf16.mxu0 0
        %1948 = vmatpush1.bf16.msra.mxu0 0
        %1949 = vmatprep.subr.bf16.mxu0 0
        %1950 = vmatpush1.bf16.msra.mxu0 0
        %1951 = vmatprep.subr.bf16.mxu0 0
        %1952 = vmatpush1.bf16.msra.mxu0 0
        %1953 = vmatprep.subr.bf16.mxu0 0
        %1954 = vmatpush1.bf16.msra.mxu0 0
        %1955 = vmatprep.subr.bf16.mxu0 0
        %1956 = vmatpush1.bf16.msra.mxu0 0
        %1957 = vmatprep.subr.bf16.mxu0 0
        %1958 = vmatpush1.bf16.msra.mxu0 0
        %1959 = vmatprep.subr.bf16.mxu0 0
        %1960 = vmatpush1.bf16.msra.mxu0 0
        %1961 = vmatprep.subr.bf16.mxu0 0
        %1962 = vmatpush1.bf16.msra.mxu0 0
        %1963 = vmatprep.subr.bf16.mxu0 0
        %1964 = vmatpush1.bf16.msra.mxu0 0
        %1965 = vmatprep.subr.bf16.mxu0 0
        %1966 = vmatpush1.bf16.msra.mxu0 0
        %1967 = vmatprep.subr.bf16.mxu0 0
        %1968 = vmatpush1.bf16.msra.mxu0 0
        %1969 = vmatprep.mubr.bf16.mxu0 0
        %1970 = vmatmul.mubr.bf16.gmra.mrb[0].mxu0 %v1935
        %v1971 = vpop.f32.mrb[0].mxu0
        %v1972 = vadd.f32 0.0, %v1971
        %v1973 = vpop.f32.mrb[0].mxu0
        %v1974 = vpop.f32.mrb[0].mxu0
        %v1975 = vpop.f32.mrb[0].mxu0
        %1976 = vdwg.mxu0
        %v1985 = vunpack.c.l.b16 %v963
        %v1986 = vunpack.c.l.b16 %v964
        %v1987 = vunpack.c.l.b16 %v965
        %v1988 = vunpack.c.l.b16 %v966
        %v1989 = vunpack.c.l.b16 %v967
        %v1990 = vunpack.c.l.b16 %v968
        %v1991 = vunpack.c.l.b16 %v969
        %v1992 = vunpack.c.l.b16 %v970
        %v1993 = vpack.c.b16 %v1986, %v1985
        %v1994 = vpack.c.b16 %v1988, %v1987
        %v1995 = vpack.c.b16 %v1990, %v1989
        %v1996 = vpack.c.b16 %v1992, %v1991
        %v2002 = vsel %vm995, %v842, 0
        %2004 = vmatprep.subr.bf16.mxu0 0
        %2005 = vmatpush1.bf16.msra.mxu0 %v1993
        %2006 = vmatprep.subr.bf16.mxu0 0
        %2007 = vmatpush1.bf16.msra.mxu0 %v1994
        %2008 = vmatprep.subr.bf16.mxu0 0
        %2009 = vmatpush1.bf16.msra.mxu0 %v1995
        %2010 = vmatprep.subr.bf16.mxu0 0
        %2011 = vmatpush1.bf16.msra.mxu0 %v1996
        %2012 = vmatprep.subr.bf16.mxu0 0
        %2013 = vmatpush1.bf16.msra.mxu0 0
        %2014 = vmatprep.subr.bf16.mxu0 0
        %2015 = vmatpush1.bf16.msra.mxu0 0
        %2016 = vmatprep.subr.bf16.mxu0 0
        %2017 = vmatpush1.bf16.msra.mxu0 0
        %2018 = vmatprep.subr.bf16.mxu0 0
        %2019 = vmatpush1.bf16.msra.mxu0 0
        %2020 = vmatprep.subr.bf16.mxu0 0
        %2021 = vmatpush1.bf16.msra.mxu0 0
        %2022 = vmatprep.subr.bf16.mxu0 0
        %2023 = vmatpush1.bf16.msra.mxu0 0
        %2024 = vmatprep.subr.bf16.mxu0 0
        %2025 = vmatpush1.bf16.msra.mxu0 0
        %2026 = vmatprep.subr.bf16.mxu0 0
        %2027 = vmatpush1.bf16.msra.mxu0 0
        %2028 = vmatprep.subr.bf16.mxu0 0
        %2029 = vmatpush1.bf16.msra.mxu0 0
        %2030 = vmatprep.subr.bf16.mxu0 0
        %2031 = vmatpush1.bf16.msra.mxu0 0
        %2032 = vmatprep.subr.bf16.mxu0 0
        %2033 = vmatpush1.bf16.msra.mxu0 0
        %2034 = vmatprep.subr.bf16.mxu0 0
        %2035 = vmatpush1.bf16.msra.mxu0 0
        %2036 = vmatprep.mubr.bf16.mxu0 0
        %2037 = vmatmul.mubr.bf16.gmra.mrb[0].mxu0 %v2002
        %v2038 = vpop.f32.mrb[0].mxu0
        %v2039 = vadd.f32 0.0, %v2038
        %v2040 = vpop.f32.mrb[0].mxu0
        %v2041 = vpop.f32.mrb[0].mxu0
        %v2042 = vpop.f32.mrb[0].mxu0
        %2043 = vdwg.mxu0
        %v2060 = vrot.slane %v1101, 7
        %vm2061 = vcmask 1041409
        %v2062 = vsel %vm2061, %v2060, %v1034
        %v2063 = vrot.slane %v1168, 6
        %vm2064 = vcmask 1042434
        %v2065 = vsel %vm2064, %v2063, %v2062
        %v2066 = vrot.slane %v1235, 5
        %vm2067 = vcmask 1043459
        %v2068 = vsel %vm2067, %v2066, %v2065
        %v2069 = vrot.slane %v1302, 4
        %vm2070 = vcmask 1044484
        %v2071 = vsel %vm2070, %v2069, %v2068
        %v2072 = vrot.slane %v1369, 3
        %vm2073 = vcmask 1045509
        %v2074 = vsel %vm2073, %v2072, %v2071
        %v2075 = vrot.slane %v1436, 2
        %vm2076 = vcmask 1046534
        %v2077 = vsel %vm2076, %v2075, %v2074
        %v2078 = vrot.slane %v1503, 1
        %vm2079 = vcmask 1047559
        %v2080 = vsel %vm2079, %v2078, %v2077
        %v2081 = vrot.slane %v1637, 7
        %v2082 = vsel %vm2061, %v2081, %v1570
        %v2083 = vrot.slane %v1704, 6
        %v2084 = vsel %vm2064, %v2083, %v2082
        %v2085 = vrot.slane %v1771, 5
        %v2086 = vsel %vm2067, %v2085, %v2084
        %v2087 = vrot.slane %v1838, 4
        %v2088 = vsel %vm2070, %v2087, %v2086
        %v2089 = vrot.slane %v1905, 3
        %v2090 = vsel %vm2073, %v2089, %v2088
        %v2091 = vrot.slane %v1972, 2
        %v2092 = vsel %vm2076, %v2091, %v2090
        %v2093 = vrot.slane %v2039, 1
        %v2094 = vsel %vm2079, %v2093, %v2092
        %2097 = vrot.lane.b32.xlu0 %v2080, 96
        %v2098 = vpop.permute.xlu0 %2097
        %2099 = vrot.lane.b32.xlu0 %v2094, 96
        %v2100 = vpop.permute.xlu0 %2099
        %v2103 = vld [vmem:[%s6] sm:$0xff]
        %v2104 = vld [vmem:[%s6 + $0x8] sm:$0xff]
        %v2105 = vld [vmem:[%s6 + $0x10] sm:$0xff]
        %v2106 = vld [vmem:[%s6 + $0x18] sm:$0xff]
        %v2107 = vld [vmem:[#allocation9] sm:$0x1]
        %v2109 = vlaneseq
        %v2110 = vshrl.u32 %v2109, 7
        %v2111 = vsub.s32 0, %v2110
        %v2112 = vrot.slane %v2107, %v2111
        %v2115 = vsel %vm583, %v598, 0
        %v2118 = vsel %vm583, %v599, 0
        %v2121 = vsel %vm583, %v600, 0
        %v2124 = vsel %vm583, %v601, 0
        %v2127 = vsel %vm583, %v602, 0
        %2129 = vmatprep.subr.mxu0 0.0
        %2130 = vmatpush1.msra.mxu0 %v2103
        %2131 = vmatprep.subr.mxu0 0.0
        %2132 = vmatpush1.msra.mxu0 %v2104
        %2133 = vmatprep.subr.mxu0 0.0
        %2134 = vmatpush1.msra.mxu0 %v2105
        %2135 = vmatprep.subr.mxu0 0.0
        %2136 = vmatpush1.msra.mxu0 %v2106
        %2137 = vmatprep.subr.mxu0 0.0
        %2138 = vmatpush1.msra.mxu0 0.0
        %2139 = vmatprep.subr.mxu0 0.0
        %2140 = vmatpush1.msra.mxu0 0.0
        %2141 = vmatprep.subr.mxu0 0.0
        %2142 = vmatpush1.msra.mxu0 0.0
        %2143 = vmatprep.subr.mxu0 0.0
        %2144 = vmatpush1.msra.mxu0 0.0
        %2145 = vmatprep.subr.mxu0 0.0
        %2146 = vmatpush1.msra.mxu0 0.0
        %2147 = vmatprep.subr.mxu0 0.0
        %2148 = vmatpush1.msra.mxu0 0.0
        %2149 = vmatprep.subr.mxu0 0.0
        %2150 = vmatpush1.msra.mxu0 0.0
        %2151 = vmatprep.subr.mxu0 0.0
        %2152 = vmatpush1.msra.mxu0 0.0
        %2153 = vmatprep.subr.mxu0 0.0
        %2154 = vmatpush1.msra.mxu0 0.0
        %2155 = vmatprep.subr.mxu0 0.0
        %2156 = vmatpush1.msra.mxu0 0.0
        %2157 = vmatprep.subr.mxu0 0.0
        %2158 = vmatpush1.msra.mxu0 0.0
        %2159 = vmatprep.subr.mxu0 0.0
        %2160 = vmatpush1.msra.mxu0 0.0
        %2161 = vmatprep.subr.mxu0 0.0
        %2162 = vmatpush1.msra.mxu0 0.0
        %2163 = vmatprep.subr.mxu0 0.0
        %2164 = vmatpush1.msra.mxu0 0.0
        %2165 = vmatprep.subr.mxu0 0.0
        %2166 = vmatpush1.msra.mxu0 0.0
        %2167 = vmatprep.subr.mxu0 0.0
        %2168 = vmatpush1.msra.mxu0 0.0
        %2169 = vmatprep.subr.mxu0 0.0
        %2170 = vmatpush1.msra.mxu0 0.0
        %2171 = vmatprep.subr.mxu0 0.0
        %2172 = vmatpush1.msra.mxu0 0.0
        %2173 = vmatprep.subr.mxu0 0.0
        %2174 = vmatpush1.msra.mxu0 0.0
        %2175 = vmatprep.subr.mxu0 0.0
        %2176 = vmatpush1.msra.mxu0 0.0
        %2177 = vmatprep.subr.mxu0 0.0
        %2178 = vmatpush1.msra.mxu0 0.0
        %2179 = vmatprep.subr.mxu0 0.0
        %2180 = vmatpush1.msra.mxu0 0.0
        %2181 = vmatprep.subr.mxu0 0.0
        %2182 = vmatpush1.msra.mxu0 0.0
        %2183 = vmatprep.subr.mxu0 0.0
        %2184 = vmatpush1.msra.mxu0 0.0
        %2185 = vmatprep.subr.mxu0 0.0
        %2186 = vmatpush1.msra.mxu0 0.0
        %2187 = vmatprep.subr.mxu0 0.0
        %2188 = vmatpush1.msra.mxu0 0.0
        %2189 = vmatprep.subr.mxu0 0.0
        %2190 = vmatpush1.msra.mxu0 0.0
        %2191 = vmatprep.subr.mxu0 0.0
        %2192 = vmatpush1.msra.mxu0 0.0
        %2193 = vmatprep.mubr.f32.mxu0 0.0
        %2194 = vmatmul.mubr.f32.gmra.mrb[0].mxu0 %v2115
        %v2195 = vpop.f32.mrb[0].mxu0
        %v2196 = vadd.f32 %v2112, %v2195
        %v2197 = vpop.f32.mrb[0].mxu0
        %2198 = vmatprep.mubr.f32.mxu0 0.0
        %2199 = vmatmul.mubr.f32.gmra.mrb[0].mxu0 %v2118
        %v2200 = vpop.f32.mrb[0].mxu0
        %v2201 = vadd.f32 %v2112, %v2200
        %v2202 = vpop.f32.mrb[0].mxu0
        %2203 = vmatprep.mubr.f32.mxu0 0.0
        %2204 = vmatmul.mubr.f32.gmra.mrb[0].mxu0 %v2121
        %v2205 = vpop.f32.mrb[0].mxu0
        %v2206 = vadd.f32 %v2112, %v2205
        %v2207 = vpop.f32.mrb[0].mxu0
        %2208 = vmatprep.mubr.f32.mxu0 0.0
        %2209 = vmatmul.mubr.f32.gmra.mrb[0].mxu0 %v2124
        %v2210 = vpop.f32.mrb[0].mxu0
        %v2211 = vadd.f32 %v2112, %v2210
        %v2212 = vpop.f32.mrb[0].mxu0
        %2213 = vmatprep.mubr.f32.mxu0 0.0
        %2214 = vmatmul.mubr.f32.gmra.mrb[0].mxu0 %v2127
        %v2215 = vpop.f32.mrb[0].mxu0
        %v2216 = vadd.f32 %v2112, %v2215
        %v2217 = vpop.f32.mrb[0].mxu0
        %2218 = vdwg.mxu0
        %v2220 = vsel %vm583, %v593, 0
        %v2223 = vsel %vm583, %v594, 0
        %v2226 = vsel %vm583, %v595, 0
        %v2229 = vsel %vm583, %v596, 0
        %v2232 = vsel %vm583, %v597, 0
        %2234 = vmatprep.subr.mxu0 0.0
        %2235 = vmatpush1.msra.mxu0 %v2080
        %2236 = vmatprep.subr.mxu0 0.0
        %2237 = vmatpush1.msra.mxu0 %v2094
        %2238 = vmatprep.subr.mxu0 0.0
        %2239 = vmatpush1.msra.mxu0 %v2098
        %2240 = vmatprep.subr.mxu0 0.0
        %2241 = vmatpush1.msra.mxu0 %v2100
        %2242 = vmatprep.subr.mxu0 0.0
        %2243 = vmatpush1.msra.mxu0 0.0
        %2244 = vmatprep.subr.mxu0 0.0
        %2245 = vmatpush1.msra.mxu0 0.0
        %2246 = vmatprep.subr.mxu0 0.0
        %2247 = vmatpush1.msra.mxu0 0.0
        %2248 = vmatprep.subr.mxu0 0.0
        %2249 = vmatpush1.msra.mxu0 0.0
        %2250 = vmatprep.subr.mxu0 0.0
        %2251 = vmatpush1.msra.mxu0 0.0
        %2252 = vmatprep.subr.mxu0 0.0
        %2253 = vmatpush1.msra.mxu0 0.0
        %2254 = vmatprep.subr.mxu0 0.0
        %2255 = vmatpush1.msra.mxu0 0.0
        %2256 = vmatprep.subr.mxu0 0.0
        %2257 = vmatpush1.msra.mxu0 0.0
        %2258 = vmatprep.subr.mxu0 0.0
        %2259 = vmatpush1.msra.mxu0 0.0
        %2260 = vmatprep.subr.mxu0 0.0
        %2261 = vmatpush1.msra.mxu0 0.0
        %2262 = vmatprep.subr.mxu0 0.0
        %2263 = vmatpush1.msra.mxu0 0.0
        %2264 = vmatprep.subr.mxu0 0.0
        %2265 = vmatpush1.msra.mxu0 0.0
        %2266 = vmatprep.subr.mxu0 0.0
        %2267 = vmatpush1.msra.mxu0 0.0
        %2268 = vmatprep.subr.mxu0 0.0
        %2269 = vmatpush1.msra.mxu0 0.0
        %2270 = vmatprep.subr.mxu0 0.0
        %2271 = vmatpush1.msra.mxu0 0.0
        %2272 = vmatprep.subr.mxu0 0.0
        %2273 = vmatpush1.msra.mxu0 0.0
        %2274 = vmatprep.subr.mxu0 0.0
        %2275 = vmatpush1.msra.mxu0 0.0
        %2276 = vmatprep.subr.mxu0 0.0
        %2277 = vmatpush1.msra.mxu0 0.0
        %2278 = vmatprep.subr.mxu0 0.0
        %2279 = vmatpush1.msra.mxu0 0.0
        %2280 = vmatprep.subr.mxu0 0.0
        %2281 = vmatpush1.msra.mxu0 0.0
        %2282 = vmatprep.subr.mxu0 0.0
        %2283 = vmatpush1.msra.mxu0 0.0
        %2284 = vmatprep.subr.mxu0 0.0
        %2285 = vmatpush1.msra.mxu0 0.0
        %2286 = vmatprep.subr.mxu0 0.0
        %2287 = vmatpush1.msra.mxu0 0.0
        %2288 = vmatprep.subr.mxu0 0.0
        %2289 = vmatpush1.msra.mxu0 0.0
        %2290 = vmatprep.subr.mxu0 0.0
        %2291 = vmatpush1.msra.mxu0 0.0
        %2292 = vmatprep.subr.mxu0 0.0
        %2293 = vmatpush1.msra.mxu0 0.0
        %2294 = vmatprep.subr.mxu0 0.0
        %2295 = vmatpush1.msra.mxu0 0.0
        %2296 = vmatprep.subr.mxu0 0.0
        %2297 = vmatpush1.msra.mxu0 0.0
        %2298 = vmatprep.mubr.f32.mxu0 0.0
        %2299 = vmatmul.mubr.f32.gmra.mrb[0].mxu0 %v2220
        %v2300 = vpop.f32.mrb[0].mxu0
        %v2301 = vadd.f32 %v2196, %v2300
        %v2302 = vpop.f32.mrb[0].mxu0
        %2303 = vmatprep.mubr.f32.mxu0 0.0
        %2304 = vmatmul.mubr.f32.gmra.mrb[0].mxu0 %v2223
        %v2305 = vpop.f32.mrb[0].mxu0
        %v2306 = vadd.f32 %v2201, %v2305
        %v2307 = vpop.f32.mrb[0].mxu0
        %2308 = vmatprep.mubr.f32.mxu0 0.0
        %2309 = vmatmul.mubr.f32.gmra.mrb[0].mxu0 %v2226
        %v2310 = vpop.f32.mrb[0].mxu0
        %v2311 = vadd.f32 %v2206, %v2310
        %v2312 = vpop.f32.mrb[0].mxu0
        %2313 = vmatprep.mubr.f32.mxu0 0.0
        %2314 = vmatmul.mubr.f32.gmra.mrb[0].mxu0 %v2229
        %v2315 = vpop.f32.mrb[0].mxu0
        %v2316 = vadd.f32 %v2211, %v2315
        %v2317 = vpop.f32.mrb[0].mxu0
        %2318 = vmatprep.mubr.f32.mxu0 0.0
        %2319 = vmatmul.mubr.f32.gmra.mrb[0].mxu0 %v2232
        %v2320 = vpop.f32.mrb[0].mxu0
        %v2321 = vadd.f32 %v2216, %v2320
        %v2322 = vpop.f32.mrb[0].mxu0
        %2323 = vdwg.mxu0
        %v2324 = vmul.f32 %v2301, 0.5
        %v2325 = vmul.f32 %v2306, 0.5
        %v2326 = vmul.f32 %v2311, 0.5
        %v2327 = vmul.f32 %v2316, 0.5
        %v2328 = vmul.f32 %v2321, 0.5
        %v2329 = vmul.f32 %v2301, 0.70710677
        %v2330 = vmul.f32 %v2306, 0.70710677
        %v2331 = vmul.f32 %v2311, 0.70710677
        %v2332 = vmul.f32 %v2316, 0.70710677
        %v2333 = vmul.f32 %v2321, 0.70710677
        %v2334 = vand.u32 2147483647, %v2329
        %v2335 = vand.u32 2147483647, %v2330
        %v2336 = vand.u32 2147483647, %v2331
        %v2337 = vand.u32 2147483647, %v2332
        %v2338 = vand.u32 2147483647, %v2333
        %v2339 = vmul.f32 %v2334, 0.3275911
        %v2340 = vmul.f32 %v2335, 0.3275911
        %v2341 = vmul.f32 %v2336, 0.3275911
        %v2342 = vmul.f32 %v2337, 0.3275911
        %v2343 = vmul.f32 %v2338, 0.3275911
        %v2344 = vadd.f32 %v2339, 1.0
        %v2345 = vadd.f32 %v2340, 1.0
        %v2346 = vadd.f32 %v2341, 1.0
        %v2347 = vadd.f32 %v2342, 1.0
        %v2348 = vadd.f32 %v2343, 1.0
        %v2349 = vrcp.pop %v2344
        %v2350 = vmul.f32 1.0, %v2349
        %v2351 = vrcp.pop %v2345
        %v2352 = vmul.f32 1.0, %v2351
        %v2353 = vrcp.pop %v2346
        %v2354 = vmul.f32 1.0, %v2353
        %v2355 = vrcp.pop %v2347
        %v2356 = vmul.f32 1.0, %v2355
        %v2357 = vrcp.pop %v2348
        %v2358 = vmul.f32 1.0, %v2357
        %v2359 = vmul.f32 %v2350, 1.0614054
        %v2360 = vmul.f32 %v2352, 1.0614054
        %v2361 = vmul.f32 %v2354, 1.0614054
        %v2362 = vmul.f32 %v2356, 1.0614054
        %v2363 = vmul.f32 %v2358, 1.0614054
        %v2364 = vadd.f32 %v2359, -1.4531521
        %v2365 = vadd.f32 %v2360, -1.4531521
        %v2366 = vadd.f32 %v2361, -1.4531521
        %v2367 = vadd.f32 %v2362, -1.4531521
        %v2368 = vadd.f32 %v2363, -1.4531521
        %v2369 = vmul.f32 %v2350, %v2364
        %v2370 = vmul.f32 %v2352, %v2365
        %v2371 = vmul.f32 %v2354, %v2366
        %v2372 = vmul.f32 %v2356, %v2367
        %v2373 = vmul.f32 %v2358, %v2368
        %v2374 = vadd.f32 %v2369, 1.4214138
        %v2375 = vadd.f32 %v2370, 1.4214138
        %v2376 = vadd.f32 %v2371, 1.4214138
        %v2377 = vadd.f32 %v2372, 1.4214138
        %v2378 = vadd.f32 %v2373, 1.4214138
        %v2379 = vmul.f32 %v2350, %v2374
        %v2380 = vmul.f32 %v2352, %v2375
        %v2381 = vmul.f32 %v2354, %v2376
        %v2382 = vmul.f32 %v2356, %v2377
        %v2383 = vmul.f32 %v2358, %v2378
        %v2384 = vadd.f32 %v2379, -0.28449672
        %v2385 = vadd.f32 %v2380, -0.28449672
        %v2386 = vadd.f32 %v2381, -0.28449672
        %v2387 = vadd.f32 %v2382, -0.28449672
        %v2388 = vadd.f32 %v2383, -0.28449672
        %v2389 = vmul.f32 %v2350, %v2384
        %v2390 = vmul.f32 %v2352, %v2385
        %v2391 = vmul.f32 %v2354, %v2386
        %v2392 = vmul.f32 %v2356, %v2387
        %v2393 = vmul.f32 %v2358, %v2388
        %v2394 = vadd.f32 %v2389, 0.2548296
        %v2395 = vadd.f32 %v2390, 0.2548296
        %v2396 = vadd.f32 %v2391, 0.2548296
        %v2397 = vadd.f32 %v2392, 0.2548296
        %v2398 = vadd.f32 %v2393, 0.2548296
        %v2399 = vmul.f32 %v2350, %v2394
        %v2400 = vmul.f32 %v2352, %v2395
        %v2401 = vmul.f32 %v2354, %v2396
        %v2402 = vmul.f32 %v2356, %v2397
        %v2403 = vmul.f32 %v2358, %v2398
        %v2404 = vsub.f32 0.0, %v2334
        %v2405 = vsub.f32 0.0, %v2335
        %v2406 = vsub.f32 0.0, %v2336
        %v2407 = vsub.f32 0.0, %v2337
        %v2408 = vsub.f32 0.0, %v2338
        %v2409 = vmul.f32 %v2404, %v2334
        %v2410 = vmul.f32 %v2405, %v2335
        %v2411 = vmul.f32 %v2406, %v2336
        %v2412 = vmul.f32 %v2407, %v2337
        %v2413 = vmul.f32 %v2408, %v2338
        %v2414 = vmul.f32 %v2409, 1.442695
        %v2415 = vpow.pop %v2414
        %v2416 = vmul.f32 %v2410, 1.442695
        %v2417 = vpow.pop %v2416
        %v2418 = vmul.f32 %v2411, 1.442695
        %v2419 = vpow.pop %v2418
        %v2420 = vmul.f32 %v2412, 1.442695
        %v2421 = vpow.pop %v2420
        %v2422 = vmul.f32 %v2413, 1.442695
        %v2423 = vpow.pop %v2422
        %v2424 = vmul.f32 %v2399, %v2415
        %v2425 = vmul.f32 %v2400, %v2417
        %v2426 = vmul.f32 %v2401, %v2419
        %v2427 = vmul.f32 %v2402, %v2421
        %v2428 = vmul.f32 %v2403, %v2423
        %v2429 = vsub.f32 1.0, %v2424
        %v2430 = vsub.f32 1.0, %v2425
        %v2431 = vsub.f32 1.0, %v2426
        %v2432 = vsub.f32 1.0, %v2427
        %v2433 = vsub.f32 1.0, %v2428
        %vm2434 = vcmp.ge.f32.partialorder %v2329, 0.0
        %vm2435 = vcmp.ge.f32.partialorder %v2330, 0.0
        %vm2436 = vcmp.ge.f32.partialorder %v2331, 0.0
        %vm2437 = vcmp.ge.f32.partialorder %v2332, 0.0
        %vm2438 = vcmp.ge.f32.partialorder %v2333, 0.0
        %v2439 = vsub.f32 0.0, %v2429
        %v2440 = vsub.f32 0.0, %v2430
        %v2441 = vsub.f32 0.0, %v2431
        %v2442 = vsub.f32 0.0, %v2432
        %v2443 = vsub.f32 0.0, %v2433
        %v2444 = vsel %vm2434, %v2429, %v2439
        %v2445 = vsel %vm2435, %v2430, %v2440
        %v2446 = vsel %vm2436, %v2431, %v2441
        %v2447 = vsel %vm2437, %v2432, %v2442
        %v2448 = vsel %vm2438, %v2433, %v2443
        %v2449 = vadd.f32 %v2444, 1.0
        %v2450 = vadd.f32 %v2445, 1.0
        %v2451 = vadd.f32 %v2446, 1.0
        %v2452 = vadd.f32 %v2447, 1.0
        %v2453 = vadd.f32 %v2448, 1.0
        %v2454 = vmul.f32 %v2324, %v2449
        %v2455 = vmul.f32 %v2325, %v2450
        %v2456 = vmul.f32 %v2326, %v2451
        %v2457 = vmul.f32 %v2327, %v2452
        %v2458 = vmul.f32 %v2328, %v2453
        %2459 = vst.msk [vmem:[#allocation2] sm:$0xff] %vm583, %v2454
        %2460 = vst.msk [vmem:[#allocation2 + $0x8] sm:$0xff] %vm583, %v2455
        %2461 = vst.msk [vmem:[#allocation2 + $0x10] sm:$0xff] %vm583, %v2456
        %2462 = vst.msk [vmem:[#allocation2 + $0x18] sm:$0xff] %vm583, %v2457
        %2463 = vst.msk [vmem:[#allocation2 + $0x20] sm:$0xff] %vm583, %v2458
        %v2464 = vld [vmem:[#allocation2] sm:$0xff]
        %v2465 = vld [vmem:[#allocation2 + $0x8] sm:$0xff]
        %v2466 = vld [vmem:[#allocation2 + $0x10] sm:$0xff]
        %v2467 = vld [vmem:[#allocation2 + $0x18] sm:$0xff]
        %v2468 = vld [vmem:[#allocation2 + $0x20] sm:$0xff]
        %2469 = vmatprep.subr.mxu0 0.0
        %2470 = vmatpush1.msra.mxu0 %v2464
        %2471 = vmatprep.subr.mxu0 0.0
        %2472 = vmatpush1.msra.mxu0 %v2465
        %2473 = vmatprep.subr.mxu0 0.0
        %2474 = vmatpush1.msra.mxu0 %v2466
        %2475 = vmatprep.subr.mxu0 0.0
        %2476 = vmatpush1.msra.mxu0 %v2467
        %2477 = vmatprep.subr.mxu0 0.0
        %2478 = vmatpush1.msra.mxu0 %v2468
        %2479 = vmatprep.subr.mxu0 0.0
        %2480 = vmatpush1.msra.mxu0 0.0
        %2481 = vmatprep.subr.mxu0 0.0
        %2482 = vmatpush1.msra.mxu0 0.0
        %2483 = vmatprep.subr.mxu0 0.0
        %2484 = vmatpush1.msra.mxu0 0.0
        %2485 = vmatprep.subr.mxu0 0.0
        %2486 = vmatpush1.msra.mxu0 0.0
        %2487 = vmatprep.subr.mxu0 0.0
        %2488 = vmatpush1.msra.mxu0 0.0
        %2489 = vmatprep.subr.mxu0 0.0
        %2490 = vmatpush1.msra.mxu0 0.0
        %2491 = vmatprep.subr.mxu0 0.0
        %2492 = vmatpush1.msra.mxu0 0.0
        %2493 = vmatprep.subr.mxu0 0.0
        %2494 = vmatpush1.msra.mxu0 0.0
        %2495 = vmatprep.subr.mxu0 0.0
        %2496 = vmatpush1.msra.mxu0 0.0
        %2497 = vmatprep.subr.mxu0 0.0
        %2498 = vmatpush1.msra.mxu0 0.0
        %2499 = vmatprep.subr.mxu0 0.0
        %2500 = vmatpush1.msra.mxu0 0.0
        %2501 = vmatprep.subr.mxu0 0.0
        %2502 = vmatpush1.msra.mxu0 0.0
        %2503 = vmatprep.subr.mxu0 0.0
        %2504 = vmatpush1.msra.mxu0 0.0
        %2505 = vmatprep.subr.mxu0 0.0
        %2506 = vmatpush1.msra.mxu0 0.0
        %2507 = vmatprep.subr.mxu0 0.0
        %2508 = vmatpush1.msra.mxu0 0.0
        %2509 = vmatprep.subr.mxu0 0.0
        %2510 = vmatpush1.msra.mxu0 0.0
        %2511 = vmatprep.subr.mxu0 0.0
        %2512 = vmatpush1.msra.mxu0 0.0
        %2513 = vmatprep.subr.mxu0 0.0
        %2514 = vmatpush1.msra.mxu0 0.0
        %2515 = vmatprep.subr.mxu0 0.0
        %2516 = vmatpush1.msra.mxu0 0.0
        %2517 = vmatprep.subr.mxu0 0.0
        %2518 = vmatpush1.msra.mxu0 0.0
        %2519 = vmatprep.subr.mxu0 0.0
        %2520 = vmatpush1.msra.mxu0 0.0
        %2521 = vmatprep.subr.mxu0 0.0
        %2522 = vmatpush1.msra.mxu0 0.0
        %2523 = vmatprep.subr.mxu0 0.0
        %2524 = vmatpush1.msra.mxu0 0.0
        %2525 = vmatprep.subr.mxu0 0.0
        %2526 = vmatpush1.msra.mxu0 0.0
        %2527 = vmatprep.subr.mxu0 0.0
        %2528 = vmatpush1.msra.mxu0 0.0
        %2529 = vmatprep.subr.mxu0 0.0
        %2530 = vmatpush1.msra.mxu0 0.0
        %2531 = vmatprep.subr.mxu0 0.0
        %2532 = vmatpush1.msra.mxu0 0.0
        %2533 = vmatprep.mubr.f32.mxu0 0.0
        %2534 = vmatmul.mubr.f32.gmra.mrb[0].mxu0 %v605
        %v2535 = vpop.f32.mrb[0].mxu0
        %v2536 = vadd.f32 0.0, %v2535
        %v2537 = vpop.f32.mrb[0].mxu0
        %2538 = vmatprep.mubr.f32.mxu0 0.0
        %2539 = vmatmul.mubr.f32.gmra.mrb[0].mxu0 %v608
        %v2540 = vpop.f32.mrb[0].mxu0
        %v2541 = vadd.f32 0.0, %v2540
        %v2542 = vpop.f32.mrb[0].mxu0
        %2543 = vmatprep.mubr.f32.mxu0 0.0
        %2544 = vmatmul.mubr.f32.gmra.mrb[0].mxu0 %v611
        %v2545 = vpop.f32.mrb[0].mxu0
        %v2546 = vadd.f32 0.0, %v2545
        %v2547 = vpop.f32.mrb[0].mxu0
        %2548 = vmatprep.mubr.f32.mxu0 0.0
        %2549 = vmatmul.mubr.f32.gmra.mrb[0].mxu0 %v614
        %v2550 = vpop.f32.mrb[0].mxu0
        %v2551 = vadd.f32 0.0, %v2550
        %v2552 = vpop.f32.mrb[0].mxu0
        %2553 = vdwg.mxu0
        %2556 = vrot.lane.b32.xlu0 %v2546, 32
        %v2557 = vpop.permute.xlu0 %2556
        %2558 = vrot.lane.b32.xlu0 %v2551, 32
        %v2559 = vpop.permute.xlu0 %2558
        %v2562 = vsel %vm583, %v2536, %v2557
        %v2563 = vsel %vm583, %v2541, %v2559
        %v2566 = vcombine.high %v2562, %v2562
        %v2568 = vunpack.c.l.s4 1966171168
        %v2569 = vunpack.c.0.s8 %v2568
        %v2570 = vlaneseq
        %v2571 = vshrl.u32 %v2570, 7
        %v2572 = vsub.s32 %v2569, %v2571
        %v2573 = vrot.slane %v2562, %v2572
        %v2575 = vunpack.c.l.s4 1966171168
        %v2576 = vunpack.c.0.s8 %v2575
        %v2577 = vlaneseq
        %v2578 = vshrl.u32 %v2577, 7
        %v2579 = vsub.s32 %v2576, %v2578
        %v2580 = vrot.slane %v2566, %v2579
        %v2581 = vcombine.high %v2573, %v2573
        %v2582 = vcombine.high %v2580, %v2580
        %v2584 = vunpack.c.l.s4 1966171168
        %v2585 = vunpack.c.0.s8 %v2584
        %v2586 = vlaneseq
        %v2587 = vshrl.u32 %v2586, 7
        %v2588 = vsub.s32 %v2585, %v2587
        %v2589 = vrot.slane %v2573, %v2588
        %v2591 = vunpack.c.l.s4 1966171168
        %v2592 = vunpack.c.0.s8 %v2591
        %v2593 = vlaneseq
        %v2594 = vshrl.u32 %v2593, 7
        %v2595 = vsub.s32 %v2592, %v2594
        %v2596 = vrot.slane %v2580, %v2595
        %v2598 = vunpack.c.l.s4 1966171168
        %v2599 = vunpack.c.0.s8 %v2598
        %v2600 = vlaneseq
        %v2601 = vshrl.u32 %v2600, 7
        %v2602 = vsub.s32 %v2599, %v2601
        %v2603 = vrot.slane %v2581, %v2602
        %v2605 = vunpack.c.l.s4 1966171168
        %v2606 = vunpack.c.0.s8 %v2605
        %v2607 = vlaneseq
        %v2608 = vshrl.u32 %v2607, 7
        %v2609 = vsub.s32 %v2606, %v2608
        %v2610 = vrot.slane %v2582, %v2609
        %v2611 = vcombine.high %v2589, %v2589
        %v2612 = vcombine.high %v2596, %v2596
        %v2613 = vcombine.high %v2603, %v2603
        %v2614 = vcombine.high %v2610, %v2610
        %v2615 = vcombine.high %v2563, %v2563
        %v2617 = vunpack.c.l.s4 1966171168
        %v2618 = vunpack.c.0.s8 %v2617
        %v2619 = vlaneseq
        %v2620 = vshrl.u32 %v2619, 7
        %v2621 = vsub.s32 %v2618, %v2620
        %v2622 = vrot.slane %v2563, %v2621
        %v2624 = vunpack.c.l.s4 1966171168
        %v2625 = vunpack.c.0.s8 %v2624
        %v2626 = vlaneseq
        %v2627 = vshrl.u32 %v2626, 7
        %v2628 = vsub.s32 %v2625, %v2627
        %v2629 = vrot.slane %v2615, %v2628
        %v2630 = vcombine.high %v2622, %v2622
        %v2631 = vcombine.high %v2629, %v2629
        %v2633 = vunpack.c.l.s4 1966171168
        %v2634 = vunpack.c.0.s8 %v2633
        %v2635 = vlaneseq
        %v2636 = vshrl.u32 %v2635, 7
        %v2637 = vsub.s32 %v2634, %v2636
        %v2638 = vrot.slane %v2622, %v2637
        %v2640 = vunpack.c.l.s4 1966171168
        %v2641 = vunpack.c.0.s8 %v2640
        %v2642 = vlaneseq
        %v2643 = vshrl.u32 %v2642, 7
        %v2644 = vsub.s32 %v2641, %v2643
        %v2645 = vrot.slane %v2629, %v2644
        %v2647 = vunpack.c.l.s4 1966171168
        %v2648 = vunpack.c.0.s8 %v2647
        %v2649 = vlaneseq
        %v2650 = vshrl.u32 %v2649, 7
        %v2651 = vsub.s32 %v2648, %v2650
        %v2652 = vrot.slane %v2630, %v2651
        %v2654 = vunpack.c.l.s4 1966171168
        %v2655 = vunpack.c.0.s8 %v2654
        %v2656 = vlaneseq
        %v2657 = vshrl.u32 %v2656, 7
        %v2658 = vsub.s32 %v2655, %v2657
        %v2659 = vrot.slane %v2631, %v2658
        %v2660 = vcombine.high %v2638, %v2638
        %v2661 = vcombine.high %v2645, %v2645
        %v2662 = vcombine.high %v2652, %v2652
        %v2663 = vcombine.high %v2659, %v2659
        %v2680 = vpack.c.bf16 %v2589, %v2589
        %v2681 = vpack.c.bf16 %v2603, %v2603
        %v2682 = vpack.c.bf16 %v2611, %v2611
        %v2683 = vpack.c.bf16 %v2613, %v2613
        %v2684 = vpack.c.bf16 %v2596, %v2596
        %v2685 = vpack.c.bf16 %v2610, %v2610
        %v2686 = vpack.c.bf16 %v2612, %v2612
        %v2687 = vpack.c.bf16 %v2614, %v2614
        %v2688 = vpack.c.bf16 %v2638, %v2638
        %v2689 = vpack.c.bf16 %v2652, %v2652
        %v2690 = vpack.c.bf16 %v2660, %v2660
        %v2691 = vpack.c.bf16 %v2662, %v2662
        %v2692 = vpack.c.bf16 %v2645, %v2645
        %v2693 = vpack.c.bf16 %v2659, %v2659
        %v2694 = vpack.c.bf16 %v2661, %v2661
        %v2695 = vpack.c.bf16 %v2663, %v2663
        %s2696 = scalar_lea.vmem [#allocation7], 512
        %v2697 = vld [vmem:[%s2696] sm:$0xf]
        %v2698 = vld [vmem:[%s2696 + $0x4] sm:$0xf]
        %v2699 = vld [vmem:[%s2696 + $0x8] sm:$0xf]
        %v2700 = vld [vmem:[%s2696 + $0xc] sm:$0xf]
        %v2701 = vld [vmem:[%s2696 + $0x10] sm:$0xf]
        %v2702 = vld [vmem:[%s2696 + $0x14] sm:$0xf]
        %v2703 = vld [vmem:[%s2696 + $0x18] sm:$0xf]
        %v2704 = vld [vmem:[%s2696 + $0x1c] sm:$0xf]
        %v2705 = vld [vmem:[%s2696 + $0x20] sm:$0xf]
        %v2706 = vld [vmem:[%s2696 + $0x24] sm:$0xf]
        %v2707 = vld [vmem:[%s2696 + $0x28] sm:$0xf]
        %v2708 = vld [vmem:[%s2696 + $0x2c] sm:$0xf]
        %v2709 = vld [vmem:[%s2696 + $0x30] sm:$0xf]
        %v2710 = vld [vmem:[%s2696 + $0x34] sm:$0xf]
        %v2711 = vld [vmem:[%s2696 + $0x38] sm:$0xf]
        %v2712 = vld [vmem:[%s2696 + $0x3c] sm:$0xf]
        %v2713 = vld [vmem:[%s2696 + $0x40] sm:$0xf]
        %v2714 = vld [vmem:[%s2696 + $0x44] sm:$0xf]
        %v2715 = vld [vmem:[%s2696 + $0x48] sm:$0xf]
        %v2716 = vld [vmem:[%s2696 + $0x4c] sm:$0xf]
        %v2717 = vld [vmem:[%s2696 + $0x50] sm:$0xf]
        %v2718 = vld [vmem:[%s2696 + $0x54] sm:$0xf]
        %v2719 = vld [vmem:[%s2696 + $0x58] sm:$0xf]
        %v2720 = vld [vmem:[%s2696 + $0x5c] sm:$0xf]
        %v2721 = vld [vmem:[%s2696 + $0x60] sm:$0xf]
        %v2722 = vld [vmem:[%s2696 + $0x64] sm:$0xf]
        %v2723 = vld [vmem:[%s2696 + $0x68] sm:$0xf]
        %v2724 = vld [vmem:[%s2696 + $0x6c] sm:$0xf]
        %v2725 = vld [vmem:[%s2696 + $0x70] sm:$0xf]
        %v2726 = vld [vmem:[%s2696 + $0x74] sm:$0xf]
        %v2727 = vld [vmem:[%s2696 + $0x78] sm:$0xf]
        %v2728 = vld [vmem:[%s2696 + $0x7c] sm:$0xf]
        %v2729 = vld [vmem:[%s2696 + $0x80] sm:$0xf]
        %v2730 = vld [vmem:[%s2696 + $0x84] sm:$0xf]
        %v2731 = vld [vmem:[%s2696 + $0x88] sm:$0xf]
        %v2732 = vld [vmem:[%s2696 + $0x8c] sm:$0xf]
        %v2733 = vld [vmem:[%s2696 + $0x90] sm:$0xf]
        %v2734 = vld [vmem:[%s2696 + $0x94] sm:$0xf]
        %v2735 = vld [vmem:[%s2696 + $0x98] sm:$0xf]
        %v2736 = vld [vmem:[%s2696 + $0x9c] sm:$0xf]
        %v2737 = vld [vmem:[%s2696 + $0xa0] sm:$0xf]
        %v2738 = vld [vmem:[%s2696 + $0xa4] sm:$0xf]
        %v2739 = vld [vmem:[%s2696 + $0xa8] sm:$0xf]
        %v2740 = vld [vmem:[%s2696 + $0xac] sm:$0xf]
        %v2741 = vld [vmem:[%s2696 + $0xb0] sm:$0xf]
        %v2742 = vld [vmem:[%s2696 + $0xb4] sm:$0xf]
        %v2743 = vld [vmem:[%s2696 + $0xb8] sm:$0xf]
        %v2744 = vld [vmem:[%s2696 + $0xbc] sm:$0xf]
        %v2745 = vld [vmem:[%s2696 + $0xc0] sm:$0xf]
        %v2746 = vld [vmem:[%s2696 + $0xc4] sm:$0xf]
        %v2747 = vld [vmem:[%s2696 + $0xc8] sm:$0xf]
        %v2748 = vld [vmem:[%s2696 + $0xcc] sm:$0xf]
        %v2749 = vld [vmem:[%s2696 + $0xd0] sm:$0xf]
        %v2750 = vld [vmem:[%s2696 + $0xd4] sm:$0xf]
        %v2751 = vld [vmem:[%s2696 + $0xd8] sm:$0xf]
        %v2752 = vld [vmem:[%s2696 + $0xdc] sm:$0xf]
        %v2753 = vld [vmem:[%s2696 + $0xe0] sm:$0xf]
        %v2754 = vld [vmem:[%s2696 + $0xe4] sm:$0xf]
        %v2755 = vld [vmem:[%s2696 + $0xe8] sm:$0xf]
        %v2756 = vld [vmem:[%s2696 + $0xec] sm:$0xf]
        %v2757 = vld [vmem:[%s2696 + $0xf0] sm:$0xf]
        %v2758 = vld [vmem:[%s2696 + $0xf4] sm:$0xf]
        %v2759 = vld [vmem:[%s2696 + $0xf8] sm:$0xf]
        %v2760 = vld [vmem:[%s2696 + $0xfc] sm:$0xf]
        %v2761 = vld [vmem:[%s2696 + $0x100] sm:$0xf]
        %v2762 = vld [vmem:[%s2696 + $0x104] sm:$0xf]
        %v2763 = vld [vmem:[%s2696 + $0x108] sm:$0xf]
        %v2764 = vld [vmem:[%s2696 + $0x10c] sm:$0xf]
        %v2765 = vld [vmem:[%s2696 + $0x110] sm:$0xf]
        %v2766 = vld [vmem:[%s2696 + $0x114] sm:$0xf]
        %v2767 = vld [vmem:[%s2696 + $0x118] sm:$0xf]
        %v2768 = vld [vmem:[%s2696 + $0x11c] sm:$0xf]
        %v2769 = vld [vmem:[%s2696 + $0x120] sm:$0xf]
        %v2770 = vld [vmem:[%s2696 + $0x124] sm:$0xf]
        %v2771 = vld [vmem:[%s2696 + $0x128] sm:$0xf]
        %v2772 = vld [vmem:[%s2696 + $0x12c] sm:$0xf]
        %v2773 = vld [vmem:[%s2696 + $0x130] sm:$0xf]
        %v2774 = vld [vmem:[%s2696 + $0x134] sm:$0xf]
        %v2775 = vld [vmem:[%s2696 + $0x138] sm:$0xf]
        %v2776 = vld [vmem:[%s2696 + $0x13c] sm:$0xf]
        %v2777 = vld [vmem:[%s2696 + $0x140] sm:$0xf]
        %v2778 = vld [vmem:[%s2696 + $0x144] sm:$0xf]
        %v2779 = vld [vmem:[%s2696 + $0x148] sm:$0xf]
        %v2780 = vld [vmem:[%s2696 + $0x14c] sm:$0xf]
        %v2781 = vld [vmem:[%s2696 + $0x150] sm:$0xf]
        %v2782 = vld [vmem:[%s2696 + $0x154] sm:$0xf]
        %v2783 = vld [vmem:[%s2696 + $0x158] sm:$0xf]
        %v2784 = vld [vmem:[%s2696 + $0x15c] sm:$0xf]
        %v2785 = vld [vmem:[%s2696 + $0x160] sm:$0xf]
        %v2786 = vld [vmem:[%s2696 + $0x164] sm:$0xf]
        %v2787 = vld [vmem:[%s2696 + $0x168] sm:$0xf]
        %v2788 = vld [vmem:[%s2696 + $0x16c] sm:$0xf]
        %v2789 = vld [vmem:[%s2696 + $0x170] sm:$0xf]
        %v2790 = vld [vmem:[%s2696 + $0x174] sm:$0xf]
        %v2791 = vld [vmem:[%s2696 + $0x178] sm:$0xf]
        %v2792 = vld [vmem:[%s2696 + $0x17c] sm:$0xf]
        %v2793 = vld [vmem:[%s2696 + $0x180] sm:$0xf]
        %v2794 = vld [vmem:[%s2696 + $0x184] sm:$0xf]
        %v2795 = vld [vmem:[%s2696 + $0x188] sm:$0xf]
        %v2796 = vld [vmem:[%s2696 + $0x18c] sm:$0xf]
        %v2797 = vld [vmem:[%s2696 + $0x190] sm:$0xf]
        %v2798 = vld [vmem:[%s2696 + $0x194] sm:$0xf]
        %v2799 = vld [vmem:[%s2696 + $0x198] sm:$0xf]
        %v2800 = vld [vmem:[%s2696 + $0x19c] sm:$0xf]
        %v2801 = vld [vmem:[%s2696 + $0x1a0] sm:$0xf]
        %v2802 = vld [vmem:[%s2696 + $0x1a4] sm:$0xf]
        %v2803 = vld [vmem:[%s2696 + $0x1a8] sm:$0xf]
        %v2804 = vld [vmem:[%s2696 + $0x1ac] sm:$0xf]
        %v2805 = vld [vmem:[%s2696 + $0x1b0] sm:$0xf]
        %v2806 = vld [vmem:[%s2696 + $0x1b4] sm:$0xf]
        %v2807 = vld [vmem:[%s2696 + $0x1b8] sm:$0xf]
        %v2808 = vld [vmem:[%s2696 + $0x1bc] sm:$0xf]
        %v2809 = vld [vmem:[%s2696 + $0x1c0] sm:$0xf]
        %v2810 = vld [vmem:[%s2696 + $0x1c4] sm:$0xf]
        %v2811 = vld [vmem:[%s2696 + $0x1c8] sm:$0xf]
        %v2812 = vld [vmem:[%s2696 + $0x1cc] sm:$0xf]
        %v2813 = vld [vmem:[%s2696 + $0x1d0] sm:$0xf]
        %v2814 = vld [vmem:[%s2696 + $0x1d4] sm:$0xf]
        %v2815 = vld [vmem:[%s2696 + $0x1d8] sm:$0xf]
        %v2816 = vld [vmem:[%s2696 + $0x1dc] sm:$0xf]
        %v2817 = vld [vmem:[%s2696 + $0x1e0] sm:$0xf]
        %v2818 = vld [vmem:[%s2696 + $0x1e4] sm:$0xf]
        %v2819 = vld [vmem:[%s2696 + $0x1e8] sm:$0xf]
        %v2820 = vld [vmem:[%s2696 + $0x1ec] sm:$0xf]
        %v2821 = vld [vmem:[%s2696 + $0x1f0] sm:$0xf]
        %v2822 = vld [vmem:[%s2696 + $0x1f4] sm:$0xf]
        %v2823 = vld [vmem:[%s2696 + $0x1f8] sm:$0xf]
        %v2824 = vld [vmem:[%s2696 + $0x1fc] sm:$0xf]
        %v2833 = vunpack.c.l.b16 %v2697
        %v2834 = vunpack.c.l.b16 %v2698
        %v2835 = vunpack.c.l.b16 %v2699
        %v2836 = vunpack.c.l.b16 %v2700
        %v2837 = vunpack.c.l.b16 %v2701
        %v2838 = vunpack.c.l.b16 %v2702
        %v2839 = vunpack.c.l.b16 %v2703
        %v2840 = vunpack.c.l.b16 %v2704
        %v2841 = vpack.c.b16 %v2834, %v2833
        %v2842 = vpack.c.b16 %v2836, %v2835
        %v2843 = vpack.c.b16 %v2838, %v2837
        %v2844 = vpack.c.b16 %v2840, %v2839
        %v2850 = vsel %vm995, %v2680, 0
        %2852 = vmatprep.subr.bf16.mxu0 0
        %2853 = vmatpush1.bf16.msra.mxu0 %v2841
        %2854 = vmatprep.subr.bf16.mxu0 0
        %2855 = vmatpush1.bf16.msra.mxu0 %v2842
        %2856 = vmatprep.subr.bf16.mxu0 0
        %2857 = vmatpush1.bf16.msra.mxu0 %v2843
        %2858 = vmatprep.subr.bf16.mxu0 0
        %2859 = vmatpush1.bf16.msra.mxu0 %v2844
        %2860 = vmatprep.subr.bf16.mxu0 0
        %2861 = vmatpush1.bf16.msra.mxu0 0
        %2862 = vmatprep.subr.bf16.mxu0 0
        %2863 = vmatpush1.bf16.msra.mxu0 0
        %2864 = vmatprep.subr.bf16.mxu0 0
        %2865 = vmatpush1.bf16.msra.mxu0 0
        %2866 = vmatprep.subr.bf16.mxu0 0
        %2867 = vmatpush1.bf16.msra.mxu0 0
        %2868 = vmatprep.subr.bf16.mxu0 0
        %2869 = vmatpush1.bf16.msra.mxu0 0
        %2870 = vmatprep.subr.bf16.mxu0 0
        %2871 = vmatpush1.bf16.msra.mxu0 0
        %2872 = vmatprep.subr.bf16.mxu0 0
        %2873 = vmatpush1.bf16.msra.mxu0 0
        %2874 = vmatprep.subr.bf16.mxu0 0
        %2875 = vmatpush1.bf16.msra.mxu0 0
        %2876 = vmatprep.subr.bf16.mxu0 0
        %2877 = vmatpush1.bf16.msra.mxu0 0
        %2878 = vmatprep.subr.bf16.mxu0 0
        %2879 = vmatpush1.bf16.msra.mxu0 0
        %2880 = vmatprep.subr.bf16.mxu0 0
        %2881 = vmatpush1.bf16.msra.mxu0 0
        %2882 = vmatprep.subr.bf16.mxu0 0
        %2883 = vmatpush1.bf16.msra.mxu0 0
        %2884 = vmatprep.mubr.bf16.mxu0 0
        %2885 = vmatmul.mubr.bf16.gmra.mrb[0].mxu0 %v2850
        %v2886 = vpop.f32.mrb[0].mxu0
        %v2887 = vadd.f32 0.0, %v2886
        %v2888 = vpop.f32.mrb[0].mxu0
        %v2889 = vpop.f32.mrb[0].mxu0
        %v2890 = vpop.f32.mrb[0].mxu0
        %2891 = vdwg.mxu0
        %v2900 = vunpack.c.l.b16 %v2705
        %v2901 = vunpack.c.l.b16 %v2706
        %v2902 = vunpack.c.l.b16 %v2707
        %v2903 = vunpack.c.l.b16 %v2708
        %v2904 = vunpack.c.l.b16 %v2709
        %v2905 = vunpack.c.l.b16 %v2710
        %v2906 = vunpack.c.l.b16 %v2711
        %v2907 = vunpack.c.l.b16 %v2712
        %v2908 = vpack.c.b16 %v2901, %v2900
        %v2909 = vpack.c.b16 %v2903, %v2902
        %v2910 = vpack.c.b16 %v2905, %v2904
        %v2911 = vpack.c.b16 %v2907, %v2906
        %v2917 = vsel %vm995, %v2681, 0
        %2919 = vmatprep.subr.bf16.mxu0 0
        %2920 = vmatpush1.bf16.msra.mxu0 %v2908
        %2921 = vmatprep.subr.bf16.mxu0 0
        %2922 = vmatpush1.bf16.msra.mxu0 %v2909
        %2923 = vmatprep.subr.bf16.mxu0 0
        %2924 = vmatpush1.bf16.msra.mxu0 %v2910
        %2925 = vmatprep.subr.bf16.mxu0 0
        %2926 = vmatpush1.bf16.msra.mxu0 %v2911
        %2927 = vmatprep.subr.bf16.mxu0 0
        %2928 = vmatpush1.bf16.msra.mxu0 0
        %2929 = vmatprep.subr.bf16.mxu0 0
        %2930 = vmatpush1.bf16.msra.mxu0 0
        %2931 = vmatprep.subr.bf16.mxu0 0
        %2932 = vmatpush1.bf16.msra.mxu0 0
        %2933 = vmatprep.subr.bf16.mxu0 0
        %2934 = vmatpush1.bf16.msra.mxu0 0
        %2935 = vmatprep.subr.bf16.mxu0 0
        %2936 = vmatpush1.bf16.msra.mxu0 0
        %2937 = vmatprep.subr.bf16.mxu0 0
        %2938 = vmatpush1.bf16.msra.mxu0 0
        %2939 = vmatprep.subr.bf16.mxu0 0
        %2940 = vmatpush1.bf16.msra.mxu0 0
        %2941 = vmatprep.subr.bf16.mxu0 0
        %2942 = vmatpush1.bf16.msra.mxu0 0
        %2943 = vmatprep.subr.bf16.mxu0 0
        %2944 = vmatpush1.bf16.msra.mxu0 0
        %2945 = vmatprep.subr.bf16.mxu0 0
        %2946 = vmatpush1.bf16.msra.mxu0 0
        %2947 = vmatprep.subr.bf16.mxu0 0
        %2948 = vmatpush1.bf16.msra.mxu0 0
        %2949 = vmatprep.subr.bf16.mxu0 0
        %2950 = vmatpush1.bf16.msra.mxu0 0
        %2951 = vmatprep.mubr.bf16.mxu0 0
        %2952 = vmatmul.mubr.bf16.gmra.mrb[0].mxu0 %v2917
        %v2953 = vpop.f32.mrb[0].mxu0
        %v2954 = vadd.f32 0.0, %v2953
        %v2955 = vpop.f32.mrb[0].mxu0
        %v2956 = vpop.f32.mrb[0].mxu0
        %v2957 = vpop.f32.mrb[0].mxu0
        %2958 = vdwg.mxu0
        %v2967 = vunpack.c.l.b16 %v2713
        %v2968 = vunpack.c.l.b16 %v2714
        %v2969 = vunpack.c.l.b16 %v2715
        %v2970 = vunpack.c.l.b16 %v2716
        %v2971 = vunpack.c.l.b16 %v2717
        %v2972 = vunpack.c.l.b16 %v2718
        %v2973 = vunpack.c.l.b16 %v2719
        %v2974 = vunpack.c.l.b16 %v2720
        %v2975 = vpack.c.b16 %v2968, %v2967
        %v2976 = vpack.c.b16 %v2970, %v2969
        %v2977 = vpack.c.b16 %v2972, %v2971
        %v2978 = vpack.c.b16 %v2974, %v2973
        %v2984 = vsel %vm995, %v2682, 0
        %2986 = vmatprep.subr.bf16.mxu0 0
        %2987 = vmatpush1.bf16.msra.mxu0 %v2975
        %2988 = vmatprep.subr.bf16.mxu0 0
        %2989 = vmatpush1.bf16.msra.mxu0 %v2976
        %2990 = vmatprep.subr.bf16.mxu0 0
        %2991 = vmatpush1.bf16.msra.mxu0 %v2977
        %2992 = vmatprep.subr.bf16.mxu0 0
        %2993 = vmatpush1.bf16.msra.mxu0 %v2978
        %2994 = vmatprep.subr.bf16.mxu0 0
        %2995 = vmatpush1.bf16.msra.mxu0 0
        %2996 = vmatprep.subr.bf16.mxu0 0
        %2997 = vmatpush1.bf16.msra.mxu0 0
        %2998 = vmatprep.subr.bf16.mxu0 0
        %2999 = vmatpush1.bf16.msra.mxu0 0
        %3000 = vmatprep.subr.bf16.mxu0 0
        %3001 = vmatpush1.bf16.msra.mxu0 0
        %3002 = vmatprep.subr.bf16.mxu0 0
        %3003 = vmatpush1.bf16.msra.mxu0 0
        %3004 = vmatprep.subr.bf16.mxu0 0
        %3005 = vmatpush1.bf16.msra.mxu0 0
        %3006 = vmatprep.subr.bf16.mxu0 0
        %3007 = vmatpush1.bf16.msra.mxu0 0
        %3008 = vmatprep.subr.bf16.mxu0 0
        %3009 = vmatpush1.bf16.msra.mxu0 0
        %3010 = vmatprep.subr.bf16.mxu0 0
        %3011 = vmatpush1.bf16.msra.mxu0 0
        %3012 = vmatprep.subr.bf16.mxu0 0
        %3013 = vmatpush1.bf16.msra.mxu0 0
        %3014 = vmatprep.subr.bf16.mxu0 0
        %3015 = vmatpush1.bf16.msra.mxu0 0
        %3016 = vmatprep.subr.bf16.mxu0 0
        %3017 = vmatpush1.bf16.msra.mxu0 0
        %3018 = vmatprep.mubr.bf16.mxu0 0
        %3019 = vmatmul.mubr.bf16.gmra.mrb[0].mxu0 %v2984
        %v3020 = vpop.f32.mrb[0].mxu0
        %v3021 = vadd.f32 0.0, %v3020
        %v3022 = vpop.f32.mrb[0].mxu0
        %v3023 = vpop.f32.mrb[0].mxu0
        %v3024 = vpop.f32.mrb[0].mxu0
        %3025 = vdwg.mxu0
        %v3034 = vunpack.c.l.b16 %v2721
        %v3035 = vunpack.c.l.b16 %v2722
        %v3036 = vunpack.c.l.b16 %v2723
        %v3037 = vunpack.c.l.b16 %v2724
        %v3038 = vunpack.c.l.b16 %v2725
        %v3039 = vunpack.c.l.b16 %v2726
        %v3040 = vunpack.c.l.b16 %v2727
        %v3041 = vunpack.c.l.b16 %v2728
        %v3042 = vpack.c.b16 %v3035, %v3034
        %v3043 = vpack.c.b16 %v3037, %v3036
        %v3044 = vpack.c.b16 %v3039, %v3038
        %v3045 = vpack.c.b16 %v3041, %v3040
        %v3051 = vsel %vm995, %v2683, 0
        %3053 = vmatprep.subr.bf16.mxu0 0
        %3054 = vmatpush1.bf16.msra.mxu0 %v3042
        %3055 = vmatprep.subr.bf16.mxu0 0
        %3056 = vmatpush1.bf16.msra.mxu0 %v3043
        %3057 = vmatprep.subr.bf16.mxu0 0
        %3058 = vmatpush1.bf16.msra.mxu0 %v3044
        %3059 = vmatprep.subr.bf16.mxu0 0
        %3060 = vmatpush1.bf16.msra.mxu0 %v3045
        %3061 = vmatprep.subr.bf16.mxu0 0
        %3062 = vmatpush1.bf16.msra.mxu0 0
        %3063 = vmatprep.subr.bf16.mxu0 0
        %3064 = vmatpush1.bf16.msra.mxu0 0
        %3065 = vmatprep.subr.bf16.mxu0 0
        %3066 = vmatpush1.bf16.msra.mxu0 0
        %3067 = vmatprep.subr.bf16.mxu0 0
        %3068 = vmatpush1.bf16.msra.mxu0 0
        %3069 = vmatprep.subr.bf16.mxu0 0
        %3070 = vmatpush1.bf16.msra.mxu0 0
        %3071 = vmatprep.subr.bf16.mxu0 0
        %3072 = vmatpush1.bf16.msra.mxu0 0
        %3073 = vmatprep.subr.bf16.mxu0 0
        %3074 = vmatpush1.bf16.msra.mxu0 0
        %3075 = vmatprep.subr.bf16.mxu0 0
        %3076 = vmatpush1.bf16.msra.mxu0 0
        %3077 = vmatprep.subr.bf16.mxu0 0
        %3078 = vmatpush1.bf16.msra.mxu0 0
        %3079 = vmatprep.subr.bf16.mxu0 0
        %3080 = vmatpush1.bf16.msra.mxu0 0
        %3081 = vmatprep.subr.bf16.mxu0 0
        %3082 = vmatpush1.bf16.msra.mxu0 0
        %3083 = vmatprep.subr.bf16.mxu0 0
        %3084 = vmatpush1.bf16.msra.mxu0 0
        %3085 = vmatprep.mubr.bf16.mxu0 0
        %3086 = vmatmul.mubr.bf16.gmra.mrb[0].mxu0 %v3051
        %v3087 = vpop.f32.mrb[0].mxu0
        %v3088 = vadd.f32 0.0, %v3087
        %v3089 = vpop.f32.mrb[0].mxu0
        %v3090 = vpop.f32.mrb[0].mxu0
        %v3091 = vpop.f32.mrb[0].mxu0
        %3092 = vdwg.mxu0
        %v3101 = vunpack.c.l.b16 %v2729
        %v3102 = vunpack.c.l.b16 %v2730
        %v3103 = vunpack.c.l.b16 %v2731
        %v3104 = vunpack.c.l.b16 %v2732
        %v3105 = vunpack.c.l.b16 %v2733
        %v3106 = vunpack.c.l.b16 %v2734
        %v3107 = vunpack.c.l.b16 %v2735
        %v3108 = vunpack.c.l.b16 %v2736
        %v3109 = vpack.c.b16 %v3102, %v3101
        %v3110 = vpack.c.b16 %v3104, %v3103
        %v3111 = vpack.c.b16 %v3106, %v3105
        %v3112 = vpack.c.b16 %v3108, %v3107
        %v3118 = vsel %vm995, %v2684, 0
        %3120 = vmatprep.subr.bf16.mxu0 0
        %3121 = vmatpush1.bf16.msra.mxu0 %v3109
        %3122 = vmatprep.subr.bf16.mxu0 0
        %3123 = vmatpush1.bf16.msra.mxu0 %v3110
        %3124 = vmatprep.subr.bf16.mxu0 0
        %3125 = vmatpush1.bf16.msra.mxu0 %v3111
        %3126 = vmatprep.subr.bf16.mxu0 0
        %3127 = vmatpush1.bf16.msra.mxu0 %v3112
        %3128 = vmatprep.subr.bf16.mxu0 0
        %3129 = vmatpush1.bf16.msra.mxu0 0
        %3130 = vmatprep.subr.bf16.mxu0 0
        %3131 = vmatpush1.bf16.msra.mxu0 0
        %3132 = vmatprep.subr.bf16.mxu0 0
        %3133 = vmatpush1.bf16.msra.mxu0 0
        %3134 = vmatprep.subr.bf16.mxu0 0
        %3135 = vmatpush1.bf16.msra.mxu0 0
        %3136 = vmatprep.subr.bf16.mxu0 0
        %3137 = vmatpush1.bf16.msra.mxu0 0
        %3138 = vmatprep.subr.bf16.mxu0 0
        %3139 = vmatpush1.bf16.msra.mxu0 0
        %3140 = vmatprep.subr.bf16.mxu0 0
        %3141 = vmatpush1.bf16.msra.mxu0 0
        %3142 = vmatprep.subr.bf16.mxu0 0
        %3143 = vmatpush1.bf16.msra.mxu0 0
        %3144 = vmatprep.subr.bf16.mxu0 0
        %3145 = vmatpush1.bf16.msra.mxu0 0
        %3146 = vmatprep.subr.bf16.mxu0 0
        %3147 = vmatpush1.bf16.msra.mxu0 0
        %3148 = vmatprep.subr.bf16.mxu0 0
        %3149 = vmatpush1.bf16.msra.mxu0 0
        %3150 = vmatprep.subr.bf16.mxu0 0
        %3151 = vmatpush1.bf16.msra.mxu0 0
        %3152 = vmatprep.mubr.bf16.mxu0 0
        %3153 = vmatmul.mubr.bf16.gmra.mrb[0].mxu0 %v3118
        %v3154 = vpop.f32.mrb[0].mxu0
        %v3155 = vadd.f32 0.0, %v3154
        %v3156 = vpop.f32.mrb[0].mxu0
        %v3157 = vpop.f32.mrb[0].mxu0
        %v3158 = vpop.f32.mrb[0].mxu0
        %3159 = vdwg.mxu0
        %v3168 = vunpack.c.l.b16 %v2737
        %v3169 = vunpack.c.l.b16 %v2738
        %v3170 = vunpack.c.l.b16 %v2739
        %v3171 = vunpack.c.l.b16 %v2740
        %v3172 = vunpack.c.l.b16 %v2741
        %v3173 = vunpack.c.l.b16 %v2742
        %v3174 = vunpack.c.l.b16 %v2743
        %v3175 = vunpack.c.l.b16 %v2744
        %v3176 = vpack.c.b16 %v3169, %v3168
        %v3177 = vpack.c.b16 %v3171, %v3170
        %v3178 = vpack.c.b16 %v3173, %v3172
        %v3179 = vpack.c.b16 %v3175, %v3174
        %v3185 = vsel %vm995, %v2685, 0
        %3187 = vmatprep.subr.bf16.mxu0 0
        %3188 = vmatpush1.bf16.msra.mxu0 %v3176
        %3189 = vmatprep.subr.bf16.mxu0 0
        %3190 = vmatpush1.bf16.msra.mxu0 %v3177
        %3191 = vmatprep.subr.bf16.mxu0 0
        %3192 = vmatpush1.bf16.msra.mxu0 %v3178
        %3193 = vmatprep.subr.bf16.mxu0 0
        %3194 = vmatpush1.bf16.msra.mxu0 %v3179
        %3195 = vmatprep.subr.bf16.mxu0 0
        %3196 = vmatpush1.bf16.msra.mxu0 0
        %3197 = vmatprep.subr.bf16.mxu0 0
        %3198 = vmatpush1.bf16.msra.mxu0 0
        %3199 = vmatprep.subr.bf16.mxu0 0
        %3200 = vmatpush1.bf16.msra.mxu0 0
        %3201 = vmatprep.subr.bf16.mxu0 0
        %3202 = vmatpush1.bf16.msra.mxu0 0
        %3203 = vmatprep.subr.bf16.mxu0 0
        %3204 = vmatpush1.bf16.msra.mxu0 0
        %3205 = vmatprep.subr.bf16.mxu0 0
        %3206 = vmatpush1.bf16.msra.mxu0 0
        %3207 = vmatprep.subr.bf16.mxu0 0
        %3208 = vmatpush1.bf16.msra.mxu0 0
        %3209 = vmatprep.subr.bf16.mxu0 0
        %3210 = vmatpush1.bf16.msra.mxu0 0
        %3211 = vmatprep.subr.bf16.mxu0 0
        %3212 = vmatpush1.bf16.msra.mxu0 0
        %3213 = vmatprep.subr.bf16.mxu0 0
        %3214 = vmatpush1.bf16.msra.mxu0 0
        %3215 = vmatprep.subr.bf16.mxu0 0
        %3216 = vmatpush1.bf16.msra.mxu0 0
        %3217 = vmatprep.subr.bf16.mxu0 0
        %3218 = vmatpush1.bf16.msra.mxu0 0
        %3219 = vmatprep.mubr.bf16.mxu0 0
        %3220 = vmatmul.mubr.bf16.gmra.mrb[0].mxu0 %v3185
        %v3221 = vpop.f32.mrb[0].mxu0
        %v3222 = vadd.f32 0.0, %v3221
        %v3223 = vpop.f32.mrb[0].mxu0
        %v3224 = vpop.f32.mrb[0].mxu0
        %v3225 = vpop.f32.mrb[0].mxu0
        %3226 = vdwg.mxu0
        %v3235 = vunpack.c.l.b16 %v2745
        %v3236 = vunpack.c.l.b16 %v2746
        %v3237 = vunpack.c.l.b16 %v2747
        %v3238 = vunpack.c.l.b16 %v2748
        %v3239 = vunpack.c.l.b16 %v2749
        %v3240 = vunpack.c.l.b16 %v2750
        %v3241 = vunpack.c.l.b16 %v2751
        %v3242 = vunpack.c.l.b16 %v2752
        %v3243 = vpack.c.b16 %v3236, %v3235
        %v3244 = vpack.c.b16 %v3238, %v3237
        %v3245 = vpack.c.b16 %v3240, %v3239
        %v3246 = vpack.c.b16 %v3242, %v3241
        %v3252 = vsel %vm995, %v2686, 0
        %3254 = vmatprep.subr.bf16.mxu0 0
        %3255 = vmatpush1.bf16.msra.mxu0 %v3243
        %3256 = vmatprep.subr.bf16.mxu0 0
        %3257 = vmatpush1.bf16.msra.mxu0 %v3244
        %3258 = vmatprep.subr.bf16.mxu0 0
        %3259 = vmatpush1.bf16.msra.mxu0 %v3245
        %3260 = vmatprep.subr.bf16.mxu0 0
        %3261 = vmatpush1.bf16.msra.mxu0 %v3246
        %3262 = vmatprep.subr.bf16.mxu0 0
        %3263 = vmatpush1.bf16.msra.mxu0 0
        %3264 = vmatprep.subr.bf16.mxu0 0
        %3265 = vmatpush1.bf16.msra.mxu0 0
        %3266 = vmatprep.subr.bf16.mxu0 0
        %3267 = vmatpush1.bf16.msra.mxu0 0
        %3268 = vmatprep.subr.bf16.mxu0 0
        %3269 = vmatpush1.bf16.msra.mxu0 0
        %3270 = vmatprep.subr.bf16.mxu0 0
        %3271 = vmatpush1.bf16.msra.mxu0 0
        %3272 = vmatprep.subr.bf16.mxu0 0
        %3273 = vmatpush1.bf16.msra.mxu0 0
        %3274 = vmatprep.subr.bf16.mxu0 0
        %3275 = vmatpush1.bf16.msra.mxu0 0
        %3276 = vmatprep.subr.bf16.mxu0 0
        %3277 = vmatpush1.bf16.msra.mxu0 0
        %3278 = vmatprep.subr.bf16.mxu0 0
        %3279 = vmatpush1.bf16.msra.mxu0 0
        %3280 = vmatprep.subr.bf16.mxu0 0
        %3281 = vmatpush1.bf16.msra.mxu0 0
        %3282 = vmatprep.subr.bf16.mxu0 0
        %3283 = vmatpush1.bf16.msra.mxu0 0
        %3284 = vmatprep.subr.bf16.mxu0 0
        %3285 = vmatpush1.bf16.msra.mxu0 0
        %3286 = vmatprep.mubr.bf16.mxu0 0
        %3287 = vmatmul.mubr.bf16.gmra.mrb[0].mxu0 %v3252
        %v3288 = vpop.f32.mrb[0].mxu0
        %v3289 = vadd.f32 0.0, %v3288
        %v3290 = vpop.f32.mrb[0].mxu0
        %v3291 = vpop.f32.mrb[0].mxu0
        %v3292 = vpop.f32.mrb[0].mxu0
        %3293 = vdwg.mxu0
        %v3302 = vunpack.c.l.b16 %v2753
        %v3303 = vunpack.c.l.b16 %v2754
        %v3304 = vunpack.c.l.b16 %v2755
        %v3305 = vunpack.c.l.b16 %v2756
        %v3306 = vunpack.c.l.b16 %v2757
        %v3307 = vunpack.c.l.b16 %v2758
        %v3308 = vunpack.c.l.b16 %v2759
        %v3309 = vunpack.c.l.b16 %v2760
        %v3310 = vpack.c.b16 %v3303, %v3302
        %v3311 = vpack.c.b16 %v3305, %v3304
        %v3312 = vpack.c.b16 %v3307, %v3306
        %v3313 = vpack.c.b16 %v3309, %v3308
        %v3319 = vsel %vm995, %v2687, 0
        %3321 = vmatprep.subr.bf16.mxu0 0
        %3322 = vmatpush1.bf16.msra.mxu0 %v3310
        %3323 = vmatprep.subr.bf16.mxu0 0
        %3324 = vmatpush1.bf16.msra.mxu0 %v3311
        %3325 = vmatprep.subr.bf16.mxu0 0
        %3326 = vmatpush1.bf16.msra.mxu0 %v3312
        %3327 = vmatprep.subr.bf16.mxu0 0
        %3328 = vmatpush1.bf16.msra.mxu0 %v3313
        %3329 = vmatprep.subr.bf16.mxu0 0
        %3330 = vmatpush1.bf16.msra.mxu0 0
        %3331 = vmatprep.subr.bf16.mxu0 0
        %3332 = vmatpush1.bf16.msra.mxu0 0
        %3333 = vmatprep.subr.bf16.mxu0 0
        %3334 = vmatpush1.bf16.msra.mxu0 0
        %3335 = vmatprep.subr.bf16.mxu0 0
        %3336 = vmatpush1.bf16.msra.mxu0 0
        %3337 = vmatprep.subr.bf16.mxu0 0
        %3338 = vmatpush1.bf16.msra.mxu0 0
        %3339 = vmatprep.subr.bf16.mxu0 0
        %3340 = vmatpush1.bf16.msra.mxu0 0
        %3341 = vmatprep.subr.bf16.mxu0 0
        %3342 = vmatpush1.bf16.msra.mxu0 0
        %3343 = vmatprep.subr.bf16.mxu0 0
        %3344 = vmatpush1.bf16.msra.mxu0 0
        %3345 = vmatprep.subr.bf16.mxu0 0
        %3346 = vmatpush1.bf16.msra.mxu0 0
        %3347 = vmatprep.subr.bf16.mxu0 0
        %3348 = vmatpush1.bf16.msra.mxu0 0
        %3349 = vmatprep.subr.bf16.mxu0 0
        %3350 = vmatpush1.bf16.msra.mxu0 0
        %3351 = vmatprep.subr.bf16.mxu0 0
        %3352 = vmatpush1.bf16.msra.mxu0 0
        %3353 = vmatprep.mubr.bf16.mxu0 0
        %3354 = vmatmul.mubr.bf16.gmra.mrb[0].mxu0 %v3319
        %v3355 = vpop.f32.mrb[0].mxu0
        %v3356 = vadd.f32 0.0, %v3355
        %v3357 = vpop.f32.mrb[0].mxu0
        %v3358 = vpop.f32.mrb[0].mxu0
        %v3359 = vpop.f32.mrb[0].mxu0
        %3360 = vdwg.mxu0
        %v3369 = vunpack.c.l.b16 %v2761
        %v3370 = vunpack.c.l.b16 %v2762
        %v3371 = vunpack.c.l.b16 %v2763
        %v3372 = vunpack.c.l.b16 %v2764
        %v3373 = vunpack.c.l.b16 %v2765
        %v3374 = vunpack.c.l.b16 %v2766
        %v3375 = vunpack.c.l.b16 %v2767
        %v3376 = vunpack.c.l.b16 %v2768
        %v3377 = vpack.c.b16 %v3370, %v3369
        %v3378 = vpack.c.b16 %v3372, %v3371
        %v3379 = vpack.c.b16 %v3374, %v3373
        %v3380 = vpack.c.b16 %v3376, %v3375
        %v3386 = vsel %vm995, %v2688, 0
        %3388 = vmatprep.subr.bf16.mxu0 0
        %3389 = vmatpush1.bf16.msra.mxu0 %v3377
        %3390 = vmatprep.subr.bf16.mxu0 0
        %3391 = vmatpush1.bf16.msra.mxu0 %v3378
        %3392 = vmatprep.subr.bf16.mxu0 0
        %3393 = vmatpush1.bf16.msra.mxu0 %v3379
        %3394 = vmatprep.subr.bf16.mxu0 0
        %3395 = vmatpush1.bf16.msra.mxu0 %v3380
        %3396 = vmatprep.subr.bf16.mxu0 0
        %3397 = vmatpush1.bf16.msra.mxu0 0
        %3398 = vmatprep.subr.bf16.mxu0 0
        %3399 = vmatpush1.bf16.msra.mxu0 0
        %3400 = vmatprep.subr.bf16.mxu0 0
        %3401 = vmatpush1.bf16.msra.mxu0 0
        %3402 = vmatprep.subr.bf16.mxu0 0
        %3403 = vmatpush1.bf16.msra.mxu0 0
        %3404 = vmatprep.subr.bf16.mxu0 0
        %3405 = vmatpush1.bf16.msra.mxu0 0
        %3406 = vmatprep.subr.bf16.mxu0 0
        %3407 = vmatpush1.bf16.msra.mxu0 0
        %3408 = vmatprep.subr.bf16.mxu0 0
        %3409 = vmatpush1.bf16.msra.mxu0 0
        %3410 = vmatprep.subr.bf16.mxu0 0
        %3411 = vmatpush1.bf16.msra.mxu0 0
        %3412 = vmatprep.subr.bf16.mxu0 0
        %3413 = vmatpush1.bf16.msra.mxu0 0
        %3414 = vmatprep.subr.bf16.mxu0 0
        %3415 = vmatpush1.bf16.msra.mxu0 0
        %3416 = vmatprep.subr.bf16.mxu0 0
        %3417 = vmatpush1.bf16.msra.mxu0 0
        %3418 = vmatprep.subr.bf16.mxu0 0
        %3419 = vmatpush1.bf16.msra.mxu0 0
        %3420 = vmatprep.mubr.bf16.mxu0 0
        %3421 = vmatmul.mubr.bf16.gmra.mrb[0].mxu0 %v3386
        %v3422 = vpop.f32.mrb[0].mxu0
        %v3423 = vadd.f32 0.0, %v3422
        %v3424 = vpop.f32.mrb[0].mxu0
        %v3425 = vpop.f32.mrb[0].mxu0
        %v3426 = vpop.f32.mrb[0].mxu0
        %3427 = vdwg.mxu0
        %v3436 = vunpack.c.l.b16 %v2769
        %v3437 = vunpack.c.l.b16 %v2770
        %v3438 = vunpack.c.l.b16 %v2771
        %v3439 = vunpack.c.l.b16 %v2772
        %v3440 = vunpack.c.l.b16 %v2773
        %v3441 = vunpack.c.l.b16 %v2774
        %v3442 = vunpack.c.l.b16 %v2775
        %v3443 = vunpack.c.l.b16 %v2776
        %v3444 = vpack.c.b16 %v3437, %v3436
        %v3445 = vpack.c.b16 %v3439, %v3438
        %v3446 = vpack.c.b16 %v3441, %v3440
        %v3447 = vpack.c.b16 %v3443, %v3442
        %v3453 = vsel %vm995, %v2689, 0
        %3455 = vmatprep.subr.bf16.mxu0 0
        %3456 = vmatpush1.bf16.msra.mxu0 %v3444
        %3457 = vmatprep.subr.bf16.mxu0 0
        %3458 = vmatpush1.bf16.msra.mxu0 %v3445
        %3459 = vmatprep.subr.bf16.mxu0 0
        %3460 = vmatpush1.bf16.msra.mxu0 %v3446
        %3461 = vmatprep.subr.bf16.mxu0 0
        %3462 = vmatpush1.bf16.msra.mxu0 %v3447
        %3463 = vmatprep.subr.bf16.mxu0 0
        %3464 = vmatpush1.bf16.msra.mxu0 0
        %3465 = vmatprep.subr.bf16.mxu0 0
        %3466 = vmatpush1.bf16.msra.mxu0 0
        %3467 = vmatprep.subr.bf16.mxu0 0
        %3468 = vmatpush1.bf16.msra.mxu0 0
        %3469 = vmatprep.subr.bf16.mxu0 0
        %3470 = vmatpush1.bf16.msra.mxu0 0
        %3471 = vmatprep.subr.bf16.mxu0 0
        %3472 = vmatpush1.bf16.msra.mxu0 0
        %3473 = vmatprep.subr.bf16.mxu0 0
        %3474 = vmatpush1.bf16.msra.mxu0 0
        %3475 = vmatprep.subr.bf16.mxu0 0
        %3476 = vmatpush1.bf16.msra.mxu0 0
        %3477 = vmatprep.subr.bf16.mxu0 0
        %3478 = vmatpush1.bf16.msra.mxu0 0
        %3479 = vmatprep.subr.bf16.mxu0 0
        %3480 = vmatpush1.bf16.msra.mxu0 0
        %3481 = vmatprep.subr.bf16.mxu0 0
        %3482 = vmatpush1.bf16.msra.mxu0 0
        %3483 = vmatprep.subr.bf16.mxu0 0
        %3484 = vmatpush1.bf16.msra.mxu0 0
        %3485 = vmatprep.subr.bf16.mxu0 0
        %3486 = vmatpush1.bf16.msra.mxu0 0
        %3487 = vmatprep.mubr.bf16.mxu0 0
        %3488 = vmatmul.mubr.bf16.gmra.mrb[0].mxu0 %v3453
        %v3489 = vpop.f32.mrb[0].mxu0
        %v3490 = vadd.f32 0.0, %v3489
        %v3491 = vpop.f32.mrb[0].mxu0
        %v3492 = vpop.f32.mrb[0].mxu0
        %v3493 = vpop.f32.mrb[0].mxu0
        %3494 = vdwg.mxu0
        %v3503 = vunpack.c.l.b16 %v2777
        %v3504 = vunpack.c.l.b16 %v2778
        %v3505 = vunpack.c.l.b16 %v2779
        %v3506 = vunpack.c.l.b16 %v2780
        %v3507 = vunpack.c.l.b16 %v2781
        %v3508 = vunpack.c.l.b16 %v2782
        %v3509 = vunpack.c.l.b16 %v2783
        %v3510 = vunpack.c.l.b16 %v2784
        %v3511 = vpack.c.b16 %v3504, %v3503
        %v3512 = vpack.c.b16 %v3506, %v3505
        %v3513 = vpack.c.b16 %v3508, %v3507
        %v3514 = vpack.c.b16 %v3510, %v3509
        %v3520 = vsel %vm995, %v2690, 0
        %3522 = vmatprep.subr.bf16.mxu0 0
        %3523 = vmatpush1.bf16.msra.mxu0 %v3511
        %3524 = vmatprep.subr.bf16.mxu0 0
        %3525 = vmatpush1.bf16.msra.mxu0 %v3512
        %3526 = vmatprep.subr.bf16.mxu0 0
        %3527 = vmatpush1.bf16.msra.mxu0 %v3513
        %3528 = vmatprep.subr.bf16.mxu0 0
        %3529 = vmatpush1.bf16.msra.mxu0 %v3514
        %3530 = vmatprep.subr.bf16.mxu0 0
        %3531 = vmatpush1.bf16.msra.mxu0 0
        %3532 = vmatprep.subr.bf16.mxu0 0
        %3533 = vmatpush1.bf16.msra.mxu0 0
        %3534 = vmatprep.subr.bf16.mxu0 0
        %3535 = vmatpush1.bf16.msra.mxu0 0
        %3536 = vmatprep.subr.bf16.mxu0 0
        %3537 = vmatpush1.bf16.msra.mxu0 0
        %3538 = vmatprep.subr.bf16.mxu0 0
        %3539 = vmatpush1.bf16.msra.mxu0 0
        %3540 = vmatprep.subr.bf16.mxu0 0
        %3541 = vmatpush1.bf16.msra.mxu0 0
        %3542 = vmatprep.subr.bf16.mxu0 0
        %3543 = vmatpush1.bf16.msra.mxu0 0
        %3544 = vmatprep.subr.bf16.mxu0 0
        %3545 = vmatpush1.bf16.msra.mxu0 0
        %3546 = vmatprep.subr.bf16.mxu0 0
        %3547 = vmatpush1.bf16.msra.mxu0 0
        %3548 = vmatprep.subr.bf16.mxu0 0
        %3549 = vmatpush1.bf16.msra.mxu0 0
        %3550 = vmatprep.subr.bf16.mxu0 0
        %3551 = vmatpush1.bf16.msra.mxu0 0
        %3552 = vmatprep.subr.bf16.mxu0 0
        %3553 = vmatpush1.bf16.msra.mxu0 0
        %3554 = vmatprep.mubr.bf16.mxu0 0
        %3555 = vmatmul.mubr.bf16.gmra.mrb[0].mxu0 %v3520
        %v3556 = vpop.f32.mrb[0].mxu0
        %v3557 = vadd.f32 0.0, %v3556
        %v3558 = vpop.f32.mrb[0].mxu0
        %v3559 = vpop.f32.mrb[0].mxu0
        %v3560 = vpop.f32.mrb[0].mxu0
        %3561 = vdwg.mxu0
        %v3570 = vunpack.c.l.b16 %v2785
        %v3571 = vunpack.c.l.b16 %v2786
        %v3572 = vunpack.c.l.b16 %v2787
        %v3573 = vunpack.c.l.b16 %v2788
        %v3574 = vunpack.c.l.b16 %v2789
        %v3575 = vunpack.c.l.b16 %v2790
        %v3576 = vunpack.c.l.b16 %v2791
        %v3577 = vunpack.c.l.b16 %v2792
        %v3578 = vpack.c.b16 %v3571, %v3570
        %v3579 = vpack.c.b16 %v3573, %v3572
        %v3580 = vpack.c.b16 %v3575, %v3574
        %v3581 = vpack.c.b16 %v3577, %v3576
        %v3587 = vsel %vm995, %v2691, 0
        %3589 = vmatprep.subr.bf16.mxu0 0
        %3590 = vmatpush1.bf16.msra.mxu0 %v3578
        %3591 = vmatprep.subr.bf16.mxu0 0
        %3592 = vmatpush1.bf16.msra.mxu0 %v3579
        %3593 = vmatprep.subr.bf16.mxu0 0
        %3594 = vmatpush1.bf16.msra.mxu0 %v3580
        %3595 = vmatprep.subr.bf16.mxu0 0
        %3596 = vmatpush1.bf16.msra.mxu0 %v3581
        %3597 = vmatprep.subr.bf16.mxu0 0
        %3598 = vmatpush1.bf16.msra.mxu0 0
        %3599 = vmatprep.subr.bf16.mxu0 0
        %3600 = vmatpush1.bf16.msra.mxu0 0
        %3601 = vmatprep.subr.bf16.mxu0 0
        %3602 = vmatpush1.bf16.msra.mxu0 0
        %3603 = vmatprep.subr.bf16.mxu0 0
        %3604 = vmatpush1.bf16.msra.mxu0 0
        %3605 = vmatprep.subr.bf16.mxu0 0
        %3606 = vmatpush1.bf16.msra.mxu0 0
        %3607 = vmatprep.subr.bf16.mxu0 0
        %3608 = vmatpush1.bf16.msra.mxu0 0
        %3609 = vmatprep.subr.bf16.mxu0 0
        %3610 = vmatpush1.bf16.msra.mxu0 0
        %3611 = vmatprep.subr.bf16.mxu0 0
        %3612 = vmatpush1.bf16.msra.mxu0 0
        %3613 = vmatprep.subr.bf16.mxu0 0
        %3614 = vmatpush1.bf16.msra.mxu0 0
        %3615 = vmatprep.subr.bf16.mxu0 0
        %3616 = vmatpush1.bf16.msra.mxu0 0
        %3617 = vmatprep.subr.bf16.mxu0 0
        %3618 = vmatpush1.bf16.msra.mxu0 0
        %3619 = vmatprep.subr.bf16.mxu0 0
        %3620 = vmatpush1.bf16.msra.mxu0 0
        %3621 = vmatprep.mubr.bf16.mxu0 0
        %3622 = vmatmul.mubr.bf16.gmra.mrb[0].mxu0 %v3587
        %v3623 = vpop.f32.mrb[0].mxu0
        %v3624 = vadd.f32 0.0, %v3623
        %v3625 = vpop.f32.mrb[0].mxu0
        %v3626 = vpop.f32.mrb[0].mxu0
        %v3627 = vpop.f32.mrb[0].mxu0
        %3628 = vdwg.mxu0
        %v3637 = vunpack.c.l.b16 %v2793
        %v3638 = vunpack.c.l.b16 %v2794
        %v3639 = vunpack.c.l.b16 %v2795
        %v3640 = vunpack.c.l.b16 %v2796
        %v3641 = vunpack.c.l.b16 %v2797
        %v3642 = vunpack.c.l.b16 %v2798
        %v3643 = vunpack.c.l.b16 %v2799
        %v3644 = vunpack.c.l.b16 %v2800
        %v3645 = vpack.c.b16 %v3638, %v3637
        %v3646 = vpack.c.b16 %v3640, %v3639
        %v3647 = vpack.c.b16 %v3642, %v3641
        %v3648 = vpack.c.b16 %v3644, %v3643
        %v3654 = vsel %vm995, %v2692, 0
        %3656 = vmatprep.subr.bf16.mxu0 0
        %3657 = vmatpush1.bf16.msra.mxu0 %v3645
        %3658 = vmatprep.subr.bf16.mxu0 0
        %3659 = vmatpush1.bf16.msra.mxu0 %v3646
        %3660 = vmatprep.subr.bf16.mxu0 0
        %3661 = vmatpush1.bf16.msra.mxu0 %v3647
        %3662 = vmatprep.subr.bf16.mxu0 0
        %3663 = vmatpush1.bf16.msra.mxu0 %v3648
        %3664 = vmatprep.subr.bf16.mxu0 0
        %3665 = vmatpush1.bf16.msra.mxu0 0
        %3666 = vmatprep.subr.bf16.mxu0 0
        %3667 = vmatpush1.bf16.msra.mxu0 0
        %3668 = vmatprep.subr.bf16.mxu0 0
        %3669 = vmatpush1.bf16.msra.mxu0 0
        %3670 = vmatprep.subr.bf16.mxu0 0
        %3671 = vmatpush1.bf16.msra.mxu0 0
        %3672 = vmatprep.subr.bf16.mxu0 0
        %3673 = vmatpush1.bf16.msra.mxu0 0
        %3674 = vmatprep.subr.bf16.mxu0 0
        %3675 = vmatpush1.bf16.msra.mxu0 0
        %3676 = vmatprep.subr.bf16.mxu0 0
        %3677 = vmatpush1.bf16.msra.mxu0 0
        %3678 = vmatprep.subr.bf16.mxu0 0
        %3679 = vmatpush1.bf16.msra.mxu0 0
        %3680 = vmatprep.subr.bf16.mxu0 0
        %3681 = vmatpush1.bf16.msra.mxu0 0
        %3682 = vmatprep.subr.bf16.mxu0 0
        %3683 = vmatpush1.bf16.msra.mxu0 0
        %3684 = vmatprep.subr.bf16.mxu0 0
        %3685 = vmatpush1.bf16.msra.mxu0 0
        %3686 = vmatprep.subr.bf16.mxu0 0
        %3687 = vmatpush1.bf16.msra.mxu0 0
        %3688 = vmatprep.mubr.bf16.mxu0 0
        %3689 = vmatmul.mubr.bf16.gmra.mrb[0].mxu0 %v3654
        %v3690 = vpop.f32.mrb[0].mxu0
        %v3691 = vadd.f32 0.0, %v3690
        %v3692 = vpop.f32.mrb[0].mxu0
        %v3693 = vpop.f32.mrb[0].mxu0
        %v3694 = vpop.f32.mrb[0].mxu0
        %3695 = vdwg.mxu0
        %v3704 = vunpack.c.l.b16 %v2801
        %v3705 = vunpack.c.l.b16 %v2802
        %v3706 = vunpack.c.l.b16 %v2803
        %v3707 = vunpack.c.l.b16 %v2804
        %v3708 = vunpack.c.l.b16 %v2805
        %v3709 = vunpack.c.l.b16 %v2806
        %v3710 = vunpack.c.l.b16 %v2807
        %v3711 = vunpack.c.l.b16 %v2808
        %v3712 = vpack.c.b16 %v3705, %v3704
        %v3713 = vpack.c.b16 %v3707, %v3706
        %v3714 = vpack.c.b16 %v3709, %v3708
        %v3715 = vpack.c.b16 %v3711, %v3710
        %v3721 = vsel %vm995, %v2693, 0
        %3723 = vmatprep.subr.bf16.mxu0 0
        %3724 = vmatpush1.bf16.msra.mxu0 %v3712
        %3725 = vmatprep.subr.bf16.mxu0 0
        %3726 = vmatpush1.bf16.msra.mxu0 %v3713
        %3727 = vmatprep.subr.bf16.mxu0 0
        %3728 = vmatpush1.bf16.msra.mxu0 %v3714
        %3729 = vmatprep.subr.bf16.mxu0 0
        %3730 = vmatpush1.bf16.msra.mxu0 %v3715
        %3731 = vmatprep.subr.bf16.mxu0 0
        %3732 = vmatpush1.bf16.msra.mxu0 0
        %3733 = vmatprep.subr.bf16.mxu0 0
        %3734 = vmatpush1.bf16.msra.mxu0 0
        %3735 = vmatprep.subr.bf16.mxu0 0
        %3736 = vmatpush1.bf16.msra.mxu0 0
        %3737 = vmatprep.subr.bf16.mxu0 0
        %3738 = vmatpush1.bf16.msra.mxu0 0
        %3739 = vmatprep.subr.bf16.mxu0 0
        %3740 = vmatpush1.bf16.msra.mxu0 0
        %3741 = vmatprep.subr.bf16.mxu0 0
        %3742 = vmatpush1.bf16.msra.mxu0 0
        %3743 = vmatprep.subr.bf16.mxu0 0
        %3744 = vmatpush1.bf16.msra.mxu0 0
        %3745 = vmatprep.subr.bf16.mxu0 0
        %3746 = vmatpush1.bf16.msra.mxu0 0
        %3747 = vmatprep.subr.bf16.mxu0 0
        %3748 = vmatpush1.bf16.msra.mxu0 0
        %3749 = vmatprep.subr.bf16.mxu0 0
        %3750 = vmatpush1.bf16.msra.mxu0 0
        %3751 = vmatprep.subr.bf16.mxu0 0
        %3752 = vmatpush1.bf16.msra.mxu0 0
        %3753 = vmatprep.subr.bf16.mxu0 0
        %3754 = vmatpush1.bf16.msra.mxu0 0
        %3755 = vmatprep.mubr.bf16.mxu0 0
        %3756 = vmatmul.mubr.bf16.gmra.mrb[0].mxu0 %v3721
        %v3757 = vpop.f32.mrb[0].mxu0
        %v3758 = vadd.f32 0.0, %v3757
        %v3759 = vpop.f32.mrb[0].mxu0
        %v3760 = vpop.f32.mrb[0].mxu0
        %v3761 = vpop.f32.mrb[0].mxu0
        %3762 = vdwg.mxu0
        %v3771 = vunpack.c.l.b16 %v2809
        %v3772 = vunpack.c.l.b16 %v2810
        %v3773 = vunpack.c.l.b16 %v2811
        %v3774 = vunpack.c.l.b16 %v2812
        %v3775 = vunpack.c.l.b16 %v2813
        %v3776 = vunpack.c.l.b16 %v2814
        %v3777 = vunpack.c.l.b16 %v2815
        %v3778 = vunpack.c.l.b16 %v2816
        %v3779 = vpack.c.b16 %v3772, %v3771
        %v3780 = vpack.c.b16 %v3774, %v3773
        %v3781 = vpack.c.b16 %v3776, %v3775
        %v3782 = vpack.c.b16 %v3778, %v3777
        %v3788 = vsel %vm995, %v2694, 0
        %3790 = vmatprep.subr.bf16.mxu0 0
        %3791 = vmatpush1.bf16.msra.mxu0 %v3779
        %3792 = vmatprep.subr.bf16.mxu0 0
        %3793 = vmatpush1.bf16.msra.mxu0 %v3780
        %3794 = vmatprep.subr.bf16.mxu0 0
        %3795 = vmatpush1.bf16.msra.mxu0 %v3781
        %3796 = vmatprep.subr.bf16.mxu0 0
        %3797 = vmatpush1.bf16.msra.mxu0 %v3782
        %3798 = vmatprep.subr.bf16.mxu0 0
        %3799 = vmatpush1.bf16.msra.mxu0 0
        %3800 = vmatprep.subr.bf16.mxu0 0
        %3801 = vmatpush1.bf16.msra.mxu0 0
        %3802 = vmatprep.subr.bf16.mxu0 0
        %3803 = vmatpush1.bf16.msra.mxu0 0
        %3804 = vmatprep.subr.bf16.mxu0 0
        %3805 = vmatpush1.bf16.msra.mxu0 0
        %3806 = vmatprep.subr.bf16.mxu0 0
        %3807 = vmatpush1.bf16.msra.mxu0 0
        %3808 = vmatprep.subr.bf16.mxu0 0
        %3809 = vmatpush1.bf16.msra.mxu0 0
        %3810 = vmatprep.subr.bf16.mxu0 0
        %3811 = vmatpush1.bf16.msra.mxu0 0
        %3812 = vmatprep.subr.bf16.mxu0 0
        %3813 = vmatpush1.bf16.msra.mxu0 0
        %3814 = vmatprep.subr.bf16.mxu0 0
        %3815 = vmatpush1.bf16.msra.mxu0 0
        %3816 = vmatprep.subr.bf16.mxu0 0
        %3817 = vmatpush1.bf16.msra.mxu0 0
        %3818 = vmatprep.subr.bf16.mxu0 0
        %3819 = vmatpush1.bf16.msra.mxu0 0
        %3820 = vmatprep.subr.bf16.mxu0 0
        %3821 = vmatpush1.bf16.msra.mxu0 0
        %3822 = vmatprep.mubr.bf16.mxu0 0
        %3823 = vmatmul.mubr.bf16.gmra.mrb[0].mxu0 %v3788
        %v3824 = vpop.f32.mrb[0].mxu0
        %v3825 = vadd.f32 0.0, %v3824
        %v3826 = vpop.f32.mrb[0].mxu0
        %v3827 = vpop.f32.mrb[0].mxu0
        %v3828 = vpop.f32.mrb[0].mxu0
        %3829 = vdwg.mxu0
        %v3838 = vunpack.c.l.b16 %v2817
        %v3839 = vunpack.c.l.b16 %v2818
        %v3840 = vunpack.c.l.b16 %v2819
        %v3841 = vunpack.c.l.b16 %v2820
        %v3842 = vunpack.c.l.b16 %v2821
        %v3843 = vunpack.c.l.b16 %v2822
        %v3844 = vunpack.c.l.b16 %v2823
        %v3845 = vunpack.c.l.b16 %v2824
        %v3846 = vpack.c.b16 %v3839, %v3838
        %v3847 = vpack.c.b16 %v3841, %v3840
        %v3848 = vpack.c.b16 %v3843, %v3842
        %v3849 = vpack.c.b16 %v3845, %v3844
        %v3855 = vsel %vm995, %v2695, 0
        %3857 = vmatprep.subr.bf16.mxu0 0
        %3858 = vmatpush1.bf16.msra.mxu0 %v3846
        %3859 = vmatprep.subr.bf16.mxu0 0
        %3860 = vmatpush1.bf16.msra.mxu0 %v3847
        %3861 = vmatprep.subr.bf16.mxu0 0
        %3862 = vmatpush1.bf16.msra.mxu0 %v3848
        %3863 = vmatprep.subr.bf16.mxu0 0
        %3864 = vmatpush1.bf16.msra.mxu0 %v3849
        %3865 = vmatprep.subr.bf16.mxu0 0
        %3866 = vmatpush1.bf16.msra.mxu0 0
        %3867 = vmatprep.subr.bf16.mxu0 0
        %3868 = vmatpush1.bf16.msra.mxu0 0
        %3869 = vmatprep.subr.bf16.mxu0 0
        %3870 = vmatpush1.bf16.msra.mxu0 0
        %3871 = vmatprep.subr.bf16.mxu0 0
        %3872 = vmatpush1.bf16.msra.mxu0 0
        %3873 = vmatprep.subr.bf16.mxu0 0
        %3874 = vmatpush1.bf16.msra.mxu0 0
        %3875 = vmatprep.subr.bf16.mxu0 0
        %3876 = vmatpush1.bf16.msra.mxu0 0
        %3877 = vmatprep.subr.bf16.mxu0 0
        %3878 = vmatpush1.bf16.msra.mxu0 0
        %3879 = vmatprep.subr.bf16.mxu0 0
        %3880 = vmatpush1.bf16.msra.mxu0 0
        %3881 = vmatprep.subr.bf16.mxu0 0
        %3882 = vmatpush1.bf16.msra.mxu0 0
        %3883 = vmatprep.subr.bf16.mxu0 0
        %3884 = vmatpush1.bf16.msra.mxu0 0
        %3885 = vmatprep.subr.bf16.mxu0 0
        %3886 = vmatpush1.bf16.msra.mxu0 0
        %3887 = vmatprep.subr.bf16.mxu0 0
        %3888 = vmatpush1.bf16.msra.mxu0 0
        %3889 = vmatprep.mubr.bf16.mxu0 0
        %3890 = vmatmul.mubr.bf16.gmra.mrb[0].mxu0 %v3855
        %v3891 = vpop.f32.mrb[0].mxu0
        %v3892 = vadd.f32 0.0, %v3891
        %v3893 = vpop.f32.mrb[0].mxu0
        %v3894 = vpop.f32.mrb[0].mxu0
        %v3895 = vpop.f32.mrb[0].mxu0
        %3896 = vdwg.mxu0
        %v3913 = vrot.slane %v2954, 7
        %v3914 = vsel %vm2061, %v3913, %v2887
        %v3915 = vrot.slane %v3021, 6
        %v3916 = vsel %vm2064, %v3915, %v3914
        %v3917 = vrot.slane %v3088, 5
        %v3918 = vsel %vm2067, %v3917, %v3916
        %v3919 = vrot.slane %v3155, 4
        %v3920 = vsel %vm2070, %v3919, %v3918
        %v3921 = vrot.slane %v3222, 3
        %v3922 = vsel %vm2073, %v3921, %v3920
        %v3923 = vrot.slane %v3289, 2
        %v3924 = vsel %vm2076, %v3923, %v3922
        %v3925 = vrot.slane %v3356, 1
        %v3926 = vsel %vm2079, %v3925, %v3924
        %v3927 = vrot.slane %v3490, 7
        %v3928 = vsel %vm2061, %v3927, %v3423
        %v3929 = vrot.slane %v3557, 6
        %v3930 = vsel %vm2064, %v3929, %v3928
        %v3931 = vrot.slane %v3624, 5
        %v3932 = vsel %vm2067, %v3931, %v3930
        %v3933 = vrot.slane %v3691, 4
        %v3934 = vsel %vm2070, %v3933, %v3932
        %v3935 = vrot.slane %v3758, 3
        %v3936 = vsel %vm2073, %v3935, %v3934
        %v3937 = vrot.slane %v3825, 2
        %v3938 = vsel %vm2076, %v3937, %v3936
        %v3939 = vrot.slane %v3892, 1
        %v3940 = vsel %vm2079, %v3939, %v3938
        %3943 = vrot.lane.b32.xlu0 %v3926, 96
        %v3944 = vpop.permute.xlu0 %3943
        %3945 = vrot.lane.b32.xlu0 %v3940, 96
        %v3946 = vpop.permute.xlu0 %3945
        %s3949 = scalar_lea.vmem %s6, 32
        %v3950 = vld [vmem:[%s3949] sm:$0xff]
        %v3951 = vld [vmem:[%s3949 + $0x8] sm:$0xff]
        %v3952 = vld [vmem:[%s3949 + $0x10] sm:$0xff]
        %v3953 = vld [vmem:[%s3949 + $0x18] sm:$0xff]
        %s3954 = scalar_lea.vmem [#allocation9], 1
        %v3955 = vld [vmem:[%s3954] sm:$0x1]
        %v3957 = vlaneseq
        %v3958 = vshrl.u32 %v3957, 7
        %v3959 = vsub.s32 0, %v3958
        %v3960 = vrot.slane %v3955, %v3959
        %v3963 = vsel %vm583, %v2464, 0
        %v3966 = vsel %vm583, %v2465, 0
        %v3969 = vsel %vm583, %v2466, 0
        %v3972 = vsel %vm583, %v2467, 0
        %v3975 = vsel %vm583, %v2468, 0
        %3977 = vmatprep.subr.mxu0 0.0
        %3978 = vmatpush1.msra.mxu0 %v3950
        %3979 = vmatprep.subr.mxu0 0.0
        %3980 = vmatpush1.msra.mxu0 %v3951
        %3981 = vmatprep.subr.mxu0 0.0
        %3982 = vmatpush1.msra.mxu0 %v3952
        %3983 = vmatprep.subr.mxu0 0.0
        %3984 = vmatpush1.msra.mxu0 %v3953
        %3985 = vmatprep.subr.mxu0 0.0
        %3986 = vmatpush1.msra.mxu0 0.0
        %3987 = vmatprep.subr.mxu0 0.0
        %3988 = vmatpush1.msra.mxu0 0.0
        %3989 = vmatprep.subr.mxu0 0.0
        %3990 = vmatpush1.msra.mxu0 0.0
        %3991 = vmatprep.subr.mxu0 0.0
        %3992 = vmatpush1.msra.mxu0 0.0
        %3993 = vmatprep.subr.mxu0 0.0
        %3994 = vmatpush1.msra.mxu0 0.0
        %3995 = vmatprep.subr.mxu0 0.0
        %3996 = vmatpush1.msra.mxu0 0.0
        %3997 = vmatprep.subr.mxu0 0.0
        %3998 = vmatpush1.msra.mxu0 0.0
        %3999 = vmatprep.subr.mxu0 0.0
        %4000 = vmatpush1.msra.mxu0 0.0
        %4001 = vmatprep.subr.mxu0 0.0
        %4002 = vmatpush1.msra.mxu0 0.0
        %4003 = vmatprep.subr.mxu0 0.0
        %4004 = vmatpush1.msra.mxu0 0.0
        %4005 = vmatprep.subr.mxu0 0.0
        %4006 = vmatpush1.msra.mxu0 0.0
        %4007 = vmatprep.subr.mxu0 0.0
        %4008 = vmatpush1.msra.mxu0 0.0
        %4009 = vmatprep.subr.mxu0 0.0
        %4010 = vmatpush1.msra.mxu0 0.0
        %4011 = vmatprep.subr.mxu0 0.0
        %4012 = vmatpush1.msra.mxu0 0.0
        %4013 = vmatprep.subr.mxu0 0.0
        %4014 = vmatpush1.msra.mxu0 0.0
        %4015 = vmatprep.subr.mxu0 0.0
        %4016 = vmatpush1.msra.mxu0 0.0
        %4017 = vmatprep.subr.mxu0 0.0
        %4018 = vmatpush1.msra.mxu0 0.0
        %4019 = vmatprep.subr.mxu0 0.0
        %4020 = vmatpush1.msra.mxu0 0.0
        %4021 = vmatprep.subr.mxu0 0.0
        %4022 = vmatpush1.msra.mxu0 0.0
        %4023 = vmatprep.subr.mxu0 0.0
        %4024 = vmatpush1.msra.mxu0 0.0
        %4025 = vmatprep.subr.mxu0 0.0
        %4026 = vmatpush1.msra.mxu0 0.0
        %4027 = vmatprep.subr.mxu0 0.0
        %4028 = vmatpush1.msra.mxu0 0.0
        %4029 = vmatprep.subr.mxu0 0.0
        %4030 = vmatpush1.msra.mxu0 0.0
        %4031 = vmatprep.subr.mxu0 0.0
        %4032 = vmatpush1.msra.mxu0 0.0
        %4033 = vmatprep.subr.mxu0 0.0
        %4034 = vmatpush1.msra.mxu0 0.0
        %4035 = vmatprep.subr.mxu0 0.0
        %4036 = vmatpush1.msra.mxu0 0.0
        %4037 = vmatprep.subr.mxu0 0.0
        %4038 = vmatpush1.msra.mxu0 0.0
        %4039 = vmatprep.subr.mxu0 0.0
        %4040 = vmatpush1.msra.mxu0 0.0
        %4041 = vmatprep.mubr.f32.mxu0 0.0
        %4042 = vmatmul.mubr.f32.gmra.mrb[0].mxu0 %v3963
        %v4043 = vpop.f32.mrb[0].mxu0
        %v4044 = vadd.f32 %v3960, %v4043
        %v4045 = vpop.f32.mrb[0].mxu0
        %4046 = vmatprep.mubr.f32.mxu0 0.0
        %4047 = vmatmul.mubr.f32.gmra.mrb[0].mxu0 %v3966
        %v4048 = vpop.f32.mrb[0].mxu0
        %v4049 = vadd.f32 %v3960, %v4048
        %v4050 = vpop.f32.mrb[0].mxu0
        %4051 = vmatprep.mubr.f32.mxu0 0.0
        %4052 = vmatmul.mubr.f32.gmra.mrb[0].mxu0 %v3969
        %v4053 = vpop.f32.mrb[0].mxu0
        %v4054 = vadd.f32 %v3960, %v4053
        %v4055 = vpop.f32.mrb[0].mxu0
        %4056 = vmatprep.mubr.f32.mxu0 0.0
        %4057 = vmatmul.mubr.f32.gmra.mrb[0].mxu0 %v3972
        %v4058 = vpop.f32.mrb[0].mxu0
        %v4059 = vadd.f32 %v3960, %v4058
        %v4060 = vpop.f32.mrb[0].mxu0
        %4061 = vmatprep.mubr.f32.mxu0 0.0
        %4062 = vmatmul.mubr.f32.gmra.mrb[0].mxu0 %v3975
        %v4063 = vpop.f32.mrb[0].mxu0
        %v4064 = vadd.f32 %v3960, %v4063
        %v4065 = vpop.f32.mrb[0].mxu0
        %4066 = vdwg.mxu0
        %4067 = vmatprep.subr.mxu0 0.0
        %4068 = vmatpush1.msra.mxu0 %v3926
        %4069 = vmatprep.subr.mxu0 0.0
        %4070 = vmatpush1.msra.mxu0 %v3940
        %4071 = vmatprep.subr.mxu0 0.0
        %4072 = vmatpush1.msra.mxu0 %v3944
        %4073 = vmatprep.subr.mxu0 0.0
        %4074 = vmatpush1.msra.mxu0 %v3946
        %4075 = vmatprep.subr.mxu0 0.0
        %4076 = vmatpush1.msra.mxu0 0.0
        %4077 = vmatprep.subr.mxu0 0.0
        %4078 = vmatpush1.msra.mxu0 0.0
        %4079 = vmatprep.subr.mxu0 0.0
        %4080 = vmatpush1.msra.mxu0 0.0
        %4081 = vmatprep.subr.mxu0 0.0
        %4082 = vmatpush1.msra.mxu0 0.0
        %4083 = vmatprep.subr.mxu0 0.0
        %4084 = vmatpush1.msra.mxu0 0.0
        %4085 = vmatprep.subr.mxu0 0.0
        %4086 = vmatpush1.msra.mxu0 0.0
        %4087 = vmatprep.subr.mxu0 0.0
        %4088 = vmatpush1.msra.mxu0 0.0
        %4089 = vmatprep.subr.mxu0 0.0
        %4090 = vmatpush1.msra.mxu0 0.0
        %4091 = vmatprep.subr.mxu0 0.0
        %4092 = vmatpush1.msra.mxu0 0.0
        %4093 = vmatprep.subr.mxu0 0.0
        %4094 = vmatpush1.msra.mxu0 0.0
        %4095 = vmatprep.subr.mxu0 0.0
        %4096 = vmatpush1.msra.mxu0 0.0
        %4097 = vmatprep.subr.mxu0 0.0
        %4098 = vmatpush1.msra.mxu0 0.0
        %4099 = vmatprep.subr.mxu0 0.0
        %4100 = vmatpush1.msra.mxu0 0.0
        %4101 = vmatprep.subr.mxu0 0.0
        %4102 = vmatpush1.msra.mxu0 0.0
        %4103 = vmatprep.subr.mxu0 0.0
        %4104 = vmatpush1.msra.mxu0 0.0
        %4105 = vmatprep.subr.mxu0 0.0
        %4106 = vmatpush1.msra.mxu0 0.0
        %4107 = vmatprep.subr.mxu0 0.0
        %4108 = vmatpush1.msra.mxu0 0.0
        %4109 = vmatprep.subr.mxu0 0.0
        %4110 = vmatpush1.msra.mxu0 0.0
        %4111 = vmatprep.subr.mxu0 0.0
        %4112 = vmatpush1.msra.mxu0 0.0
        %4113 = vmatprep.subr.mxu0 0.0
        %4114 = vmatpush1.msra.mxu0 0.0
        %4115 = vmatprep.subr.mxu0 0.0
        %4116 = vmatpush1.msra.mxu0 0.0
        %4117 = vmatprep.subr.mxu0 0.0
        %4118 = vmatpush1.msra.mxu0 0.0
        %4119 = vmatprep.subr.mxu0 0.0
        %4120 = vmatpush1.msra.mxu0 0.0
        %4121 = vmatprep.subr.mxu0 0.0
        %4122 = vmatpush1.msra.mxu0 0.0
        %4123 = vmatprep.subr.mxu0 0.0
        %4124 = vmatpush1.msra.mxu0 0.0
        %4125 = vmatprep.subr.mxu0 0.0
        %4126 = vmatpush1.msra.mxu0 0.0
        %4127 = vmatprep.subr.mxu0 0.0
        %4128 = vmatpush1.msra.mxu0 0.0
        %4129 = vmatprep.subr.mxu0 0.0
        %4130 = vmatpush1.msra.mxu0 0.0
        %4131 = vmatprep.mubr.f32.mxu0 0.0
        %4132 = vmatmul.mubr.f32.gmra.mrb[0].mxu0 %v2220
        %v4133 = vpop.f32.mrb[0].mxu0
        %v4134 = vadd.f32 %v4044, %v4133
        %v4135 = vpop.f32.mrb[0].mxu0
        %4136 = vmatprep.mubr.f32.mxu0 0.0
        %4137 = vmatmul.mubr.f32.gmra.mrb[0].mxu0 %v2223
        %v4138 = vpop.f32.mrb[0].mxu0
        %v4139 = vadd.f32 %v4049, %v4138
        %v4140 = vpop.f32.mrb[0].mxu0
        %4141 = vmatprep.mubr.f32.mxu0 0.0
        %4142 = vmatmul.mubr.f32.gmra.mrb[0].mxu0 %v2226
        %v4143 = vpop.f32.mrb[0].mxu0
        %v4144 = vadd.f32 %v4054, %v4143
        %v4145 = vpop.f32.mrb[0].mxu0
        %4146 = vmatprep.mubr.f32.mxu0 0.0
        %4147 = vmatmul.mubr.f32.gmra.mrb[0].mxu0 %v2229
        %v4148 = vpop.f32.mrb[0].mxu0
        %v4149 = vadd.f32 %v4059, %v4148
        %v4150 = vpop.f32.mrb[0].mxu0
        %4151 = vmatprep.mubr.f32.mxu0 0.0
        %4152 = vmatmul.mubr.f32.gmra.mrb[0].mxu0 %v2232
        %v4153 = vpop.f32.mrb[0].mxu0
        %v4154 = vadd.f32 %v4064, %v4153
        %v4155 = vpop.f32.mrb[0].mxu0
        %4156 = vdwg.mxu0
        %v4157 = vmul.f32 %v4134, 0.5
        %v4158 = vmul.f32 %v4139, 0.5
        %v4159 = vmul.f32 %v4144, 0.5
        %v4160 = vmul.f32 %v4149, 0.5
        %v4161 = vmul.f32 %v4154, 0.5
        %v4162 = vmul.f32 %v4134, 0.70710677
        %v4163 = vmul.f32 %v4139, 0.70710677
        %v4164 = vmul.f32 %v4144, 0.70710677
        %v4165 = vmul.f32 %v4149, 0.70710677
        %v4166 = vmul.f32 %v4154, 0.70710677
        %v4167 = vand.u32 2147483647, %v4162
        %v4168 = vand.u32 2147483647, %v4163
        %v4169 = vand.u32 2147483647, %v4164
        %v4170 = vand.u32 2147483647, %v4165
        %v4171 = vand.u32 2147483647, %v4166
        %v4172 = vmul.f32 %v4167, 0.3275911
        %v4173 = vmul.f32 %v4168, 0.3275911
        %v4174 = vmul.f32 %v4169, 0.3275911
        %v4175 = vmul.f32 %v4170, 0.3275911
        %v4176 = vmul.f32 %v4171, 0.3275911
        %v4177 = vadd.f32 %v4172, 1.0
        %v4178 = vadd.f32 %v4173, 1.0
        %v4179 = vadd.f32 %v4174, 1.0
        %v4180 = vadd.f32 %v4175, 1.0
        %v4181 = vadd.f32 %v4176, 1.0
        %v4182 = vrcp.pop %v4177
        %v4183 = vmul.f32 1.0, %v4182
        %v4184 = vrcp.pop %v4178
        %v4185 = vmul.f32 1.0, %v4184
        %v4186 = vrcp.pop %v4179
        %v4187 = vmul.f32 1.0, %v4186
        %v4188 = vrcp.pop %v4180
        %v4189 = vmul.f32 1.0, %v4188
        %v4190 = vrcp.pop %v4181
        %v4191 = vmul.f32 1.0, %v4190
        %v4192 = vmul.f32 %v4183, 1.0614054
        %v4193 = vmul.f32 %v4185, 1.0614054
        %v4194 = vmul.f32 %v4187, 1.0614054
        %v4195 = vmul.f32 %v4189, 1.0614054
        %v4196 = vmul.f32 %v4191, 1.0614054
        %v4197 = vadd.f32 %v4192, -1.4531521
        %v4198 = vadd.f32 %v4193, -1.4531521
        %v4199 = vadd.f32 %v4194, -1.4531521
        %v4200 = vadd.f32 %v4195, -1.4531521
        %v4201 = vadd.f32 %v4196, -1.4531521
        %v4202 = vmul.f32 %v4183, %v4197
        %v4203 = vmul.f32 %v4185, %v4198
        %v4204 = vmul.f32 %v4187, %v4199
        %v4205 = vmul.f32 %v4189, %v4200
        %v4206 = vmul.f32 %v4191, %v4201
        %v4207 = vadd.f32 %v4202, 1.4214138
        %v4208 = vadd.f32 %v4203, 1.4214138
        %v4209 = vadd.f32 %v4204, 1.4214138
        %v4210 = vadd.f32 %v4205, 1.4214138
        %v4211 = vadd.f32 %v4206, 1.4214138
        %v4212 = vmul.f32 %v4183, %v4207
        %v4213 = vmul.f32 %v4185, %v4208
        %v4214 = vmul.f32 %v4187, %v4209
        %v4215 = vmul.f32 %v4189, %v4210
        %v4216 = vmul.f32 %v4191, %v4211
        %v4217 = vadd.f32 %v4212, -0.28449672
        %v4218 = vadd.f32 %v4213, -0.28449672
        %v4219 = vadd.f32 %v4214, -0.28449672
        %v4220 = vadd.f32 %v4215, -0.28449672
        %v4221 = vadd.f32 %v4216, -0.28449672
        %v4222 = vmul.f32 %v4183, %v4217
        %v4223 = vmul.f32 %v4185, %v4218
        %v4224 = vmul.f32 %v4187, %v4219
        %v4225 = vmul.f32 %v4189, %v4220
        %v4226 = vmul.f32 %v4191, %v4221
        %v4227 = vadd.f32 %v4222, 0.2548296
        %v4228 = vadd.f32 %v4223, 0.2548296
        %v4229 = vadd.f32 %v4224, 0.2548296
        %v4230 = vadd.f32 %v4225, 0.2548296
        %v4231 = vadd.f32 %v4226, 0.2548296
        %v4232 = vmul.f32 %v4183, %v4227
        %v4233 = vmul.f32 %v4185, %v4228
        %v4234 = vmul.f32 %v4187, %v4229
        %v4235 = vmul.f32 %v4189, %v4230
        %v4236 = vmul.f32 %v4191, %v4231
        %v4237 = vsub.f32 0.0, %v4167
        %v4238 = vsub.f32 0.0, %v4168
        %v4239 = vsub.f32 0.0, %v4169
        %v4240 = vsub.f32 0.0, %v4170
        %v4241 = vsub.f32 0.0, %v4171
        %v4242 = vmul.f32 %v4237, %v4167
        %v4243 = vmul.f32 %v4238, %v4168
        %v4244 = vmul.f32 %v4239, %v4169
        %v4245 = vmul.f32 %v4240, %v4170
        %v4246 = vmul.f32 %v4241, %v4171
        %v4247 = vmul.f32 %v4242, 1.442695
        %v4248 = vpow.pop %v4247
        %v4249 = vmul.f32 %v4243, 1.442695
        %v4250 = vpow.pop %v4249
        %v4251 = vmul.f32 %v4244, 1.442695
        %v4252 = vpow.pop %v4251
        %v4253 = vmul.f32 %v4245, 1.442695
        %v4254 = vpow.pop %v4253
        %v4255 = vmul.f32 %v4246, 1.442695
        %v4256 = vpow.pop %v4255
        %v4257 = vmul.f32 %v4232, %v4248
        %v4258 = vmul.f32 %v4233, %v4250
        %v4259 = vmul.f32 %v4234, %v4252
        %v4260 = vmul.f32 %v4235, %v4254
        %v4261 = vmul.f32 %v4236, %v4256
        %v4262 = vsub.f32 1.0, %v4257
        %v4263 = vsub.f32 1.0, %v4258
        %v4264 = vsub.f32 1.0, %v4259
        %v4265 = vsub.f32 1.0, %v4260
        %v4266 = vsub.f32 1.0, %v4261
        %vm4267 = vcmp.ge.f32.partialorder %v4162, 0.0
        %vm4268 = vcmp.ge.f32.partialorder %v4163, 0.0
        %vm4269 = vcmp.ge.f32.partialorder %v4164, 0.0
        %vm4270 = vcmp.ge.f32.partialorder %v4165, 0.0
        %vm4271 = vcmp.ge.f32.partialorder %v4166, 0.0
        %v4272 = vsub.f32 0.0, %v4262
        %v4273 = vsub.f32 0.0, %v4263
        %v4274 = vsub.f32 0.0, %v4264
        %v4275 = vsub.f32 0.0, %v4265
        %v4276 = vsub.f32 0.0, %v4266
        %v4277 = vsel %vm4267, %v4262, %v4272
        %v4278 = vsel %vm4268, %v4263, %v4273
        %v4279 = vsel %vm4269, %v4264, %v4274
        %v4280 = vsel %vm4270, %v4265, %v4275
        %v4281 = vsel %vm4271, %v4266, %v4276
        %v4282 = vadd.f32 %v4277, 1.0
        %v4283 = vadd.f32 %v4278, 1.0
        %v4284 = vadd.f32 %v4279, 1.0
        %v4285 = vadd.f32 %v4280, 1.0
        %v4286 = vadd.f32 %v4281, 1.0
        %v4287 = vmul.f32 %v4157, %v4282
        %v4288 = vmul.f32 %v4158, %v4283
        %v4289 = vmul.f32 %v4159, %v4284
        %v4290 = vmul.f32 %v4160, %v4285
        %v4291 = vmul.f32 %v4161, %v4286
        %4292 = vst.msk [vmem:[#allocation2] sm:$0xff] %vm583, %v4287
        %4293 = vst.msk [vmem:[#allocation2 + $0x8] sm:$0xff] %vm583, %v4288
        %4294 = vst.msk [vmem:[#allocation2 + $0x10] sm:$0xff] %vm583, %v4289
        %4295 = vst.msk [vmem:[#allocation2 + $0x18] sm:$0xff] %vm583, %v4290
        %4296 = vst.msk [vmem:[#allocation2 + $0x20] sm:$0xff] %vm583, %v4291
        %v4297 = vld [vmem:[#allocation2] sm:$0xff]
        %v4298 = vld [vmem:[#allocation2 + $0x8] sm:$0xff]
        %v4299 = vld [vmem:[#allocation2 + $0x10] sm:$0xff]
        %v4300 = vld [vmem:[#allocation2 + $0x18] sm:$0xff]
        %v4301 = vld [vmem:[#allocation2 + $0x20] sm:$0xff]
        %4302 = vmatprep.subr.mxu0 0.0
        %4303 = vmatpush1.msra.mxu0 %v4297
        %4304 = vmatprep.subr.mxu0 0.0
        %4305 = vmatpush1.msra.mxu0 %v4298
        %4306 = vmatprep.subr.mxu0 0.0
        %4307 = vmatpush1.msra.mxu0 %v4299
        %4308 = vmatprep.subr.mxu0 0.0
        %4309 = vmatpush1.msra.mxu0 %v4300
        %4310 = vmatprep.subr.mxu0 0.0
        %4311 = vmatpush1.msra.mxu0 %v4301
        %4312 = vmatprep.subr.mxu0 0.0
        %4313 = vmatpush1.msra.mxu0 0.0
        %4314 = vmatprep.subr.mxu0 0.0
        %4315 = vmatpush1.msra.mxu0 0.0
        %4316 = vmatprep.subr.mxu0 0.0
        %4317 = vmatpush1.msra.mxu0 0.0
        %4318 = vmatprep.subr.mxu0 0.0
        %4319 = vmatpush1.msra.mxu0 0.0
        %4320 = vmatprep.subr.mxu0 0.0
        %4321 = vmatpush1.msra.mxu0 0.0
        %4322 = vmatprep.subr.mxu0 0.0
        %4323 = vmatpush1.msra.mxu0 0.0
        %4324 = vmatprep.subr.mxu0 0.0
        %4325 = vmatpush1.msra.mxu0 0.0
        %4326 = vmatprep.subr.mxu0 0.0
        %4327 = vmatpush1.msra.mxu0 0.0
        %4328 = vmatprep.subr.mxu0 0.0
        %4329 = vmatpush1.msra.mxu0 0.0
        %4330 = vmatprep.subr.mxu0 0.0
        %4331 = vmatpush1.msra.mxu0 0.0
        %4332 = vmatprep.subr.mxu0 0.0
        %4333 = vmatpush1.msra.mxu0 0.0
        %4334 = vmatprep.subr.mxu0 0.0
        %4335 = vmatpush1.msra.mxu0 0.0
        %4336 = vmatprep.subr.mxu0 0.0
        %4337 = vmatpush1.msra.mxu0 0.0
        %4338 = vmatprep.subr.mxu0 0.0
        %4339 = vmatpush1.msra.mxu0 0.0
        %4340 = vmatprep.subr.mxu0 0.0
        %4341 = vmatpush1.msra.mxu0 0.0
        %4342 = vmatprep.subr.mxu0 0.0
        %4343 = vmatpush1.msra.mxu0 0.0
        %4344 = vmatprep.subr.mxu0 0.0
        %4345 = vmatpush1.msra.mxu0 0.0
        %4346 = vmatprep.subr.mxu0 0.0
        %4347 = vmatpush1.msra.mxu0 0.0
        %4348 = vmatprep.subr.mxu0 0.0
        %4349 = vmatpush1.msra.mxu0 0.0
        %4350 = vmatprep.subr.mxu0 0.0
        %4351 = vmatpush1.msra.mxu0 0.0
        %4352 = vmatprep.subr.mxu0 0.0
        %4353 = vmatpush1.msra.mxu0 0.0
        %4354 = vmatprep.subr.mxu0 0.0
        %4355 = vmatpush1.msra.mxu0 0.0
        %4356 = vmatprep.subr.mxu0 0.0
        %4357 = vmatpush1.msra.mxu0 0.0
        %4358 = vmatprep.subr.mxu0 0.0
        %4359 = vmatpush1.msra.mxu0 0.0
        %4360 = vmatprep.subr.mxu0 0.0
        %4361 = vmatpush1.msra.mxu0 0.0
        %4362 = vmatprep.subr.mxu0 0.0
        %4363 = vmatpush1.msra.mxu0 0.0
        %4364 = vmatprep.subr.mxu0 0.0
        %4365 = vmatpush1.msra.mxu0 0.0
        %4366 = vmatprep.mubr.f32.mxu0 0.0
        %4367 = vmatmul.mubr.f32.gmra.mrb[0].mxu0 %v605
        %v4368 = vpop.f32.mrb[0].mxu0
        %v4369 = vadd.f32 0.0, %v4368
        %v4370 = vpop.f32.mrb[0].mxu0
        %4371 = vmatprep.mubr.f32.mxu0 0.0
        %4372 = vmatmul.mubr.f32.gmra.mrb[0].mxu0 %v608
        %v4373 = vpop.f32.mrb[0].mxu0
        %v4374 = vadd.f32 0.0, %v4373
        %v4375 = vpop.f32.mrb[0].mxu0
        %4376 = vmatprep.mubr.f32.mxu0 0.0
        %4377 = vmatmul.mubr.f32.gmra.mrb[0].mxu0 %v611
        %v4378 = vpop.f32.mrb[0].mxu0
        %v4379 = vadd.f32 0.0, %v4378
        %v4380 = vpop.f32.mrb[0].mxu0
        %4381 = vmatprep.mubr.f32.mxu0 0.0
        %4382 = vmatmul.mubr.f32.gmra.mrb[0].mxu0 %v614
        %v4383 = vpop.f32.mrb[0].mxu0
        %v4384 = vadd.f32 0.0, %v4383
        %v4385 = vpop.f32.mrb[0].mxu0
        %4386 = vdwg.mxu0
        %4389 = vrot.lane.b32.xlu0 %v4379, 32
        %v4390 = vpop.permute.xlu0 %4389
        %4391 = vrot.lane.b32.xlu0 %v4384, 32
        %v4392 = vpop.permute.xlu0 %4391
        %v4395 = vsel %vm583, %v4369, %v4390
        %v4396 = vsel %vm583, %v4374, %v4392
        %v4399 = vcombine.high %v4395, %v4395
        %v4401 = vunpack.c.l.s4 1966171168
        %v4402 = vunpack.c.0.s8 %v4401
        %v4403 = vlaneseq
        %v4404 = vshrl.u32 %v4403, 7
        %v4405 = vsub.s32 %v4402, %v4404
        %v4406 = vrot.slane %v4395, %v4405
        %v4408 = vunpack.c.l.s4 1966171168
        %v4409 = vunpack.c.0.s8 %v4408
        %v4410 = vlaneseq
        %v4411 = vshrl.u32 %v4410, 7
        %v4412 = vsub.s32 %v4409, %v4411
        %v4413 = vrot.slane %v4399, %v4412
        %v4414 = vcombine.high %v4406, %v4406
        %v4415 = vcombine.high %v4413, %v4413
        %v4417 = vunpack.c.l.s4 1966171168
        %v4418 = vunpack.c.0.s8 %v4417
        %v4419 = vlaneseq
        %v4420 = vshrl.u32 %v4419, 7
        %v4421 = vsub.s32 %v4418, %v4420
        %v4422 = vrot.slane %v4406, %v4421
        %v4424 = vunpack.c.l.s4 1966171168
        %v4425 = vunpack.c.0.s8 %v4424
        %v4426 = vlaneseq
        %v4427 = vshrl.u32 %v4426, 7
        %v4428 = vsub.s32 %v4425, %v4427
        %v4429 = vrot.slane %v4413, %v4428
        %v4431 = vunpack.c.l.s4 1966171168
        %v4432 = vunpack.c.0.s8 %v4431
        %v4433 = vlaneseq
        %v4434 = vshrl.u32 %v4433, 7
        %v4435 = vsub.s32 %v4432, %v4434
        %v4436 = vrot.slane %v4414, %v4435
        %v4438 = vunpack.c.l.s4 1966171168
        %v4439 = vunpack.c.0.s8 %v4438
        %v4440 = vlaneseq
        %v4441 = vshrl.u32 %v4440, 7
        %v4442 = vsub.s32 %v4439, %v4441
        %v4443 = vrot.slane %v4415, %v4442
        %v4444 = vcombine.high %v4422, %v4422
        %v4445 = vcombine.high %v4429, %v4429
        %v4446 = vcombine.high %v4436, %v4436
        %v4447 = vcombine.high %v4443, %v4443
        %v4448 = vcombine.high %v4396, %v4396
        %v4450 = vunpack.c.l.s4 1966171168
        %v4451 = vunpack.c.0.s8 %v4450
        %v4452 = vlaneseq
        %v4453 = vshrl.u32 %v4452, 7
        %v4454 = vsub.s32 %v4451, %v4453
        %v4455 = vrot.slane %v4396, %v4454
        %v4457 = vunpack.c.l.s4 1966171168
        %v4458 = vunpack.c.0.s8 %v4457
        %v4459 = vlaneseq
        %v4460 = vshrl.u32 %v4459, 7
        %v4461 = vsub.s32 %v4458, %v4460
        %v4462 = vrot.slane %v4448, %v4461
        %v4463 = vcombine.high %v4455, %v4455
        %v4464 = vcombine.high %v4462, %v4462
        %v4466 = vunpack.c.l.s4 1966171168
        %v4467 = vunpack.c.0.s8 %v4466
        %v4468 = vlaneseq
        %v4469 = vshrl.u32 %v4468, 7
        %v4470 = vsub.s32 %v4467, %v4469
        %v4471 = vrot.slane %v4455, %v4470
        %v4473 = vunpack.c.l.s4 1966171168
        %v4474 = vunpack.c.0.s8 %v4473
        %v4475 = vlaneseq
        %v4476 = vshrl.u32 %v4475, 7
        %v4477 = vsub.s32 %v4474, %v4476
        %v4478 = vrot.slane %v4462, %v4477
        %v4480 = vunpack.c.l.s4 1966171168
        %v4481 = vunpack.c.0.s8 %v4480
        %v4482 = vlaneseq
        %v4483 = vshrl.u32 %v4482, 7
        %v4484 = vsub.s32 %v4481, %v4483
        %v4485 = vrot.slane %v4463, %v4484
        %v4487 = vunpack.c.l.s4 1966171168
        %v4488 = vunpack.c.0.s8 %v4487
        %v4489 = vlaneseq
        %v4490 = vshrl.u32 %v4489, 7
        %v4491 = vsub.s32 %v4488, %v4490
        %v4492 = vrot.slane %v4464, %v4491
        %v4493 = vcombine.high %v4471, %v4471
        %v4494 = vcombine.high %v4478, %v4478
        %v4495 = vcombine.high %v4485, %v4485
        %v4496 = vcombine.high %v4492, %v4492
        %v4513 = vpack.c.bf16 %v4422, %v4422
        %v4514 = vpack.c.bf16 %v4436, %v4436
        %v4515 = vpack.c.bf16 %v4444, %v4444
        %v4516 = vpack.c.bf16 %v4446, %v4446
        %v4517 = vpack.c.bf16 %v4429, %v4429
        %v4518 = vpack.c.bf16 %v4443, %v4443
        %v4519 = vpack.c.bf16 %v4445, %v4445
        %v4520 = vpack.c.bf16 %v4447, %v4447
        %v4521 = vpack.c.bf16 %v4471, %v4471
        %v4522 = vpack.c.bf16 %v4485, %v4485
        %v4523 = vpack.c.bf16 %v4493, %v4493
        %v4524 = vpack.c.bf16 %v4495, %v4495
        %v4525 = vpack.c.bf16 %v4478, %v4478
        %v4526 = vpack.c.bf16 %v4492, %v4492
        %v4527 = vpack.c.bf16 %v4494, %v4494
        %v4528 = vpack.c.bf16 %v4496, %v4496
        %s4529 = scalar_lea.vmem [#allocation7], 1024
        %v4530 = vld [vmem:[%s4529] sm:$0xf]
        %v4531 = vld [vmem:[%s4529 + $0x4] sm:$0xf]
        %v4532 = vld [vmem:[%s4529 + $0x8] sm:$0xf]
        %v4533 = vld [vmem:[%s4529 + $0xc] sm:$0xf]
        %v4534 = vld [vmem:[%s4529 + $0x10] sm:$0xf]
        %v4535 = vld [vmem:[%s4529 + $0x14] sm:$0xf]
        %v4536 = vld [vmem:[%s4529 + $0x18] sm:$0xf]
        %v4537 = vld [vmem:[%s4529 + $0x1c] sm:$0xf]
        %v4538 = vld [vmem:[%s4529 + $0x20] sm:$0xf]
        %v4539 = vld [vmem:[%s4529 + $0x24] sm:$0xf]
        %v4540 = vld [vmem:[%s4529 + $0x28] sm:$0xf]
        %v4541 = vld [vmem:[%s4529 + $0x2c] sm:$0xf]
        %v4542 = vld [vmem:[%s4529 + $0x30] sm:$0xf]
        %v4543 = vld [vmem:[%s4529 + $0x34] sm:$0xf]
        %v4544 = vld [vmem:[%s4529 + $0x38] sm:$0xf]
        %v4545 = vld [vmem:[%s4529 + $0x3c] sm:$0xf]
        %v4546 = vld [vmem:[%s4529 + $0x40] sm:$0xf]
        %v4547 = vld [vmem:[%s4529 + $0x44] sm:$0xf]
        %v4548 = vld [vmem:[%s4529 + $0x48] sm:$0xf]
        %v4549 = vld [vmem:[%s4529 + $0x4c] sm:$0xf]
        %v4550 = vld [vmem:[%s4529 + $0x50] sm:$0xf]
        %v4551 = vld [vmem:[%s4529 + $0x54] sm:$0xf]
        %v4552 = vld [vmem:[%s4529 + $0x58] sm:$0xf]
        %v4553 = vld [vmem:[%s4529 + $0x5c] sm:$0xf]
        %v4554 = vld [vmem:[%s4529 + $0x60] sm:$0xf]
        %v4555 = vld [vmem:[%s4529 + $0x64] sm:$0xf]
        %v4556 = vld [vmem:[%s4529 + $0x68] sm:$0xf]
        %v4557 = vld [vmem:[%s4529 + $0x6c] sm:$0xf]
        %v4558 = vld [vmem:[%s4529 + $0x70] sm:$0xf]
        %v4559 = vld [vmem:[%s4529 + $0x74] sm:$0xf]
        %v4560 = vld [vmem:[%s4529 + $0x78] sm:$0xf]
        %v4561 = vld [vmem:[%s4529 + $0x7c] sm:$0xf]
        %v4562 = vld [vmem:[%s4529 + $0x80] sm:$0xf]
        %v4563 = vld [vmem:[%s4529 + $0x84] sm:$0xf]
        %v4564 = vld [vmem:[%s4529 + $0x88] sm:$0xf]
        %v4565 = vld [vmem:[%s4529 + $0x8c] sm:$0xf]
        %v4566 = vld [vmem:[%s4529 + $0x90] sm:$0xf]
        %v4567 = vld [vmem:[%s4529 + $0x94] sm:$0xf]
        %v4568 = vld [vmem:[%s4529 + $0x98] sm:$0xf]
        %v4569 = vld [vmem:[%s4529 + $0x9c] sm:$0xf]
        %v4570 = vld [vmem:[%s4529 + $0xa0] sm:$0xf]
        %v4571 = vld [vmem:[%s4529 + $0xa4] sm:$0xf]
        %v4572 = vld [vmem:[%s4529 + $0xa8] sm:$0xf]
        %v4573 = vld [vmem:[%s4529 + $0xac] sm:$0xf]
        %v4574 = vld [vmem:[%s4529 + $0xb0] sm:$0xf]
        %v4575 = vld [vmem:[%s4529 + $0xb4] sm:$0xf]
        %v4576 = vld [vmem:[%s4529 + $0xb8] sm:$0xf]
        %v4577 = vld [vmem:[%s4529 + $0xbc] sm:$0xf]
        %v4578 = vld [vmem:[%s4529 + $0xc0] sm:$0xf]
        %v4579 = vld [vmem:[%s4529 + $0xc4] sm:$0xf]
        %v4580 = vld [vmem:[%s4529 + $0xc8] sm:$0xf]
        %v4581 = vld [vmem:[%s4529 + $0xcc] sm:$0xf]
        %v4582 = vld [vmem:[%s4529 + $0xd0] sm:$0xf]
        %v4583 = vld [vmem:[%s4529 + $0xd4] sm:$0xf]
        %v4584 = vld [vmem:[%s4529 + $0xd8] sm:$0xf]
        %v4585 = vld [vmem:[%s4529 + $0xdc] sm:$0xf]
        %v4586 = vld [vmem:[%s4529 + $0xe0] sm:$0xf]
        %v4587 = vld [vmem:[%s4529 + $0xe4] sm:$0xf]
        %v4588 = vld [vmem:[%s4529 + $0xe8] sm:$0xf]
        %v4589 = vld [vmem:[%s4529 + $0xec] sm:$0xf]
        %v4590 = vld [vmem:[%s4529 + $0xf0] sm:$0xf]
        %v4591 = vld [vmem:[%s4529 + $0xf4] sm:$0xf]
        %v4592 = vld [vmem:[%s4529 + $0xf8] sm:$0xf]
        %v4593 = vld [vmem:[%s4529 + $0xfc] sm:$0xf]
        %v4594 = vld [vmem:[%s4529 + $0x100] sm:$0xf]
        %v4595 = vld [vmem:[%s4529 + $0x104] sm:$0xf]
        %v4596 = vld [vmem:[%s4529 + $0x108] sm:$0xf]
        %v4597 = vld [vmem:[%s4529 + $0x10c] sm:$0xf]
        %v4598 = vld [vmem:[%s4529 + $0x110] sm:$0xf]
        %v4599 = vld [vmem:[%s4529 + $0x114] sm:$0xf]
        %v4600 = vld [vmem:[%s4529 + $0x118] sm:$0xf]
        %v4601 = vld [vmem:[%s4529 + $0x11c] sm:$0xf]
        %v4602 = vld [vmem:[%s4529 + $0x120] sm:$0xf]
        %v4603 = vld [vmem:[%s4529 + $0x124] sm:$0xf]
        %v4604 = vld [vmem:[%s4529 + $0x128] sm:$0xf]
        %v4605 = vld [vmem:[%s4529 + $0x12c] sm:$0xf]
        %v4606 = vld [vmem:[%s4529 + $0x130] sm:$0xf]
        %v4607 = vld [vmem:[%s4529 + $0x134] sm:$0xf]
        %v4608 = vld [vmem:[%s4529 + $0x138] sm:$0xf]
        %v4609 = vld [vmem:[%s4529 + $0x13c] sm:$0xf]
        %v4610 = vld [vmem:[%s4529 + $0x140] sm:$0xf]
        %v4611 = vld [vmem:[%s4529 + $0x144] sm:$0xf]
        %v4612 = vld [vmem:[%s4529 + $0x148] sm:$0xf]
        %v4613 = vld [vmem:[%s4529 + $0x14c] sm:$0xf]
        %v4614 = vld [vmem:[%s4529 + $0x150] sm:$0xf]
        %v4615 = vld [vmem:[%s4529 + $0x154] sm:$0xf]
        %v4616 = vld [vmem:[%s4529 + $0x158] sm:$0xf]
        %v4617 = vld [vmem:[%s4529 + $0x15c] sm:$0xf]
        %v4618 = vld [vmem:[%s4529 + $0x160] sm:$0xf]
        %v4619 = vld [vmem:[%s4529 + $0x164] sm:$0xf]
        %v4620 = vld [vmem:[%s4529 + $0x168] sm:$0xf]
        %v4621 = vld [vmem:[%s4529 + $0x16c] sm:$0xf]
        %v4622 = vld [vmem:[%s4529 + $0x170] sm:$0xf]
        %v4623 = vld [vmem:[%s4529 + $0x174] sm:$0xf]
        %v4624 = vld [vmem:[%s4529 + $0x178] sm:$0xf]
        %v4625 = vld [vmem:[%s4529 + $0x17c] sm:$0xf]
        %v4626 = vld [vmem:[%s4529 + $0x180] sm:$0xf]
        %v4627 = vld [vmem:[%s4529 + $0x184] sm:$0xf]
        %v4628 = vld [vmem:[%s4529 + $0x188] sm:$0xf]
        %v4629 = vld [vmem:[%s4529 + $0x18c] sm:$0xf]
        %v4630 = vld [vmem:[%s4529 + $0x190] sm:$0xf]
        %v4631 = vld [vmem:[%s4529 + $0x194] sm:$0xf]
        %v4632 = vld [vmem:[%s4529 + $0x198] sm:$0xf]
        %v4633 = vld [vmem:[%s4529 + $0x19c] sm:$0xf]
        %v4634 = vld [vmem:[%s4529 + $0x1a0] sm:$0xf]
        %v4635 = vld [vmem:[%s4529 + $0x1a4] sm:$0xf]
        %v4636 = vld [vmem:[%s4529 + $0x1a8] sm:$0xf]
        %v4637 = vld [vmem:[%s4529 + $0x1ac] sm:$0xf]
        %v4638 = vld [vmem:[%s4529 + $0x1b0] sm:$0xf]
        %v4639 = vld [vmem:[%s4529 + $0x1b4] sm:$0xf]
        %v4640 = vld [vmem:[%s4529 + $0x1b8] sm:$0xf]
        %v4641 = vld [vmem:[%s4529 + $0x1bc] sm:$0xf]
        %v4642 = vld [vmem:[%s4529 + $0x1c0] sm:$0xf]
        %v4643 = vld [vmem:[%s4529 + $0x1c4] sm:$0xf]
        %v4644 = vld [vmem:[%s4529 + $0x1c8] sm:$0xf]
        %v4645 = vld [vmem:[%s4529 + $0x1cc] sm:$0xf]
        %v4646 = vld [vmem:[%s4529 + $0x1d0] sm:$0xf]
        %v4647 = vld [vmem:[%s4529 + $0x1d4] sm:$0xf]
        %v4648 = vld [vmem:[%s4529 + $0x1d8] sm:$0xf]
        %v4649 = vld [vmem:[%s4529 + $0x1dc] sm:$0xf]
        %v4650 = vld [vmem:[%s4529 + $0x1e0] sm:$0xf]
        %v4651 = vld [vmem:[%s4529 + $0x1e4] sm:$0xf]
        %v4652 = vld [vmem:[%s4529 + $0x1e8] sm:$0xf]
        %v4653 = vld [vmem:[%s4529 + $0x1ec] sm:$0xf]
        %v4654 = vld [vmem:[%s4529 + $0x1f0] sm:$0xf]
        %v4655 = vld [vmem:[%s4529 + $0x1f4] sm:$0xf]
        %v4656 = vld [vmem:[%s4529 + $0x1f8] sm:$0xf]
        %v4657 = vld [vmem:[%s4529 + $0x1fc] sm:$0xf]
        %v4666 = vunpack.c.l.b16 %v4530
        %v4667 = vunpack.c.l.b16 %v4531
        %v4668 = vunpack.c.l.b16 %v4532
        %v4669 = vunpack.c.l.b16 %v4533
        %v4670 = vunpack.c.l.b16 %v4534
        %v4671 = vunpack.c.l.b16 %v4535
        %v4672 = vunpack.c.l.b16 %v4536
        %v4673 = vunpack.c.l.b16 %v4537
        %v4674 = vpack.c.b16 %v4667, %v4666
        %v4675 = vpack.c.b16 %v4669, %v4668
        %v4676 = vpack.c.b16 %v4671, %v4670
        %v4677 = vpack.c.b16 %v4673, %v4672
        %v4683 = vsel %vm995, %v4513, 0
        %4685 = vmatprep.subr.bf16.mxu0 0
        %4686 = vmatpush1.bf16.msra.mxu0 %v4674
        %4687 = vmatprep.subr.bf16.mxu0 0
        %4688 = vmatpush1.bf16.msra.mxu0 %v4675
        %4689 = vmatprep.subr.bf16.mxu0 0
        %4690 = vmatpush1.bf16.msra.mxu0 %v4676
        %4691 = vmatprep.subr.bf16.mxu0 0
        %4692 = vmatpush1.bf16.msra.mxu0 %v4677
        %4693 = vmatprep.subr.bf16.mxu0 0
        %4694 = vmatpush1.bf16.msra.mxu0 0
        %4695 = vmatprep.subr.bf16.mxu0 0
        %4696 = vmatpush1.bf16.msra.mxu0 0
        %4697 = vmatprep.subr.bf16.mxu0 0
        %4698 = vmatpush1.bf16.msra.mxu0 0
        %4699 = vmatprep.subr.bf16.mxu0 0
        %4700 = vmatpush1.bf16.msra.mxu0 0
        %4701 = vmatprep.subr.bf16.mxu0 0
        %4702 = vmatpush1.bf16.msra.mxu0 0
        %4703 = vmatprep.subr.bf16.mxu0 0
        %4704 = vmatpush1.bf16.msra.mxu0 0
        %4705 = vmatprep.subr.bf16.mxu0 0
        %4706 = vmatpush1.bf16.msra.mxu0 0
        %4707 = vmatprep.subr.bf16.mxu0 0
        %4708 = vmatpush1.bf16.msra.mxu0 0
        %4709 = vmatprep.subr.bf16.mxu0 0
        %4710 = vmatpush1.bf16.msra.mxu0 0
        %4711 = vmatprep.subr.bf16.mxu0 0
        %4712 = vmatpush1.bf16.msra.mxu0 0
        %4713 = vmatprep.subr.bf16.mxu0 0
        %4714 = vmatpush1.bf16.msra.mxu0 0
        %4715 = vmatprep.subr.bf16.mxu0 0
        %4716 = vmatpush1.bf16.msra.mxu0 0
        %4717 = vmatprep.mubr.bf16.mxu0 0
        %4718 = vmatmul.mubr.bf16.gmra.mrb[0].mxu0 %v4683
        %v4719 = vpop.f32.mrb[0].mxu0
        %v4720 = vadd.f32 0.0, %v4719
        %v4721 = vpop.f32.mrb[0].mxu0
        %v4722 = vpop.f32.mrb[0].mxu0
        %v4723 = vpop.f32.mrb[0].mxu0
        %4724 = vdwg.mxu0
        %v4733 = vunpack.c.l.b16 %v4538
        %v4734 = vunpack.c.l.b16 %v4539
        %v4735 = vunpack.c.l.b16 %v4540
        %v4736 = vunpack.c.l.b16 %v4541
        %v4737 = vunpack.c.l.b16 %v4542
        %v4738 = vunpack.c.l.b16 %v4543
        %v4739 = vunpack.c.l.b16 %v4544
        %v4740 = vunpack.c.l.b16 %v4545
        %v4741 = vpack.c.b16 %v4734, %v4733
        %v4742 = vpack.c.b16 %v4736, %v4735
        %v4743 = vpack.c.b16 %v4738, %v4737
        %v4744 = vpack.c.b16 %v4740, %v4739
        %v4750 = vsel %vm995, %v4514, 0
        %4752 = vmatprep.subr.bf16.mxu0 0
        %4753 = vmatpush1.bf16.msra.mxu0 %v4741
        %4754 = vmatprep.subr.bf16.mxu0 0
        %4755 = vmatpush1.bf16.msra.mxu0 %v4742
        %4756 = vmatprep.subr.bf16.mxu0 0
        %4757 = vmatpush1.bf16.msra.mxu0 %v4743
        %4758 = vmatprep.subr.bf16.mxu0 0
        %4759 = vmatpush1.bf16.msra.mxu0 %v4744
        %4760 = vmatprep.subr.bf16.mxu0 0
        %4761 = vmatpush1.bf16.msra.mxu0 0
        %4762 = vmatprep.subr.bf16.mxu0 0
        %4763 = vmatpush1.bf16.msra.mxu0 0
        %4764 = vmatprep.subr.bf16.mxu0 0
        %4765 = vmatpush1.bf16.msra.mxu0 0
        %4766 = vmatprep.subr.bf16.mxu0 0
        %4767 = vmatpush1.bf16.msra.mxu0 0
        %4768 = vmatprep.subr.bf16.mxu0 0
        %4769 = vmatpush1.bf16.msra.mxu0 0
        %4770 = vmatprep.subr.bf16.mxu0 0
        %4771 = vmatpush1.bf16.msra.mxu0 0
        %4772 = vmatprep.subr.bf16.mxu0 0
        %4773 = vmatpush1.bf16.msra.mxu0 0
        %4774 = vmatprep.subr.bf16.mxu0 0
        %4775 = vmatpush1.bf16.msra.mxu0 0
        %4776 = vmatprep.subr.bf16.mxu0 0
        %4777 = vmatpush1.bf16.msra.mxu0 0
        %4778 = vmatprep.subr.bf16.mxu0 0
        %4779 = vmatpush1.bf16.msra.mxu0 0
        %4780 = vmatprep.subr.bf16.mxu0 0
        %4781 = vmatpush1.bf16.msra.mxu0 0
        %4782 = vmatprep.subr.bf16.mxu0 0
        %4783 = vmatpush1.bf16.msra.mxu0 0
        %4784 = vmatprep.mubr.bf16.mxu0 0
        %4785 = vmatmul.mubr.bf16.gmra.mrb[0].mxu0 %v4750
        %v4786 = vpop.f32.mrb[0].mxu0
        %v4787 = vadd.f32 0.0, %v4786
        %v4788 = vpop.f32.mrb[0].mxu0
        %v4789 = vpop.f32.mrb[0].mxu0
        %v4790 = vpop.f32.mrb[0].mxu0
        %4791 = vdwg.mxu0
        %v4800 = vunpack.c.l.b16 %v4546
        %v4801 = vunpack.c.l.b16 %v4547
        %v4802 = vunpack.c.l.b16 %v4548
        %v4803 = vunpack.c.l.b16 %v4549
        %v4804 = vunpack.c.l.b16 %v4550
        %v4805 = vunpack.c.l.b16 %v4551
        %v4806 = vunpack.c.l.b16 %v4552
        %v4807 = vunpack.c.l.b16 %v4553
        %v4808 = vpack.c.b16 %v4801, %v4800
        %v4809 = vpack.c.b16 %v4803, %v4802
        %v4810 = vpack.c.b16 %v4805, %v4804
        %v4811 = vpack.c.b16 %v4807, %v4806
        %v4817 = vsel %vm995, %v4515, 0
        %4819 = vmatprep.subr.bf16.mxu0 0
        %4820 = vmatpush1.bf16.msra.mxu0 %v4808
        %4821 = vmatprep.subr.bf16.mxu0 0
        %4822 = vmatpush1.bf16.msra.mxu0 %v4809
        %4823 = vmatprep.subr.bf16.mxu0 0
        %4824 = vmatpush1.bf16.msra.mxu0 %v4810
        %4825 = vmatprep.subr.bf16.mxu0 0
        %4826 = vmatpush1.bf16.msra.mxu0 %v4811
        %4827 = vmatprep.subr.bf16.mxu0 0
        %4828 = vmatpush1.bf16.msra.mxu0 0
        %4829 = vmatprep.subr.bf16.mxu0 0
        %4830 = vmatpush1.bf16.msra.mxu0 0
        %4831 = vmatprep.subr.bf16.mxu0 0
        %4832 = vmatpush1.bf16.msra.mxu0 0
        %4833 = vmatprep.subr.bf16.mxu0 0
        %4834 = vmatpush1.bf16.msra.mxu0 0
        %4835 = vmatprep.subr.bf16.mxu0 0
        %4836 = vmatpush1.bf16.msra.mxu0 0
        %4837 = vmatprep.subr.bf16.mxu0 0
        %4838 = vmatpush1.bf16.msra.mxu0 0
        %4839 = vmatprep.subr.bf16.mxu0 0
        %4840 = vmatpush1.bf16.msra.mxu0 0
        %4841 = vmatprep.subr.bf16.mxu0 0
        %4842 = vmatpush1.bf16.msra.mxu0 0
        %4843 = vmatprep.subr.bf16.mxu0 0
        %4844 = vmatpush1.bf16.msra.mxu0 0
        %4845 = vmatprep.subr.bf16.mxu0 0
        %4846 = vmatpush1.bf16.msra.mxu0 0
        %4847 = vmatprep.subr.bf16.mxu0 0
        %4848 = vmatpush1.bf16.msra.mxu0 0
        %4849 = vmatprep.subr.bf16.mxu0 0
        %4850 = vmatpush1.bf16.msra.mxu0 0
        %4851 = vmatprep.mubr.bf16.mxu0 0
        %4852 = vmatmul.mubr.bf16.gmra.mrb[0].mxu0 %v4817
        %v4853 = vpop.f32.mrb[0].mxu0
        %v4854 = vadd.f32 0.0, %v4853
        %v4855 = vpop.f32.mrb[0].mxu0
        %v4856 = vpop.f32.mrb[0].mxu0
        %v4857 = vpop.f32.mrb[0].mxu0
        %4858 = vdwg.mxu0
        %v4867 = vunpack.c.l.b16 %v4554
        %v4868 = vunpack.c.l.b16 %v4555
        %v4869 = vunpack.c.l.b16 %v4556
        %v4870 = vunpack.c.l.b16 %v4557
        %v4871 = vunpack.c.l.b16 %v4558
        %v4872 = vunpack.c.l.b16 %v4559
        %v4873 = vunpack.c.l.b16 %v4560
        %v4874 = vunpack.c.l.b16 %v4561
        %v4875 = vpack.c.b16 %v4868, %v4867
        %v4876 = vpack.c.b16 %v4870, %v4869
        %v4877 = vpack.c.b16 %v4872, %v4871
        %v4878 = vpack.c.b16 %v4874, %v4873
        %v4884 = vsel %vm995, %v4516, 0
        %4886 = vmatprep.subr.bf16.mxu0 0
        %4887 = vmatpush1.bf16.msra.mxu0 %v4875
        %4888 = vmatprep.subr.bf16.mxu0 0
        %4889 = vmatpush1.bf16.msra.mxu0 %v4876
        %4890 = vmatprep.subr.bf16.mxu0 0
        %4891 = vmatpush1.bf16.msra.mxu0 %v4877
        %4892 = vmatprep.subr.bf16.mxu0 0
        %4893 = vmatpush1.bf16.msra.mxu0 %v4878
        %4894 = vmatprep.subr.bf16.mxu0 0
        %4895 = vmatpush1.bf16.msra.mxu0 0
        %4896 = vmatprep.subr.bf16.mxu0 0
        %4897 = vmatpush1.bf16.msra.mxu0 0
        %4898 = vmatprep.subr.bf16.mxu0 0
        %4899 = vmatpush1.bf16.msra.mxu0 0
        %4900 = vmatprep.subr.bf16.mxu0 0
        %4901 = vmatpush1.bf16.msra.mxu0 0
        %4902 = vmatprep.subr.bf16.mxu0 0
        %4903 = vmatpush1.bf16.msra.mxu0 0
        %4904 = vmatprep.subr.bf16.mxu0 0
        %4905 = vmatpush1.bf16.msra.mxu0 0
        %4906 = vmatprep.subr.bf16.mxu0 0
        %4907 = vmatpush1.bf16.msra.mxu0 0
        %4908 = vmatprep.subr.bf16.mxu0 0
        %4909 = vmatpush1.bf16.msra.mxu0 0
        %4910 = vmatprep.subr.bf16.mxu0 0
        %4911 = vmatpush1.bf16.msra.mxu0 0
        %4912 = vmatprep.subr.bf16.mxu0 0
        %4913 = vmatpush1.bf16.msra.mxu0 0
        %4914 = vmatprep.subr.bf16.mxu0 0
        %4915 = vmatpush1.bf16.msra.mxu0 0
        %4916 = vmatprep.subr.bf16.mxu0 0
        %4917 = vmatpush1.bf16.msra.mxu0 0
        %4918 = vmatprep.mubr.bf16.mxu0 0
        %4919 = vmatmul.mubr.bf16.gmra.mrb[0].mxu0 %v4884
        %v4920 = vpop.f32.mrb[0].mxu0
        %v4921 = vadd.f32 0.0, %v4920
        %v4922 = vpop.f32.mrb[0].mxu0
        %v4923 = vpop.f32.mrb[0].mxu0
        %v4924 = vpop.f32.mrb[0].mxu0
        %4925 = vdwg.mxu0
        %v4934 = vunpack.c.l.b16 %v4562
        %v4935 = vunpack.c.l.b16 %v4563
        %v4936 = vunpack.c.l.b16 %v4564
        %v4937 = vunpack.c.l.b16 %v4565
        %v4938 = vunpack.c.l.b16 %v4566
        %v4939 = vunpack.c.l.b16 %v4567
        %v4940 = vunpack.c.l.b16 %v4568
        %v4941 = vunpack.c.l.b16 %v4569
        %v4942 = vpack.c.b16 %v4935, %v4934
        %v4943 = vpack.c.b16 %v4937, %v4936
        %v4944 = vpack.c.b16 %v4939, %v4938
        %v4945 = vpack.c.b16 %v4941, %v4940
        %v4951 = vsel %vm995, %v4517, 0
        %4953 = vmatprep.subr.bf16.mxu0 0
        %4954 = vmatpush1.bf16.msra.mxu0 %v4942
        %4955 = vmatprep.subr.bf16.mxu0 0
        %4956 = vmatpush1.bf16.msra.mxu0 %v4943
        %4957 = vmatprep.subr.bf16.mxu0 0
        %4958 = vmatpush1.bf16.msra.mxu0 %v4944
        %4959 = vmatprep.subr.bf16.mxu0 0
        %4960 = vmatpush1.bf16.msra.mxu0 %v4945
        %4961 = vmatprep.subr.bf16.mxu0 0
        %4962 = vmatpush1.bf16.msra.mxu0 0
        %4963 = vmatprep.subr.bf16.mxu0 0
        %4964 = vmatpush1.bf16.msra.mxu0 0
        %4965 = vmatprep.subr.bf16.mxu0 0
        %4966 = vmatpush1.bf16.msra.mxu0 0
        %4967 = vmatprep.subr.bf16.mxu0 0
        %4968 = vmatpush1.bf16.msra.mxu0 0
        %4969 = vmatprep.subr.bf16.mxu0 0
        %4970 = vmatpush1.bf16.msra.mxu0 0
        %4971 = vmatprep.subr.bf16.mxu0 0
        %4972 = vmatpush1.bf16.msra.mxu0 0
        %4973 = vmatprep.subr.bf16.mxu0 0
        %4974 = vmatpush1.bf16.msra.mxu0 0
        %4975 = vmatprep.subr.bf16.mxu0 0
        %4976 = vmatpush1.bf16.msra.mxu0 0
        %4977 = vmatprep.subr.bf16.mxu0 0
        %4978 = vmatpush1.bf16.msra.mxu0 0
        %4979 = vmatprep.subr.bf16.mxu0 0
        %4980 = vmatpush1.bf16.msra.mxu0 0
        %4981 = vmatprep.subr.bf16.mxu0 0
        %4982 = vmatpush1.bf16.msra.mxu0 0
        %4983 = vmatprep.subr.bf16.mxu0 0
        %4984 = vmatpush1.bf16.msra.mxu0 0
        %4985 = vmatprep.mubr.bf16.mxu0 0
        %4986 = vmatmul.mubr.bf16.gmra.mrb[0].mxu0 %v4951
        %v4987 = vpop.f32.mrb[0].mxu0
        %v4988 = vadd.f32 0.0, %v4987
        %v4989 = vpop.f32.mrb[0].mxu0
        %v4990 = vpop.f32.mrb[0].mxu0
        %v4991 = vpop.f32.mrb[0].mxu0
        %4992 = vdwg.mxu0
        %v5001 = vunpack.c.l.b16 %v4570
        %v5002 = vunpack.c.l.b16 %v4571
        %v5003 = vunpack.c.l.b16 %v4572
        %v5004 = vunpack.c.l.b16 %v4573
        %v5005 = vunpack.c.l.b16 %v4574
        %v5006 = vunpack.c.l.b16 %v4575
        %v5007 = vunpack.c.l.b16 %v4576
        %v5008 = vunpack.c.l.b16 %v4577
        %v5009 = vpack.c.b16 %v5002, %v5001
        %v5010 = vpack.c.b16 %v5004, %v5003
        %v5011 = vpack.c.b16 %v5006, %v5005
        %v5012 = vpack.c.b16 %v5008, %v5007
        %v5018 = vsel %vm995, %v4518, 0
        %5020 = vmatprep.subr.bf16.mxu0 0
        %5021 = vmatpush1.bf16.msra.mxu0 %v5009
        %5022 = vmatprep.subr.bf16.mxu0 0
        %5023 = vmatpush1.bf16.msra.mxu0 %v5010
        %5024 = vmatprep.subr.bf16.mxu0 0
        %5025 = vmatpush1.bf16.msra.mxu0 %v5011
        %5026 = vmatprep.subr.bf16.mxu0 0
        %5027 = vmatpush1.bf16.msra.mxu0 %v5012
        %5028 = vmatprep.subr.bf16.mxu0 0
        %5029 = vmatpush1.bf16.msra.mxu0 0
        %5030 = vmatprep.subr.bf16.mxu0 0
        %5031 = vmatpush1.bf16.msra.mxu0 0
        %5032 = vmatprep.subr.bf16.mxu0 0
        %5033 = vmatpush1.bf16.msra.mxu0 0
        %5034 = vmatprep.subr.bf16.mxu0 0
        %5035 = vmatpush1.bf16.msra.mxu0 0
        %5036 = vmatprep.subr.bf16.mxu0 0
        %5037 = vmatpush1.bf16.msra.mxu0 0
        %5038 = vmatprep.subr.bf16.mxu0 0
        %5039 = vmatpush1.bf16.msra.mxu0 0
        %5040 = vmatprep.subr.bf16.mxu0 0
        %5041 = vmatpush1.bf16.msra.mxu0 0
        %5042 = vmatprep.subr.bf16.mxu0 0
        %5043 = vmatpush1.bf16.msra.mxu0 0
        %5044 = vmatprep.subr.bf16.mxu0 0
        %5045 = vmatpush1.bf16.msra.mxu0 0
        %5046 = vmatprep.subr.bf16.mxu0 0
        %5047 = vmatpush1.bf16.msra.mxu0 0
        %5048 = vmatprep.subr.bf16.mxu0 0
        %5049 = vmatpush1.bf16.msra.mxu0 0
        %5050 = vmatprep.subr.bf16.mxu0 0
        %5051 = vmatpush1.bf16.msra.mxu0 0
        %5052 = vmatprep.mubr.bf16.mxu0 0
        %5053 = vmatmul.mubr.bf16.gmra.mrb[0].mxu0 %v5018
        %v5054 = vpop.f32.mrb[0].mxu0
        %v5055 = vadd.f32 0.0, %v5054
        %v5056 = vpop.f32.mrb[0].mxu0
        %v5057 = vpop.f32.mrb[0].mxu0
        %v5058 = vpop.f32.mrb[0].mxu0
        %5059 = vdwg.mxu0
        %v5068 = vunpack.c.l.b16 %v4578
        %v5069 = vunpack.c.l.b16 %v4579
        %v5070 = vunpack.c.l.b16 %v4580
        %v5071 = vunpack.c.l.b16 %v4581
        %v5072 = vunpack.c.l.b16 %v4582
        %v5073 = vunpack.c.l.b16 %v4583
        %v5074 = vunpack.c.l.b16 %v4584
        %v5075 = vunpack.c.l.b16 %v4585
        %v5076 = vpack.c.b16 %v5069, %v5068
        %v5077 = vpack.c.b16 %v5071, %v5070
        %v5078 = vpack.c.b16 %v5073, %v5072
        %v5079 = vpack.c.b16 %v5075, %v5074
        %v5085 = vsel %vm995, %v4519, 0
        %5087 = vmatprep.subr.bf16.mxu0 0
        %5088 = vmatpush1.bf16.msra.mxu0 %v5076
        %5089 = vmatprep.subr.bf16.mxu0 0
        %5090 = vmatpush1.bf16.msra.mxu0 %v5077
        %5091 = vmatprep.subr.bf16.mxu0 0
        %5092 = vmatpush1.bf16.msra.mxu0 %v5078
        %5093 = vmatprep.subr.bf16.mxu0 0
        %5094 = vmatpush1.bf16.msra.mxu0 %v5079
        %5095 = vmatprep.subr.bf16.mxu0 0
        %5096 = vmatpush1.bf16.msra.mxu0 0
        %5097 = vmatprep.subr.bf16.mxu0 0
        %5098 = vmatpush1.bf16.msra.mxu0 0
        %5099 = vmatprep.subr.bf16.mxu0 0
        %5100 = vmatpush1.bf16.msra.mxu0 0
        %5101 = vmatprep.subr.bf16.mxu0 0
        %5102 = vmatpush1.bf16.msra.mxu0 0
        %5103 = vmatprep.subr.bf16.mxu0 0
        %5104 = vmatpush1.bf16.msra.mxu0 0
        %5105 = vmatprep.subr.bf16.mxu0 0
        %5106 = vmatpush1.bf16.msra.mxu0 0
        %5107 = vmatprep.subr.bf16.mxu0 0
        %5108 = vmatpush1.bf16.msra.mxu0 0
        %5109 = vmatprep.subr.bf16.mxu0 0
        %5110 = vmatpush1.bf16.msra.mxu0 0
        %5111 = vmatprep.subr.bf16.mxu0 0
        %5112 = vmatpush1.bf16.msra.mxu0 0
        %5113 = vmatprep.subr.bf16.mxu0 0
        %5114 = vmatpush1.bf16.msra.mxu0 0
        %5115 = vmatprep.subr.bf16.mxu0 0
        %5116 = vmatpush1.bf16.msra.mxu0 0
        %5117 = vmatprep.subr.bf16.mxu0 0
        %5118 = vmatpush1.bf16.msra.mxu0 0
        %5119 = vmatprep.mubr.bf16.mxu0 0
        %5120 = vmatmul.mubr.bf16.gmra.mrb[0].mxu0 %v5085
        %v5121 = vpop.f32.mrb[0].mxu0
        %v5122 = vadd.f32 0.0, %v5121
        %v5123 = vpop.f32.mrb[0].mxu0
        %v5124 = vpop.f32.mrb[0].mxu0
        %v5125 = vpop.f32.mrb[0].mxu0
        %5126 = vdwg.mxu0
        %v5135 = vunpack.c.l.b16 %v4586
        %v5136 = vunpack.c.l.b16 %v4587
        %v5137 = vunpack.c.l.b16 %v4588
        %v5138 = vunpack.c.l.b16 %v4589
        %v5139 = vunpack.c.l.b16 %v4590
        %v5140 = vunpack.c.l.b16 %v4591
        %v5141 = vunpack.c.l.b16 %v4592
        %v5142 = vunpack.c.l.b16 %v4593
        %v5143 = vpack.c.b16 %v5136, %v5135
        %v5144 = vpack.c.b16 %v5138, %v5137
        %v5145 = vpack.c.b16 %v5140, %v5139
        %v5146 = vpack.c.b16 %v5142, %v5141
        %v5152 = vsel %vm995, %v4520, 0
        %5154 = vmatprep.subr.bf16.mxu0 0
        %5155 = vmatpush1.bf16.msra.mxu0 %v5143
        %5156 = vmatprep.subr.bf16.mxu0 0
        %5157 = vmatpush1.bf16.msra.mxu0 %v5144
        %5158 = vmatprep.subr.bf16.mxu0 0
        %5159 = vmatpush1.bf16.msra.mxu0 %v5145
        %5160 = vmatprep.subr.bf16.mxu0 0
        %5161 = vmatpush1.bf16.msra.mxu0 %v5146
        %5162 = vmatprep.subr.bf16.mxu0 0
        %5163 = vmatpush1.bf16.msra.mxu0 0
        %5164 = vmatprep.subr.bf16.mxu0 0
        %5165 = vmatpush1.bf16.msra.mxu0 0
        %5166 = vmatprep.subr.bf16.mxu0 0
        %5167 = vmatpush1.bf16.msra.mxu0 0
        %5168 = vmatprep.subr.bf16.mxu0 0
        %5169 = vmatpush1.bf16.msra.mxu0 0
        %5170 = vmatprep.subr.bf16.mxu0 0
        %5171 = vmatpush1.bf16.msra.mxu0 0
        %5172 = vmatprep.subr.bf16.mxu0 0
        %5173 = vmatpush1.bf16.msra.mxu0 0
        %5174 = vmatprep.subr.bf16.mxu0 0
        %5175 = vmatpush1.bf16.msra.mxu0 0
        %5176 = vmatprep.subr.bf16.mxu0 0
        %5177 = vmatpush1.bf16.msra.mxu0 0
        %5178 = vmatprep.subr.bf16.mxu0 0
        %5179 = vmatpush1.bf16.msra.mxu0 0
        %5180 = vmatprep.subr.bf16.mxu0 0
        %5181 = vmatpush1.bf16.msra.mxu0 0
        %5182 = vmatprep.subr.bf16.mxu0 0
        %5183 = vmatpush1.bf16.msra.mxu0 0
        %5184 = vmatprep.subr.bf16.mxu0 0
        %5185 = vmatpush1.bf16.msra.mxu0 0
        %5186 = vmatprep.mubr.bf16.mxu0 0
        %5187 = vmatmul.mubr.bf16.gmra.mrb[0].mxu0 %v5152
        %v5188 = vpop.f32.mrb[0].mxu0
        %v5189 = vadd.f32 0.0, %v5188
        %v5190 = vpop.f32.mrb[0].mxu0
        %v5191 = vpop.f32.mrb[0].mxu0
        %v5192 = vpop.f32.mrb[0].mxu0
        %5193 = vdwg.mxu0
        %v5202 = vunpack.c.l.b16 %v4594
        %v5203 = vunpack.c.l.b16 %v4595
        %v5204 = vunpack.c.l.b16 %v4596
        %v5205 = vunpack.c.l.b16 %v4597
        %v5206 = vunpack.c.l.b16 %v4598
        %v5207 = vunpack.c.l.b16 %v4599
        %v5208 = vunpack.c.l.b16 %v4600
        %v5209 = vunpack.c.l.b16 %v4601
        %v5210 = vpack.c.b16 %v5203, %v5202
        %v5211 = vpack.c.b16 %v5205, %v5204
        %v5212 = vpack.c.b16 %v5207, %v5206
        %v5213 = vpack.c.b16 %v5209, %v5208
        %v5219 = vsel %vm995, %v4521, 0
        %5221 = vmatprep.subr.bf16.mxu0 0
        %5222 = vmatpush1.bf16.msra.mxu0 %v5210
        %5223 = vmatprep.subr.bf16.mxu0 0
        %5224 = vmatpush1.bf16.msra.mxu0 %v5211
        %5225 = vmatprep.subr.bf16.mxu0 0
        %5226 = vmatpush1.bf16.msra.mxu0 %v5212
        %5227 = vmatprep.subr.bf16.mxu0 0
        %5228 = vmatpush1.bf16.msra.mxu0 %v5213
        %5229 = vmatprep.subr.bf16.mxu0 0
        %5230 = vmatpush1.bf16.msra.mxu0 0
        %5231 = vmatprep.subr.bf16.mxu0 0
        %5232 = vmatpush1.bf16.msra.mxu0 0
        %5233 = vmatprep.subr.bf16.mxu0 0
        %5234 = vmatpush1.bf16.msra.mxu0 0
        %5235 = vmatprep.subr.bf16.mxu0 0
        %5236 = vmatpush1.bf16.msra.mxu0 0
        %5237 = vmatprep.subr.bf16.mxu0 0
        %5238 = vmatpush1.bf16.msra.mxu0 0
        %5239 = vmatprep.subr.bf16.mxu0 0
        %5240 = vmatpush1.bf16.msra.mxu0 0
        %5241 = vmatprep.subr.bf16.mxu0 0
        %5242 = vmatpush1.bf16.msra.mxu0 0
        %5243 = vmatprep.subr.bf16.mxu0 0
        %5244 = vmatpush1.bf16.msra.mxu0 0
        %5245 = vmatprep.subr.bf16.mxu0 0
        %5246 = vmatpush1.bf16.msra.mxu0 0
        %5247 = vmatprep.subr.bf16.mxu0 0
        %5248 = vmatpush1.bf16.msra.mxu0 0
        %5249 = vmatprep.subr.bf16.mxu0 0
        %5250 = vmatpush1.bf16.msra.mxu0 0
        %5251 = vmatprep.subr.bf16.mxu0 0
        %5252 = vmatpush1.bf16.msra.mxu0 0
        %5253 = vmatprep.mubr.bf16.mxu0 0
        %5254 = vmatmul.mubr.bf16.gmra.mrb[0].mxu0 %v5219
        %v5255 = vpop.f32.mrb[0].mxu0
        %v5256 = vadd.f32 0.0, %v5255
        %v5257 = vpop.f32.mrb[0].mxu0
        %v5258 = vpop.f32.mrb[0].mxu0
        %v5259 = vpop.f32.mrb[0].mxu0
        %5260 = vdwg.mxu0
        %v5269 = vunpack.c.l.b16 %v4602
        %v5270 = vunpack.c.l.b16 %v4603
        %v5271 = vunpack.c.l.b16 %v4604
        %v5272 = vunpack.c.l.b16 %v4605
        %v5273 = vunpack.c.l.b16 %v4606
        %v5274 = vunpack.c.l.b16 %v4607
        %v5275 = vunpack.c.l.b16 %v4608
        %v5276 = vunpack.c.l.b16 %v4609
        %v5277 = vpack.c.b16 %v5270, %v5269
        %v5278 = vpack.c.b16 %v5272, %v5271
        %v5279 = vpack.c.b16 %v5274, %v5273
        %v5280 = vpack.c.b16 %v5276, %v5275
        %v5286 = vsel %vm995, %v4522, 0
        %5288 = vmatprep.subr.bf16.mxu0 0
        %5289 = vmatpush1.bf16.msra.mxu0 %v5277
        %5290 = vmatprep.subr.bf16.mxu0 0
        %5291 = vmatpush1.bf16.msra.mxu0 %v5278
        %5292 = vmatprep.subr.bf16.mxu0 0
        %5293 = vmatpush1.bf16.msra.mxu0 %v5279
        %5294 = vmatprep.subr.bf16.mxu0 0
        %5295 = vmatpush1.bf16.msra.mxu0 %v5280
        %5296 = vmatprep.subr.bf16.mxu0 0
        %5297 = vmatpush1.bf16.msra.mxu0 0
        %5298 = vmatprep.subr.bf16.mxu0 0
        %5299 = vmatpush1.bf16.msra.mxu0 0
        %5300 = vmatprep.subr.bf16.mxu0 0
        %5301 = vmatpush1.bf16.msra.mxu0 0
        %5302 = vmatprep.subr.bf16.mxu0 0
        %5303 = vmatpush1.bf16.msra.mxu0 0
        %5304 = vmatprep.subr.bf16.mxu0 0
        %5305 = vmatpush1.bf16.msra.mxu0 0
        %5306 = vmatprep.subr.bf16.mxu0 0
        %5307 = vmatpush1.bf16.msra.mxu0 0
        %5308 = vmatprep.subr.bf16.mxu0 0
        %5309 = vmatpush1.bf16.msra.mxu0 0
        %5310 = vmatprep.subr.bf16.mxu0 0
        %5311 = vmatpush1.bf16.msra.mxu0 0
        %5312 = vmatprep.subr.bf16.mxu0 0
        %5313 = vmatpush1.bf16.msra.mxu0 0
        %5314 = vmatprep.subr.bf16.mxu0 0
        %5315 = vmatpush1.bf16.msra.mxu0 0
        %5316 = vmatprep.subr.bf16.mxu0 0
        %5317 = vmatpush1.bf16.msra.mxu0 0
        %5318 = vmatprep.subr.bf16.mxu0 0
        %5319 = vmatpush1.bf16.msra.mxu0 0
        %5320 = vmatprep.mubr.bf16.mxu0 0
        %5321 = vmatmul.mubr.bf16.gmra.mrb[0].mxu0 %v5286
        %v5322 = vpop.f32.mrb[0].mxu0
        %v5323 = vadd.f32 0.0, %v5322
        %v5324 = vpop.f32.mrb[0].mxu0
        %v5325 = vpop.f32.mrb[0].mxu0
        %v5326 = vpop.f32.mrb[0].mxu0
        %5327 = vdwg.mxu0
        %v5336 = vunpack.c.l.b16 %v4610
        %v5337 = vunpack.c.l.b16 %v4611
        %v5338 = vunpack.c.l.b16 %v4612
        %v5339 = vunpack.c.l.b16 %v4613
        %v5340 = vunpack.c.l.b16 %v4614
        %v5341 = vunpack.c.l.b16 %v4615
        %v5342 = vunpack.c.l.b16 %v4616
        %v5343 = vunpack.c.l.b16 %v4617
        %v5344 = vpack.c.b16 %v5337, %v5336
        %v5345 = vpack.c.b16 %v5339, %v5338
        %v5346 = vpack.c.b16 %v5341, %v5340
        %v5347 = vpack.c.b16 %v5343, %v5342
        %v5353 = vsel %vm995, %v4523, 0
        %5355 = vmatprep.subr.bf16.mxu0 0
        %5356 = vmatpush1.bf16.msra.mxu0 %v5344
        %5357 = vmatprep.subr.bf16.mxu0 0
        %5358 = vmatpush1.bf16.msra.mxu0 %v5345
        %5359 = vmatprep.subr.bf16.mxu0 0
        %5360 = vmatpush1.bf16.msra.mxu0 %v5346
        %5361 = vmatprep.subr.bf16.mxu0 0
        %5362 = vmatpush1.bf16.msra.mxu0 %v5347
        %5363 = vmatprep.subr.bf16.mxu0 0
        %5364 = vmatpush1.bf16.msra.mxu0 0
        %5365 = vmatprep.subr.bf16.mxu0 0
        %5366 = vmatpush1.bf16.msra.mxu0 0
        %5367 = vmatprep.subr.bf16.mxu0 0
        %5368 = vmatpush1.bf16.msra.mxu0 0
        %5369 = vmatprep.subr.bf16.mxu0 0
        %5370 = vmatpush1.bf16.msra.mxu0 0
        %5371 = vmatprep.subr.bf16.mxu0 0
        %5372 = vmatpush1.bf16.msra.mxu0 0
        %5373 = vmatprep.subr.bf16.mxu0 0
        %5374 = vmatpush1.bf16.msra.mxu0 0
        %5375 = vmatprep.subr.bf16.mxu0 0
        %5376 = vmatpush1.bf16.msra.mxu0 0
        %5377 = vmatprep.subr.bf16.mxu0 0
        %5378 = vmatpush1.bf16.msra.mxu0 0
        %5379 = vmatprep.subr.bf16.mxu0 0
        %5380 = vmatpush1.bf16.msra.mxu0 0
        %5381 = vmatprep.subr.bf16.mxu0 0
        %5382 = vmatpush1.bf16.msra.mxu0 0
        %5383 = vmatprep.subr.bf16.mxu0 0
        %5384 = vmatpush1.bf16.msra.mxu0 0
        %5385 = vmatprep.subr.bf16.mxu0 0
        %5386 = vmatpush1.bf16.msra.mxu0 0
        %5387 = vmatprep.mubr.bf16.mxu0 0
        %5388 = vmatmul.mubr.bf16.gmra.mrb[0].mxu0 %v5353
        %v5389 = vpop.f32.mrb[0].mxu0
        %v5390 = vadd.f32 0.0, %v5389
        %v5391 = vpop.f32.mrb[0].mxu0
        %v5392 = vpop.f32.mrb[0].mxu0
        %v5393 = vpop.f32.mrb[0].mxu0
        %5394 = vdwg.mxu0
        %v5403 = vunpack.c.l.b16 %v4618
        %v5404 = vunpack.c.l.b16 %v4619
        %v5405 = vunpack.c.l.b16 %v4620
        %v5406 = vunpack.c.l.b16 %v4621
        %v5407 = vunpack.c.l.b16 %v4622
        %v5408 = vunpack.c.l.b16 %v4623
        %v5409 = vunpack.c.l.b16 %v4624
        %v5410 = vunpack.c.l.b16 %v4625
        %v5411 = vpack.c.b16 %v5404, %v5403
        %v5412 = vpack.c.b16 %v5406, %v5405
        %v5413 = vpack.c.b16 %v5408, %v5407
        %v5414 = vpack.c.b16 %v5410, %v5409
        %v5420 = vsel %vm995, %v4524, 0
        %5422 = vmatprep.subr.bf16.mxu0 0
        %5423 = vmatpush1.bf16.msra.mxu0 %v5411
        %5424 = vmatprep.subr.bf16.mxu0 0
        %5425 = vmatpush1.bf16.msra.mxu0 %v5412
        %5426 = vmatprep.subr.bf16.mxu0 0
        %5427 = vmatpush1.bf16.msra.mxu0 %v5413
        %5428 = vmatprep.subr.bf16.mxu0 0
        %5429 = vmatpush1.bf16.msra.mxu0 %v5414
        %5430 = vmatprep.subr.bf16.mxu0 0
        %5431 = vmatpush1.bf16.msra.mxu0 0
        %5432 = vmatprep.subr.bf16.mxu0 0
        %5433 = vmatpush1.bf16.msra.mxu0 0
        %5434 = vmatprep.subr.bf16.mxu0 0
        %5435 = vmatpush1.bf16.msra.mxu0 0
        %5436 = vmatprep.subr.bf16.mxu0 0
        %5437 = vmatpush1.bf16.msra.mxu0 0
        %5438 = vmatprep.subr.bf16.mxu0 0
        %5439 = vmatpush1.bf16.msra.mxu0 0
        %5440 = vmatprep.subr.bf16.mxu0 0
        %5441 = vmatpush1.bf16.msra.mxu0 0
        %5442 = vmatprep.subr.bf16.mxu0 0
        %5443 = vmatpush1.bf16.msra.mxu0 0
        %5444 = vmatprep.subr.bf16.mxu0 0
        %5445 = vmatpush1.bf16.msra.mxu0 0
        %5446 = vmatprep.subr.bf16.mxu0 0
        %5447 = vmatpush1.bf16.msra.mxu0 0
        %5448 = vmatprep.subr.bf16.mxu0 0
        %5449 = vmatpush1.bf16.msra.mxu0 0
        %5450 = vmatprep.subr.bf16.mxu0 0
        %5451 = vmatpush1.bf16.msra.mxu0 0
        %5452 = vmatprep.subr.bf16.mxu0 0
        %5453 = vmatpush1.bf16.msra.mxu0 0
        %5454 = vmatprep.mubr.bf16.mxu0 0
        %5455 = vmatmul.mubr.bf16.gmra.mrb[0].mxu0 %v5420
        %v5456 = vpop.f32.mrb[0].mxu0
        %v5457 = vadd.f32 0.0, %v5456
        %v5458 = vpop.f32.mrb[0].mxu0
        %v5459 = vpop.f32.mrb[0].mxu0
        %v5460 = vpop.f32.mrb[0].mxu0
        %5461 = vdwg.mxu0
        %v5470 = vunpack.c.l.b16 %v4626
        %v5471 = vunpack.c.l.b16 %v4627
        %v5472 = vunpack.c.l.b16 %v4628
        %v5473 = vunpack.c.l.b16 %v4629
        %v5474 = vunpack.c.l.b16 %v4630
        %v5475 = vunpack.c.l.b16 %v4631
        %v5476 = vunpack.c.l.b16 %v4632
        %v5477 = vunpack.c.l.b16 %v4633
        %v5478 = vpack.c.b16 %v5471, %v5470
        %v5479 = vpack.c.b16 %v5473, %v5472
        %v5480 = vpack.c.b16 %v5475, %v5474
        %v5481 = vpack.c.b16 %v5477, %v5476
        %v5487 = vsel %vm995, %v4525, 0
        %5489 = vmatprep.subr.bf16.mxu0 0
        %5490 = vmatpush1.bf16.msra.mxu0 %v5478
        %5491 = vmatprep.subr.bf16.mxu0 0
        %5492 = vmatpush1.bf16.msra.mxu0 %v5479
        %5493 = vmatprep.subr.bf16.mxu0 0
        %5494 = vmatpush1.bf16.msra.mxu0 %v5480
        %5495 = vmatprep.subr.bf16.mxu0 0
        %5496 = vmatpush1.bf16.msra.mxu0 %v5481
        %5497 = vmatprep.subr.bf16.mxu0 0
        %5498 = vmatpush1.bf16.msra.mxu0 0
        %5499 = vmatprep.subr.bf16.mxu0 0
        %5500 = vmatpush1.bf16.msra.mxu0 0
        %5501 = vmatprep.subr.bf16.mxu0 0
        %5502 = vmatpush1.bf16.msra.mxu0 0
        %5503 = vmatprep.subr.bf16.mxu0 0
        %5504 = vmatpush1.bf16.msra.mxu0 0
        %5505 = vmatprep.subr.bf16.mxu0 0
        %5506 = vmatpush1.bf16.msra.mxu0 0
        %5507 = vmatprep.subr.bf16.mxu0 0
        %5508 = vmatpush1.bf16.msra.mxu0 0
        %5509 = vmatprep.subr.bf16.mxu0 0
        %5510 = vmatpush1.bf16.msra.mxu0 0
        %5511 = vmatprep.subr.bf16.mxu0 0
        %5512 = vmatpush1.bf16.msra.mxu0 0
        %5513 = vmatprep.subr.bf16.mxu0 0
        %5514 = vmatpush1.bf16.msra.mxu0 0
        %5515 = vmatprep.subr.bf16.mxu0 0
        %5516 = vmatpush1.bf16.msra.mxu0 0
        %5517 = vmatprep.subr.bf16.mxu0 0
        %5518 = vmatpush1.bf16.msra.mxu0 0
        %5519 = vmatprep.subr.bf16.mxu0 0
        %5520 = vmatpush1.bf16.msra.mxu0 0
        %5521 = vmatprep.mubr.bf16.mxu0 0
        %5522 = vmatmul.mubr.bf16.gmra.mrb[0].mxu0 %v5487
        %v5523 = vpop.f32.mrb[0].mxu0
        %v5524 = vadd.f32 0.0, %v5523
        %v5525 = vpop.f32.mrb[0].mxu0
        %v5526 = vpop.f32.mrb[0].mxu0
        %v5527 = vpop.f32.mrb[0].mxu0
        %5528 = vdwg.mxu0
        %v5537 = vunpack.c.l.b16 %v4634
        %v5538 = vunpack.c.l.b16 %v4635
        %v5539 = vunpack.c.l.b16 %v4636
        %v5540 = vunpack.c.l.b16 %v4637
        %v5541 = vunpack.c.l.b16 %v4638
        %v5542 = vunpack.c.l.b16 %v4639
        %v5543 = vunpack.c.l.b16 %v4640
        %v5544 = vunpack.c.l.b16 %v4641
        %v5545 = vpack.c.b16 %v5538, %v5537
        %v5546 = vpack.c.b16 %v5540, %v5539
        %v5547 = vpack.c.b16 %v5542, %v5541
        %v5548 = vpack.c.b16 %v5544, %v5543
        %v5554 = vsel %vm995, %v4526, 0
        %5556 = vmatprep.subr.bf16.mxu0 0
        %5557 = vmatpush1.bf16.msra.mxu0 %v5545
        %5558 = vmatprep.subr.bf16.mxu0 0
        %5559 = vmatpush1.bf16.msra.mxu0 %v5546
        %5560 = vmatprep.subr.bf16.mxu0 0
        %5561 = vmatpush1.bf16.msra.mxu0 %v5547
        %5562 = vmatprep.subr.bf16.mxu0 0
        %5563 = vmatpush1.bf16.msra.mxu0 %v5548
        %5564 = vmatprep.subr.bf16.mxu0 0
        %5565 = vmatpush1.bf16.msra.mxu0 0
        %5566 = vmatprep.subr.bf16.mxu0 0
        %5567 = vmatpush1.bf16.msra.mxu0 0
        %5568 = vmatprep.subr.bf16.mxu0 0
        %5569 = vmatpush1.bf16.msra.mxu0 0
        %5570 = vmatprep.subr.bf16.mxu0 0
        %5571 = vmatpush1.bf16.msra.mxu0 0
        %5572 = vmatprep.subr.bf16.mxu0 0
        %5573 = vmatpush1.bf16.msra.mxu0 0
        %5574 = vmatprep.subr.bf16.mxu0 0
        %5575 = vmatpush1.bf16.msra.mxu0 0
        %5576 = vmatprep.subr.bf16.mxu0 0
        %5577 = vmatpush1.bf16.msra.mxu0 0
        %5578 = vmatprep.subr.bf16.mxu0 0
        %5579 = vmatpush1.bf16.msra.mxu0 0
        %5580 = vmatprep.subr.bf16.mxu0 0
        %5581 = vmatpush1.bf16.msra.mxu0 0
        %5582 = vmatprep.subr.bf16.mxu0 0
        %5583 = vmatpush1.bf16.msra.mxu0 0
        %5584 = vmatprep.subr.bf16.mxu0 0
        %5585 = vmatpush1.bf16.msra.mxu0 0
        %5586 = vmatprep.subr.bf16.mxu0 0
        %5587 = vmatpush1.bf16.msra.mxu0 0
        %5588 = vmatprep.mubr.bf16.mxu0 0
        %5589 = vmatmul.mubr.bf16.gmra.mrb[0].mxu0 %v5554
        %v5590 = vpop.f32.mrb[0].mxu0
        %v5591 = vadd.f32 0.0, %v5590
        %v5592 = vpop.f32.mrb[0].mxu0
        %v5593 = vpop.f32.mrb[0].mxu0
        %v5594 = vpop.f32.mrb[0].mxu0
        %5595 = vdwg.mxu0
        %v5604 = vunpack.c.l.b16 %v4642
        %v5605 = vunpack.c.l.b16 %v4643
        %v5606 = vunpack.c.l.b16 %v4644
        %v5607 = vunpack.c.l.b16 %v4645
        %v5608 = vunpack.c.l.b16 %v4646
        %v5609 = vunpack.c.l.b16 %v4647
        %v5610 = vunpack.c.l.b16 %v4648
        %v5611 = vunpack.c.l.b16 %v4649
        %v5612 = vpack.c.b16 %v5605, %v5604
        %v5613 = vpack.c.b16 %v5607, %v5606
        %v5614 = vpack.c.b16 %v5609, %v5608
        %v5615 = vpack.c.b16 %v5611, %v5610
        %v5621 = vsel %vm995, %v4527, 0
        %5623 = vmatprep.subr.bf16.mxu0 0
        %5624 = vmatpush1.bf16.msra.mxu0 %v5612
        %5625 = vmatprep.subr.bf16.mxu0 0
        %5626 = vmatpush1.bf16.msra.mxu0 %v5613
        %5627 = vmatprep.subr.bf16.mxu0 0
        %5628 = vmatpush1.bf16.msra.mxu0 %v5614
        %5629 = vmatprep.subr.bf16.mxu0 0
        %5630 = vmatpush1.bf16.msra.mxu0 %v5615
        %5631 = vmatprep.subr.bf16.mxu0 0
        %5632 = vmatpush1.bf16.msra.mxu0 0
        %5633 = vmatprep.subr.bf16.mxu0 0
        %5634 = vmatpush1.bf16.msra.mxu0 0
        %5635 = vmatprep.subr.bf16.mxu0 0
        %5636 = vmatpush1.bf16.msra.mxu0 0
        %5637 = vmatprep.subr.bf16.mxu0 0
        %5638 = vmatpush1.bf16.msra.mxu0 0
        %5639 = vmatprep.subr.bf16.mxu0 0
        %5640 = vmatpush1.bf16.msra.mxu0 0
        %5641 = vmatprep.subr.bf16.mxu0 0
        %5642 = vmatpush1.bf16.msra.mxu0 0
        %5643 = vmatprep.subr.bf16.mxu0 0
        %5644 = vmatpush1.bf16.msra.mxu0 0
        %5645 = vmatprep.subr.bf16.mxu0 0
        %5646 = vmatpush1.bf16.msra.mxu0 0
        %5647 = vmatprep.subr.bf16.mxu0 0
        %5648 = vmatpush1.bf16.msra.mxu0 0
        %5649 = vmatprep.subr.bf16.mxu0 0
        %5650 = vmatpush1.bf16.msra.mxu0 0
        %5651 = vmatprep.subr.bf16.mxu0 0
        %5652 = vmatpush1.bf16.msra.mxu0 0
        %5653 = vmatprep.subr.bf16.mxu0 0
        %5654 = vmatpush1.bf16.msra.mxu0 0
        %5655 = vmatprep.mubr.bf16.mxu0 0
        %5656 = vmatmul.mubr.bf16.gmra.mrb[0].mxu0 %v5621
        %v5657 = vpop.f32.mrb[0].mxu0
        %v5658 = vadd.f32 0.0, %v5657
        %v5659 = vpop.f32.mrb[0].mxu0
        %v5660 = vpop.f32.mrb[0].mxu0
        %v5661 = vpop.f32.mrb[0].mxu0
        %5662 = vdwg.mxu0
        %v5671 = vunpack.c.l.b16 %v4650
        %v5672 = vunpack.c.l.b16 %v4651
        %v5673 = vunpack.c.l.b16 %v4652
        %v5674 = vunpack.c.l.b16 %v4653
        %v5675 = vunpack.c.l.b16 %v4654
        %v5676 = vunpack.c.l.b16 %v4655
        %v5677 = vunpack.c.l.b16 %v4656
        %v5678 = vunpack.c.l.b16 %v4657
        %v5679 = vpack.c.b16 %v5672, %v5671
        %v5680 = vpack.c.b16 %v5674, %v5673
        %v5681 = vpack.c.b16 %v5676, %v5675
        %v5682 = vpack.c.b16 %v5678, %v5677
        %v5688 = vsel %vm995, %v4528, 0
        %5690 = vmatprep.subr.bf16.mxu0 0
        %5691 = vmatpush1.bf16.msra.mxu0 %v5679
        %5692 = vmatprep.subr.bf16.mxu0 0
        %5693 = vmatpush1.bf16.msra.mxu0 %v5680
        %5694 = vmatprep.subr.bf16.mxu0 0
        %5695 = vmatpush1.bf16.msra.mxu0 %v5681
        %5696 = vmatprep.subr.bf16.mxu0 0
        %5697 = vmatpush1.bf16.msra.mxu0 %v5682
        %5698 = vmatprep.subr.bf16.mxu0 0
        %5699 = vmatpush1.bf16.msra.mxu0 0
        %5700 = vmatprep.subr.bf16.mxu0 0
        %5701 = vmatpush1.bf16.msra.mxu0 0
        %5702 = vmatprep.subr.bf16.mxu0 0
        %5703 = vmatpush1.bf16.msra.mxu0 0
        %5704 = vmatprep.subr.bf16.mxu0 0
        %5705 = vmatpush1.bf16.msra.mxu0 0
        %5706 = vmatprep.subr.bf16.mxu0 0
        %5707 = vmatpush1.bf16.msra.mxu0 0
        %5708 = vmatprep.subr.bf16.mxu0 0
        %5709 = vmatpush1.bf16.msra.mxu0 0
        %5710 = vmatprep.subr.bf16.mxu0 0
        %5711 = vmatpush1.bf16.msra.mxu0 0
        %5712 = vmatprep.subr.bf16.mxu0 0
        %5713 = vmatpush1.bf16.msra.mxu0 0
        %5714 = vmatprep.subr.bf16.mxu0 0
        %5715 = vmatpush1.bf16.msra.mxu0 0
        %5716 = vmatprep.subr.bf16.mxu0 0
        %5717 = vmatpush1.bf16.msra.mxu0 0
        %5718 = vmatprep.subr.bf16.mxu0 0
        %5719 = vmatpush1.bf16.msra.mxu0 0
        %5720 = vmatprep.subr.bf16.mxu0 0
        %5721 = vmatpush1.bf16.msra.mxu0 0
        %5722 = vmatprep.mubr.bf16.mxu0 0
        %5723 = vmatmul.mubr.bf16.gmra.mrb[0].mxu0 %v5688
        %v5724 = vpop.f32.mrb[0].mxu0
        %v5725 = vadd.f32 0.0, %v5724
        %v5726 = vpop.f32.mrb[0].mxu0
        %v5727 = vpop.f32.mrb[0].mxu0
        %v5728 = vpop.f32.mrb[0].mxu0
        %5729 = vdwg.mxu0
        %v5746 = vrot.slane %v4787, 7
        %v5747 = vsel %vm2061, %v5746, %v4720
        %v5748 = vrot.slane %v4854, 6
        %v5749 = vsel %vm2064, %v5748, %v5747
        %v5750 = vrot.slane %v4921, 5
        %v5751 = vsel %vm2067, %v5750, %v5749
        %v5752 = vrot.slane %v4988, 4
        %v5753 = vsel %vm2070, %v5752, %v5751
        %v5754 = vrot.slane %v5055, 3
        %v5755 = vsel %vm2073, %v5754, %v5753
        %v5756 = vrot.slane %v5122, 2
        %v5757 = vsel %vm2076, %v5756, %v5755
        %v5758 = vrot.slane %v5189, 1
        %v5759 = vsel %vm2079, %v5758, %v5757
        %v5760 = vrot.slane %v5323, 7
        %v5761 = vsel %vm2061, %v5760, %v5256
        %v5762 = vrot.slane %v5390, 6
        %v5763 = vsel %vm2064, %v5762, %v5761
        %v5764 = vrot.slane %v5457, 5
        %v5765 = vsel %vm2067, %v5764, %v5763
        %v5766 = vrot.slane %v5524, 4
        %v5767 = vsel %vm2070, %v5766, %v5765
        %v5768 = vrot.slane %v5591, 3
        %v5769 = vsel %vm2073, %v5768, %v5767
        %v5770 = vrot.slane %v5658, 2
        %v5771 = vsel %vm2076, %v5770, %v5769
        %v5772 = vrot.slane %v5725, 1
        %v5773 = vsel %vm2079, %v5772, %v5771
        %5776 = vrot.lane.b32.xlu0 %v5759, 96
        %v5777 = vpop.permute.xlu0 %5776
        %5778 = vrot.lane.b32.xlu0 %v5773, 96
        %v5779 = vpop.permute.xlu0 %5778
        %s5782 = scalar_lea.vmem %s6, 64
        %v5783 = vld [vmem:[%s5782] sm:$0xff]
        %v5784 = vld [vmem:[%s5782 + $0x8] sm:$0xff]
        %v5785 = vld [vmem:[%s5782 + $0x10] sm:$0xff]
        %v5786 = vld [vmem:[%s5782 + $0x18] sm:$0xff]
        %s5787 = scalar_lea.vmem [#allocation9], 2
        %v5788 = vld [vmem:[%s5787] sm:$0x1]
        %v5790 = vlaneseq
        %v5791 = vshrl.u32 %v5790, 7
        %v5792 = vsub.s32 0, %v5791
        %v5793 = vrot.slane %v5788, %v5792
        %v5796 = vsel %vm583, %v4297, 0
        %v5799 = vsel %vm583, %v4298, 0
        %v5802 = vsel %vm583, %v4299, 0
        %v5805 = vsel %vm583, %v4300, 0
        %v5808 = vsel %vm583, %v4301, 0
        %5810 = vmatprep.subr.mxu0 0.0
        %5811 = vmatpush1.msra.mxu0 %v5783
        %5812 = vmatprep.subr.mxu0 0.0
        %5813 = vmatpush1.msra.mxu0 %v5784
        %5814 = vmatprep.subr.mxu0 0.0
        %5815 = vmatpush1.msra.mxu0 %v5785
        %5816 = vmatprep.subr.mxu0 0.0
        %5817 = vmatpush1.msra.mxu0 %v5786
        %5818 = vmatprep.subr.mxu0 0.0
        %5819 = vmatpush1.msra.mxu0 0.0
        %5820 = vmatprep.subr.mxu0 0.0
        %5821 = vmatpush1.msra.mxu0 0.0
        %5822 = vmatprep.subr.mxu0 0.0
        %5823 = vmatpush1.msra.mxu0 0.0
        %5824 = vmatprep.subr.mxu0 0.0
        %5825 = vmatpush1.msra.mxu0 0.0
        %5826 = vmatprep.subr.mxu0 0.0
        %5827 = vmatpush1.msra.mxu0 0.0
        %5828 = vmatprep.subr.mxu0 0.0
        %5829 = vmatpush1.msra.mxu0 0.0
        %5830 = vmatprep.subr.mxu0 0.0
        %5831 = vmatpush1.msra.mxu0 0.0
        %5832 = vmatprep.subr.mxu0 0.0
        %5833 = vmatpush1.msra.mxu0 0.0
        %5834 = vmatprep.subr.mxu0 0.0
        %5835 = vmatpush1.msra.mxu0 0.0
        %5836 = vmatprep.subr.mxu0 0.0
        %5837 = vmatpush1.msra.mxu0 0.0
        %5838 = vmatprep.subr.mxu0 0.0
        %5839 = vmatpush1.msra.mxu0 0.0
        %5840 = vmatprep.subr.mxu0 0.0
        %5841 = vmatpush1.msra.mxu0 0.0
        %5842 = vmatprep.subr.mxu0 0.0
        %5843 = vmatpush1.msra.mxu0 0.0
        %5844 = vmatprep.subr.mxu0 0.0
        %5845 = vmatpush1.msra.mxu0 0.0
        %5846 = vmatprep.subr.mxu0 0.0
        %5847 = vmatpush1.msra.mxu0 0.0
        %5848 = vmatprep.subr.mxu0 0.0
        %5849 = vmatpush1.msra.mxu0 0.0
        %5850 = vmatprep.subr.mxu0 0.0
        %5851 = vmatpush1.msra.mxu0 0.0
        %5852 = vmatprep.subr.mxu0 0.0
        %5853 = vmatpush1.msra.mxu0 0.0
        %5854 = vmatprep.subr.mxu0 0.0
        %5855 = vmatpush1.msra.mxu0 0.0
        %5856 = vmatprep.subr.mxu0 0.0
        %5857 = vmatpush1.msra.mxu0 0.0
        %5858 = vmatprep.subr.mxu0 0.0
        %5859 = vmatpush1.msra.mxu0 0.0
        %5860 = vmatprep.subr.mxu0 0.0
        %5861 = vmatpush1.msra.mxu0 0.0
        %5862 = vmatprep.subr.mxu0 0.0
        %5863 = vmatpush1.msra.mxu0 0.0
        %5864 = vmatprep.subr.mxu0 0.0
        %5865 = vmatpush1.msra.mxu0 0.0
        %5866 = vmatprep.subr.mxu0 0.0
        %5867 = vmatpush1.msra.mxu0 0.0
        %5868 = vmatprep.subr.mxu0 0.0
        %5869 = vmatpush1.msra.mxu0 0.0
        %5870 = vmatprep.subr.mxu0 0.0
        %5871 = vmatpush1.msra.mxu0 0.0
        %5872 = vmatprep.subr.mxu0 0.0
        %5873 = vmatpush1.msra.mxu0 0.0
        %5874 = vmatprep.mubr.f32.mxu0 0.0
        %5875 = vmatmul.mubr.f32.gmra.mrb[0].mxu0 %v5796
        %v5876 = vpop.f32.mrb[0].mxu0
        %v5877 = vadd.f32 %v5793, %v5876
        %v5878 = vpop.f32.mrb[0].mxu0
        %5879 = vmatprep.mubr.f32.mxu0 0.0
        %5880 = vmatmul.mubr.f32.gmra.mrb[0].mxu0 %v5799
        %v5881 = vpop.f32.mrb[0].mxu0
        %v5882 = vadd.f32 %v5793, %v5881
        %v5883 = vpop.f32.mrb[0].mxu0
        %5884 = vmatprep.mubr.f32.mxu0 0.0
        %5885 = vmatmul.mubr.f32.gmra.mrb[0].mxu0 %v5802
        %v5886 = vpop.f32.mrb[0].mxu0
        %v5887 = vadd.f32 %v5793, %v5886
        %v5888 = vpop.f32.mrb[0].mxu0
        %5889 = vmatprep.mubr.f32.mxu0 0.0
        %5890 = vmatmul.mubr.f32.gmra.mrb[0].mxu0 %v5805
        %v5891 = vpop.f32.mrb[0].mxu0
        %v5892 = vadd.f32 %v5793, %v5891
        %v5893 = vpop.f32.mrb[0].mxu0
        %5894 = vmatprep.mubr.f32.mxu0 0.0
        %5895 = vmatmul.mubr.f32.gmra.mrb[0].mxu0 %v5808
        %v5896 = vpop.f32.mrb[0].mxu0
        %v5897 = vadd.f32 %v5793, %v5896
        %v5898 = vpop.f32.mrb[0].mxu0
        %5899 = vdwg.mxu0
        %5900 = vmatprep.subr.mxu0 0.0
        %5901 = vmatpush1.msra.mxu0 %v5759
        %5902 = vmatprep.subr.mxu0 0.0
        %5903 = vmatpush1.msra.mxu0 %v5773
        %5904 = vmatprep.subr.mxu0 0.0
        %5905 = vmatpush1.msra.mxu0 %v5777
        %5906 = vmatprep.subr.mxu0 0.0
        %5907 = vmatpush1.msra.mxu0 %v5779
        %5908 = vmatprep.subr.mxu0 0.0
        %5909 = vmatpush1.msra.mxu0 0.0
        %5910 = vmatprep.subr.mxu0 0.0
        %5911 = vmatpush1.msra.mxu0 0.0
        %5912 = vmatprep.subr.mxu0 0.0
        %5913 = vmatpush1.msra.mxu0 0.0
        %5914 = vmatprep.subr.mxu0 0.0
        %5915 = vmatpush1.msra.mxu0 0.0
        %5916 = vmatprep.subr.mxu0 0.0
        %5917 = vmatpush1.msra.mxu0 0.0
        %5918 = vmatprep.subr.mxu0 0.0
        %5919 = vmatpush1.msra.mxu0 0.0
        %5920 = vmatprep.subr.mxu0 0.0
        %5921 = vmatpush1.msra.mxu0 0.0
        %5922 = vmatprep.subr.mxu0 0.0
        %5923 = vmatpush1.msra.mxu0 0.0
        %5924 = vmatprep.subr.mxu0 0.0
        %5925 = vmatpush1.msra.mxu0 0.0
        %5926 = vmatprep.subr.mxu0 0.0
        %5927 = vmatpush1.msra.mxu0 0.0
        %5928 = vmatprep.subr.mxu0 0.0
        %5929 = vmatpush1.msra.mxu0 0.0
        %5930 = vmatprep.subr.mxu0 0.0
        %5931 = vmatpush1.msra.mxu0 0.0
        %5932 = vmatprep.subr.mxu0 0.0
        %5933 = vmatpush1.msra.mxu0 0.0
        %5934 = vmatprep.subr.mxu0 0.0
        %5935 = vmatpush1.msra.mxu0 0.0
        %5936 = vmatprep.subr.mxu0 0.0
        %5937 = vmatpush1.msra.mxu0 0.0
        %5938 = vmatprep.subr.mxu0 0.0
        %5939 = vmatpush1.msra.mxu0 0.0
        %5940 = vmatprep.subr.mxu0 0.0
        %5941 = vmatpush1.msra.mxu0 0.0
        %5942 = vmatprep.subr.mxu0 0.0
        %5943 = vmatpush1.msra.mxu0 0.0
        %5944 = vmatprep.subr.mxu0 0.0
        %5945 = vmatpush1.msra.mxu0 0.0
        %5946 = vmatprep.subr.mxu0 0.0
        %5947 = vmatpush1.msra.mxu0 0.0
        %5948 = vmatprep.subr.mxu0 0.0
        %5949 = vmatpush1.msra.mxu0 0.0
        %5950 = vmatprep.subr.mxu0 0.0
        %5951 = vmatpush1.msra.mxu0 0.0
        %5952 = vmatprep.subr.mxu0 0.0
        %5953 = vmatpush1.msra.mxu0 0.0
        %5954 = vmatprep.subr.mxu0 0.0
        %5955 = vmatpush1.msra.mxu0 0.0
        %5956 = vmatprep.subr.mxu0 0.0
        %5957 = vmatpush1.msra.mxu0 0.0
        %5958 = vmatprep.subr.mxu0 0.0
        %5959 = vmatpush1.msra.mxu0 0.0
        %5960 = vmatprep.subr.mxu0 0.0
        %5961 = vmatpush1.msra.mxu0 0.0
        %5962 = vmatprep.subr.mxu0 0.0
        %5963 = vmatpush1.msra.mxu0 0.0
        %5964 = vmatprep.mubr.f32.mxu0 0.0
        %5965 = vmatmul.mubr.f32.gmra.mrb[0].mxu0 %v2220
        %v5966 = vpop.f32.mrb[0].mxu0
        %v5967 = vadd.f32 %v5877, %v5966
        %v5968 = vpop.f32.mrb[0].mxu0
        %5969 = vmatprep.mubr.f32.mxu0 0.0
        %5970 = vmatmul.mubr.f32.gmra.mrb[0].mxu0 %v2223
        %v5971 = vpop.f32.mrb[0].mxu0
        %v5972 = vadd.f32 %v5882, %v5971
        %v5973 = vpop.f32.mrb[0].mxu0
        %5974 = vmatprep.mubr.f32.mxu0 0.0
        %5975 = vmatmul.mubr.f32.gmra.mrb[0].mxu0 %v2226
        %v5976 = vpop.f32.mrb[0].mxu0
        %v5977 = vadd.f32 %v5887, %v5976
        %v5978 = vpop.f32.mrb[0].mxu0
        %5979 = vmatprep.mubr.f32.mxu0 0.0
        %5980 = vmatmul.mubr.f32.gmra.mrb[0].mxu0 %v2229
        %v5981 = vpop.f32.mrb[0].mxu0
        %v5982 = vadd.f32 %v5892, %v5981
        %v5983 = vpop.f32.mrb[0].mxu0
        %5984 = vmatprep.mubr.f32.mxu0 0.0
        %5985 = vmatmul.mubr.f32.gmra.mrb[0].mxu0 %v2232
        %v5986 = vpop.f32.mrb[0].mxu0
        %v5987 = vadd.f32 %v5897, %v5986
        %v5988 = vpop.f32.mrb[0].mxu0
        %5989 = vdwg.mxu0
        %5990 = vst.msk [vmem:[#allocation2] sm:$0xff] %vm583, %v5967
        %5991 = vst.msk [vmem:[#allocation2 + $0x8] sm:$0xff] %vm583, %v5972
        %5992 = vst.msk [vmem:[#allocation2 + $0x10] sm:$0xff] %vm583, %v5977
        %5993 = vst.msk [vmem:[#allocation2 + $0x18] sm:$0xff] %vm583, %v5982
        %5994 = vst.msk [vmem:[#allocation2 + $0x20] sm:$0xff] %vm583, %v5987
        %v5995 = vld [vmem:[#allocation2] sm:$0xff]
        %v5996 = vld [vmem:[#allocation2 + $0x8] sm:$0xff]
        %v5997 = vld [vmem:[#allocation2 + $0x10] sm:$0xff]
        %v5998 = vld [vmem:[#allocation2 + $0x18] sm:$0xff]
        %v5999 = vld [vmem:[%s8] sm:$0xff]
        %v6000 = vld [vmem:[%s8 + $0x8] sm:$0xff]
        %v6001 = vld [vmem:[%s8 + $0x10] sm:$0xff]
        %v6002 = vld [vmem:[%s8 + $0x18] sm:$0xff]
        %v6003 = vld [vmem:[#allocation10] sm:$0x1]
        %v6005 = vlaneseq
        %v6006 = vshrl.u32 %v6005, 7
        %v6007 = vsub.s32 0, %v6006
        %v6008 = vrot.slane %v6003, %v6007
        %v6011 = vsel %vm583, %v5995, 0
        %v6014 = vsel %vm583, %v5996, 0
        %v6017 = vsel %vm583, %v5997, 0
        %v6020 = vsel %vm583, %v5998, 0
        %6022 = vmatprep.subr.mxu0 0.0
        %6023 = vmatpush1.msra.mxu0 %v5999
        %6024 = vmatprep.subr.mxu0 0.0
        %6025 = vmatpush1.msra.mxu0 %v6000
        %6026 = vmatprep.subr.mxu0 0.0
        %6027 = vmatpush1.msra.mxu0 %v6001
        %6028 = vmatprep.subr.mxu0 0.0
        %6029 = vmatpush1.msra.mxu0 %v6002
        %6030 = vmatprep.subr.mxu0 0.0
        %6031 = vmatpush1.msra.mxu0 0.0
        %6032 = vmatprep.subr.mxu0 0.0
        %6033 = vmatpush1.msra.mxu0 0.0
        %6034 = vmatprep.subr.mxu0 0.0
        %6035 = vmatpush1.msra.mxu0 0.0
        %6036 = vmatprep.subr.mxu0 0.0
        %6037 = vmatpush1.msra.mxu0 0.0
        %6038 = vmatprep.subr.mxu0 0.0
        %6039 = vmatpush1.msra.mxu0 0.0
        %6040 = vmatprep.subr.mxu0 0.0
        %6041 = vmatpush1.msra.mxu0 0.0
        %6042 = vmatprep.subr.mxu0 0.0
        %6043 = vmatpush1.msra.mxu0 0.0
        %6044 = vmatprep.subr.mxu0 0.0
        %6045 = vmatpush1.msra.mxu0 0.0
        %6046 = vmatprep.subr.mxu0 0.0
        %6047 = vmatpush1.msra.mxu0 0.0
        %6048 = vmatprep.subr.mxu0 0.0
        %6049 = vmatpush1.msra.mxu0 0.0
        %6050 = vmatprep.subr.mxu0 0.0
        %6051 = vmatpush1.msra.mxu0 0.0
        %6052 = vmatprep.subr.mxu0 0.0
        %6053 = vmatpush1.msra.mxu0 0.0
        %6054 = vmatprep.subr.mxu0 0.0
        %6055 = vmatpush1.msra.mxu0 0.0
        %6056 = vmatprep.subr.mxu0 0.0
        %6057 = vmatpush1.msra.mxu0 0.0
        %6058 = vmatprep.subr.mxu0 0.0
        %6059 = vmatpush1.msra.mxu0 0.0
        %6060 = vmatprep.subr.mxu0 0.0
        %6061 = vmatpush1.msra.mxu0 0.0
        %6062 = vmatprep.subr.mxu0 0.0
        %6063 = vmatpush1.msra.mxu0 0.0
        %6064 = vmatprep.subr.mxu0 0.0
        %6065 = vmatpush1.msra.mxu0 0.0
        %6066 = vmatprep.subr.mxu0 0.0
        %6067 = vmatpush1.msra.mxu0 0.0
        %6068 = vmatprep.subr.mxu0 0.0
        %6069 = vmatpush1.msra.mxu0 0.0
        %6070 = vmatprep.subr.mxu0 0.0
        %6071 = vmatpush1.msra.mxu0 0.0
        %6072 = vmatprep.subr.mxu0 0.0
        %6073 = vmatpush1.msra.mxu0 0.0
        %6074 = vmatprep.subr.mxu0 0.0
        %6075 = vmatpush1.msra.mxu0 0.0
        %6076 = vmatprep.subr.mxu0 0.0
        %6077 = vmatpush1.msra.mxu0 0.0
        %6078 = vmatprep.subr.mxu0 0.0
        %6079 = vmatpush1.msra.mxu0 0.0
        %6080 = vmatprep.subr.mxu0 0.0
        %6081 = vmatpush1.msra.mxu0 0.0
        %6082 = vmatprep.subr.mxu0 0.0
        %6083 = vmatpush1.msra.mxu0 0.0
        %6084 = vmatprep.subr.mxu0 0.0
        %6085 = vmatpush1.msra.mxu0 0.0
        %6086 = vmatprep.mubr.f32.mxu0 0.0
        %6087 = vmatmul.mubr.f32.gmra.mrb[0].mxu0 %v6011
        %v6088 = vpop.f32.mrb[0].mxu0
        %v6089 = vadd.f32 %v6008, %v6088
        %v6090 = vpop.f32.mrb[0].mxu0
        %6091 = vmatprep.mubr.f32.mxu0 0.0
        %6092 = vmatmul.mubr.f32.gmra.mrb[0].mxu0 %v6014
        %v6093 = vpop.f32.mrb[0].mxu0
        %v6094 = vadd.f32 %v6008, %v6093
        %v6095 = vpop.f32.mrb[0].mxu0
        %6096 = vmatprep.mubr.f32.mxu0 0.0
        %6097 = vmatmul.mubr.f32.gmra.mrb[0].mxu0 %v6017
        %v6098 = vpop.f32.mrb[0].mxu0
        %v6099 = vadd.f32 %v6008, %v6098
        %v6100 = vpop.f32.mrb[0].mxu0
        %6101 = vmatprep.mubr.f32.mxu0 0.0
        %6102 = vmatmul.mubr.f32.gmra.mrb[0].mxu0 %v6020
        %v6103 = vpop.f32.mrb[0].mxu0
        %v6104 = vadd.f32 %v6008, %v6103
        %v6105 = vpop.f32.mrb[0].mxu0
        %6106 = vdwg.mxu0
        %v6107 = vmul.f32 %v6089, 0.5
        %v6108 = vmul.f32 %v6094, 0.5
        %v6109 = vmul.f32 %v6099, 0.5
        %v6110 = vmul.f32 %v6104, 0.5
        %v6111 = vmul.f32 %v6089, 0.70710677
        %v6112 = vmul.f32 %v6094, 0.70710677
        %v6113 = vmul.f32 %v6099, 0.70710677
        %v6114 = vmul.f32 %v6104, 0.70710677
        %v6115 = vand.u32 2147483647, %v6111
        %v6116 = vand.u32 2147483647, %v6112
        %v6117 = vand.u32 2147483647, %v6113
        %v6118 = vand.u32 2147483647, %v6114
        %v6119 = vmul.f32 %v6115, 0.3275911
        %v6120 = vmul.f32 %v6116, 0.3275911
        %v6121 = vmul.f32 %v6117, 0.3275911
        %v6122 = vmul.f32 %v6118, 0.3275911
        %v6123 = vadd.f32 %v6119, 1.0
        %v6124 = vadd.f32 %v6120, 1.0
        %v6125 = vadd.f32 %v6121, 1.0
        %v6126 = vadd.f32 %v6122, 1.0
        %v6127 = vrcp.pop %v6123
        %v6128 = vmul.f32 1.0, %v6127
        %v6129 = vrcp.pop %v6124
        %v6130 = vmul.f32 1.0, %v6129
        %v6131 = vrcp.pop %v6125
        %v6132 = vmul.f32 1.0, %v6131
        %v6133 = vrcp.pop %v6126
        %v6134 = vmul.f32 1.0, %v6133
        %v6135 = vmul.f32 %v6128, 1.0614054
        %v6136 = vmul.f32 %v6130, 1.0614054
        %v6137 = vmul.f32 %v6132, 1.0614054
        %v6138 = vmul.f32 %v6134, 1.0614054
        %v6139 = vadd.f32 %v6135, -1.4531521
        %v6140 = vadd.f32 %v6136, -1.4531521
        %v6141 = vadd.f32 %v6137, -1.4531521
        %v6142 = vadd.f32 %v6138, -1.4531521
        %v6143 = vmul.f32 %v6128, %v6139
        %v6144 = vmul.f32 %v6130, %v6140
        %v6145 = vmul.f32 %v6132, %v6141
        %v6146 = vmul.f32 %v6134, %v6142
        %v6147 = vadd.f32 %v6143, 1.4214138
        %v6148 = vadd.f32 %v6144, 1.4214138
        %v6149 = vadd.f32 %v6145, 1.4214138
        %v6150 = vadd.f32 %v6146, 1.4214138
        %v6151 = vmul.f32 %v6128, %v6147
        %v6152 = vmul.f32 %v6130, %v6148
        %v6153 = vmul.f32 %v6132, %v6149
        %v6154 = vmul.f32 %v6134, %v6150
        %v6155 = vadd.f32 %v6151, -0.28449672
        %v6156 = vadd.f32 %v6152, -0.28449672
        %v6157 = vadd.f32 %v6153, -0.28449672
        %v6158 = vadd.f32 %v6154, -0.28449672
        %v6159 = vmul.f32 %v6128, %v6155
        %v6160 = vmul.f32 %v6130, %v6156
        %v6161 = vmul.f32 %v6132, %v6157
        %v6162 = vmul.f32 %v6134, %v6158
        %v6163 = vadd.f32 %v6159, 0.2548296
        %v6164 = vadd.f32 %v6160, 0.2548296
        %v6165 = vadd.f32 %v6161, 0.2548296
        %v6166 = vadd.f32 %v6162, 0.2548296
        %v6167 = vmul.f32 %v6128, %v6163
        %v6168 = vmul.f32 %v6130, %v6164
        %v6169 = vmul.f32 %v6132, %v6165
        %v6170 = vmul.f32 %v6134, %v6166
        %v6171 = vsub.f32 0.0, %v6115
        %v6172 = vsub.f32 0.0, %v6116
        %v6173 = vsub.f32 0.0, %v6117
        %v6174 = vsub.f32 0.0, %v6118
        %v6175 = vmul.f32 %v6171, %v6115
        %v6176 = vmul.f32 %v6172, %v6116
        %v6177 = vmul.f32 %v6173, %v6117
        %v6178 = vmul.f32 %v6174, %v6118
        %v6179 = vmul.f32 %v6175, 1.442695
        %v6180 = vpow.pop %v6179
        %v6181 = vmul.f32 %v6176, 1.442695
        %v6182 = vpow.pop %v6181
        %v6183 = vmul.f32 %v6177, 1.442695
        %v6184 = vpow.pop %v6183
        %v6185 = vmul.f32 %v6178, 1.442695
        %v6186 = vpow.pop %v6185
        %v6187 = vmul.f32 %v6167, %v6180
        %v6188 = vmul.f32 %v6168, %v6182
        %v6189 = vmul.f32 %v6169, %v6184
        %v6190 = vmul.f32 %v6170, %v6186
        %v6191 = vsub.f32 1.0, %v6187
        %v6192 = vsub.f32 1.0, %v6188
        %v6193 = vsub.f32 1.0, %v6189
        %v6194 = vsub.f32 1.0, %v6190
        %vm6195 = vcmp.ge.f32.partialorder %v6111, 0.0
        %vm6196 = vcmp.ge.f32.partialorder %v6112, 0.0
        %vm6197 = vcmp.ge.f32.partialorder %v6113, 0.0
        %vm6198 = vcmp.ge.f32.partialorder %v6114, 0.0
        %v6199 = vsub.f32 0.0, %v6191
        %v6200 = vsub.f32 0.0, %v6192
        %v6201 = vsub.f32 0.0, %v6193
        %v6202 = vsub.f32 0.0, %v6194
        %v6203 = vsel %vm6195, %v6191, %v6199
        %v6204 = vsel %vm6196, %v6192, %v6200
        %v6205 = vsel %vm6197, %v6193, %v6201
        %v6206 = vsel %vm6198, %v6194, %v6202
        %v6207 = vadd.f32 %v6203, 1.0
        %v6208 = vadd.f32 %v6204, 1.0
        %v6209 = vadd.f32 %v6205, 1.0
        %v6210 = vadd.f32 %v6206, 1.0
        %v6211 = vmul.f32 %v6107, %v6207
        %v6212 = vmul.f32 %v6108, %v6208
        %v6213 = vmul.f32 %v6109, %v6209
        %v6214 = vmul.f32 %v6110, %v6210
        %v6215 = vld [vmem:[%s10] sm:$0x1]
        %v6216 = vld [vmem:[#allocation3] sm:$0x1]
        %6218 = vset.pattern.permute.xlu0 0
        %6219 = vperm.xlu0 %6218, %v6216
        %v6220 = vpop.permute.xlu0 %6219
        %v6222 = vlaneseq
        %v6223 = vshrl.u32 %v6222, 7
        %v6224 = vsub.s32 0, %v6223
        %v6225 = vrot.slane %v6220, %v6224
        %v6227 = vsel %vm583, %v6215, 0
        %v6230 = vsel %vm583, %v6211, 0
        %v6233 = vsel %vm583, %v6212, 0
        %v6236 = vsel %vm583, %v6213, 0
        %v6239 = vsel %vm583, %v6214, 0
        %6241 = vmatprep.subr.mxu0 0.0
        %6242 = vmatpush1.xpose.msra.mxu0 %v6230
        %6243 = vmatprep.subr.mxu0 0.0
        %6244 = vmatpush1.xpose.msra.mxu0 %v6233
        %6245 = vmatprep.subr.mxu0 0.0
        %6246 = vmatpush1.xpose.msra.mxu0 %v6236
        %6247 = vmatprep.subr.mxu0 0.0
        %6248 = vmatpush1.xpose.msra.mxu0 %v6239
        %6249 = vmatprep.subr.mxu0 0.0
        %6250 = vmatpush1.xpose.msra.mxu0 0.0
        %6251 = vmatprep.subr.mxu0 0.0
        %6252 = vmatpush1.xpose.msra.mxu0 0.0
        %6253 = vmatprep.subr.mxu0 0.0
        %6254 = vmatpush1.xpose.msra.mxu0 0.0
        %6255 = vmatprep.subr.mxu0 0.0
        %6256 = vmatpush1.xpose.msra.mxu0 0.0
        %6257 = vmatprep.subr.mxu0 0.0
        %6258 = vmatpush1.xpose.msra.mxu0 0.0
        %6259 = vmatprep.subr.mxu0 0.0
        %6260 = vmatpush1.xpose.msra.mxu0 0.0
        %6261 = vmatprep.subr.mxu0 0.0
        %6262 = vmatpush1.xpose.msra.mxu0 0.0
        %6263 = vmatprep.subr.mxu0 0.0
        %6264 = vmatpush1.xpose.msra.mxu0 0.0
        %6265 = vmatprep.subr.mxu0 0.0
        %6266 = vmatpush1.xpose.msra.mxu0 0.0
        %6267 = vmatprep.subr.mxu0 0.0
        %6268 = vmatpush1.xpose.msra.mxu0 0.0
        %6269 = vmatprep.subr.mxu0 0.0
        %6270 = vmatpush1.xpose.msra.mxu0 0.0
        %6271 = vmatprep.subr.mxu0 0.0
        %6272 = vmatpush1.xpose.msra.mxu0 0.0
        %6273 = vmatprep.subr.mxu0 0.0
        %6274 = vmatpush1.xpose.msra.mxu0 0.0
        %6275 = vmatprep.subr.mxu0 0.0
        %6276 = vmatpush1.xpose.msra.mxu0 0.0
        %6277 = vmatprep.subr.mxu0 0.0
        %6278 = vmatpush1.xpose.msra.mxu0 0.0
        %6279 = vmatprep.subr.mxu0 0.0
        %6280 = vmatpush1.xpose.msra.mxu0 0.0
        %6281 = vmatprep.subr.mxu0 0.0
        %6282 = vmatpush1.xpose.msra.mxu0 0.0
        %6283 = vmatprep.subr.mxu0 0.0
        %6284 = vmatpush1.xpose.msra.mxu0 0.0
        %6285 = vmatprep.subr.mxu0 0.0
        %6286 = vmatpush1.xpose.msra.mxu0 0.0
        %6287 = vmatprep.subr.mxu0 0.0
        %6288 = vmatpush1.xpose.msra.mxu0 0.0
        %6289 = vmatprep.subr.mxu0 0.0
        %6290 = vmatpush1.xpose.msra.mxu0 0.0
        %6291 = vmatprep.subr.mxu0 0.0
        %6292 = vmatpush1.xpose.msra.mxu0 0.0
        %6293 = vmatprep.subr.mxu0 0.0
        %6294 = vmatpush1.xpose.msra.mxu0 0.0
        %6295 = vmatprep.subr.mxu0 0.0
        %6296 = vmatpush1.xpose.msra.mxu0 0.0
        %6297 = vmatprep.subr.mxu0 0.0
        %6298 = vmatpush1.xpose.msra.mxu0 0.0
        %6299 = vmatprep.subr.mxu0 0.0
        %6300 = vmatpush1.xpose.msra.mxu0 0.0
        %6301 = vmatprep.subr.mxu0 0.0
        %6302 = vmatpush1.xpose.msra.mxu0 0.0
        %6303 = vmatprep.subr.mxu0 0.0
        %6304 = vmatpush1.xpose.msra.mxu0 0.0
        %6305 = vmatprep.mubr.f32.mxu0 0.0
        %6306 = vmatmul.mubr.f32.gmra.mrb[0].mxu0 %v6227
        %v6307 = vpop.f32.mrb[0].mxu0
        %v6308 = vadd.f32 %v6225, %v6307
        %v6309 = vpop.f32.mrb[0].mxu0
        %6310 = vdwg.mxu0
        %vm6311 = vcmask 253952
        %6312 = vst.msk [vmem:[%s462] sm:$0x1] %vm6311, %v6308
        %s6313 = sand.u32 %s296, 1
        %s6314 = scalar_lea.sflag [#allocation6], %s6313
        %s6315 = sand.u32 %s296, 1
        %s6316 = scalar_lea.vmem [#allocation12], %s6315
        // Predicated region
        $region85: #{fno1d_forward.1} parent=67 // pred_check
          %p6317 = pneg %p306
        $region86: #{fno1d_forward.1} parent=67 // pred_check_branch
          %6319 = sbr.rel (%p6317) target = $region88
        $region87: #{fno1d_forward.1} parent=67 // pred_region
          %s6321 = ssub.s32 16, 16
          %6322 = vsyncadd %s6314, %s6321
          %s6323 = smul.addr %s31, 16
          %s6324 = scalar_lea.hbm %s12, %s6323
          %s6326 = sshll.u32 %s6316, 4
          %s6327 = int_to_ptr.vmem [resolvable:$true] %s6326
          %6329 = dma.vmem_to_hbm [thread:$0]  %s6327, 16, %s6324, %s6314
        $region88: #{fno1d_forward.1} parent=67 // pred_fallthru
          _
      $region68: #{fno1d_forward.1} parent=5 // pred_fallthru
        _
      %p6330 = scmp.le.s32.totalorder 2, %s26
      // Predicated region
      $region89: #{fno1d_forward.1} parent=5 // pred_check
        %p6331 = pneg %p6330
      $region90: #{fno1d_forward.1} parent=5 // pred_check_branch
        %6333 = sbr.rel (%p6331) target = $region92
      $region91: #{fno1d_forward.1} parent=5 // pred_region
        %s6334 = ssub.s32 %s26, 2
        // Predicated region
        $region93: #{fno1d_forward.1} parent=91 // pred_check
          %p6335 = pneg %p312
        $region94: #{fno1d_forward.1} parent=91 // pred_check_branch
          %6337 = sbr.rel (%p6335) target = $region96
        $region95: #{fno1d_forward.1} parent=91 // pred_region
          %s6338 = sand.u32 %s297, 1
          %s6339 = scalar_lea.sflag [#allocation6], %s6338
          %s6340 = sand.u32 %s297, 1
          %s6341 = scalar_lea.vmem [#allocation12], %s6340
          %6342 = dma.done %s6339, 16
        $region96: #{fno1d_forward.1} parent=91 // pred_fallthru
          _
      $region92: #{fno1d_forward.1} parent=5 // pred_fallthru
        _
    $region6: #{fno1d_forward.1} parent=1 // loop_footer
      %s30 = sadd.s32 1, %s26
    $region7: #{fno1d_forward.1} parent=1 // loop_footer_branch
      %25 = sbr.rel target = $region3
    $region8: #{fno1d_forward.1} parent=1 // loop_exit
      _
    %6343 = vsyncpa [#allocation5], 1
    %s6344 = scalar_lea.sflag [#allocation5], 1
    %6345 = vsyncpa %s6344, 1
    %6346 = vsyncpa [#allocation8], 1
    %6347 = vsyncpa [#allocation11], 1
    %6348 = vsyncpa [#allocation6], 1
    %s6349 = scalar_lea.sflag [#allocation6], 1
    %6350 = vsyncpa %s6349, 1

</llo_original>
